<compile_context>
chip_gen: v5e
topology: v5e:2x2
jax: 0.10.0
libtpu: 0.0.40
codegen_flags: <defaults>
</compile_context>

<pallas_src>
import functools

import jax
import jax.numpy as jnp
from jax import lax
from jax.experimental import pallas as pl
from jax.experimental.pallas import tpu as pltpu


def _rfab_kernel(x_ref, mask_ref, w1_ref, b1_ref, w2_ref, b2_ref,
                 wd_ref, bd_ref, wu_ref, bu_ref, o_ref,
                 col1_ref, col2_ref, h1_ref, *,
                 tap_offs, r_out, lead, p_off, inv_n):
    # x_ref    : [C, R_tot]     zero-padded input volume (lanes = flat rows)
    # mask_ref : [1, r_out]     1.0 where the row decodes to a valid output pos
    # w1/w2    : [C, k^3*C]     im2col-folded (weight-normed) conv weights
    # b1/b2/bd/bu : [*, 1]      per-channel biases (sublane column vectors)
    # wd/wu    : [C//r, C] / [C, C//r]
    # o_ref    : [C, R]         flattened-row output (wrapper slices valid rows)
    # col1/col2: [k^3*C, r_out] im2col slabs (one per conv, overlap-friendly)
    # h1_ref   : [C, R_tot]     conv1+ReLU re-embedded as a padded volume
    C = x_ref.shape[0]
    R_tot = h1_ref.shape[1]
    head = lead + p_off                       # multiple of 128 by construction

    def build_col(src_ref, col_ref):
        # Lane-window reads at arbitrary lane offsets; sublane-aligned (t*C)
        # writes into the im2col slab -> plain vector stores.
        for t, off in enumerate(tap_offs):
            col_ref[t * C:(t + 1) * C, :] = \
                src_ref[:, lead + off:lead + off + r_out]

    # ---- conv3d_1 (same padding) + ReLU: one [C,k^3*C] x [k^3*C,r_out] dot --
    build_col(x_ref, col1_ref)
    h1 = jnp.dot(w1_ref[...], col1_ref[...], preferred_element_type=jnp.float32)
    h1 = jnp.maximum(h1 + b1_ref[...], 0.0) * mask_ref[...]   # zero wrap rows

    # Re-embed h1 as a zero-padded volume at the 128-aligned lane offset
    # `head`; only the head/tail halo slabs need zeroing each step.
    h1_ref[:, 0:head] = jnp.zeros((C, head), jnp.float32)
    h1_ref[:, head:head + r_out] = h1
    h1_ref[:, head + r_out:] = jnp.zeros((C, R_tot - head - r_out), jnp.float32)

    # ---- conv3d_2 (same padding) --------------------------------------------
    build_col(h1_ref, col2_ref)
    h2 = jnp.dot(w2_ref[...], col2_ref[...],
                 preferred_element_type=jnp.float32) + b2_ref[...]  # x_to_scale

    # ---- channel attention: GAP -> 1x1x1 down -> ReLU -> 1x1x1 up -> sigmoid
    pooled = jnp.sum(h2 * mask_ref[...], axis=-1, keepdims=True) * inv_n  # [C,1]
    z = jnp.maximum(jnp.dot(wd_ref[...], pooled,
                            preferred_element_type=jnp.float32) + bd_ref[...],
                    0.0)                                                  # [Cr,1]
    s = jax.nn.sigmoid(jnp.dot(wu_ref[...], z,
                               preferred_element_type=jnp.float32)
                       + bu_ref[...])                                     # [C,1]

    # ---- scale + residual (residual = lane-aligned window of padded input) --
    res = x_ref[:, head:head + r_out]
    o_ref[:, 0:r_out] = (h2 * s + res).astype(o_ref.dtype)
    o_ref[:, r_out:] = jnp.zeros((C, o_ref.shape[1] - r_out), o_ref.dtype)


def rfab_pallas(x_ncdhw, params):
    """x_ncdhw: [N, C, D, H, W] float32 (PyTorch layout). Returns same shape."""
    w1, b1, w2, b2, wd, bd, wu, bu = params      # weight-normed, PyTorch layouts
    N, C, D, H, W = x_ncdhw.shape
    k = w1.shape[2]
    Cr = wd.shape[0]
    p = k // 2
    Dp, Hp, Wp = D + 2 * p, H + 2 * p, W + 2 * p
    R = Dp * Hp * Wp
    r_out = ((D - 1) * Hp + (H - 1)) * Wp + W            # last valid row + 1
    p_off = (p * Hp + p) * Wp + p                        # row offset of +p shift
    lead = (-p_off) % 128                                # lane-align lead + p_off
    R_tot = lead + R
    tap_offs = tuple((kd * Hp + kh) * Wp + kw
                     for kd in range(k) for kh in range(k) for kw in range(k))
    kcc = k * k * k * C

    # Pad once, flatten spatial dims onto the lane axis, prepend `lead` zeros.
    x_pad = jnp.pad(x_ncdhw, ((0, 0), (0, 0), (p, p), (p, p), (p, p)))
    x_rows = jnp.pad(x_pad.reshape(N, C, R), ((0, 0), (0, 0), (lead, 0)))

    # Validity mask over the first r_out flat rows (1 where d<D, h<H, w<W).
    md = jnp.arange(Dp) < D
    mh = jnp.arange(Hp) < H
    mw = jnp.arange(Wp) < W
    mask3 = md[:, None, None] & mh[None, :, None] & mw[None, None, :]
    mask_row = mask3.reshape(1, R)[:, :r_out].astype(jnp.float32)

    # im2col-folded conv weights: [Cout, Cin, kd, kh, kw] -> [Cout, k^3*Cin]
    # (tap order (kd, kh, kw) matches tap_offs, channel fastest).
    def fold(w):
        return jnp.transpose(w, (0, 2, 3, 4, 1)).reshape(C, kcc)

    w1m, w2m = fold(w1), fold(w2)
    b1c, b2c = b1.reshape(C, 1), b2.reshape(C, 1)
    bdc, buc = bd.reshape(Cr, 1), bu.reshape(C, 1)

    kernel = functools.partial(_rfab_kernel, tap_offs=tap_offs, r_out=r_out,
                               lead=lead, p_off=p_off,
                               inv_n=1.0 / float(D * H * W))

    def _full(a):
        nd = a.ndim
        return pl.BlockSpec(a.shape, lambda n, _nd=nd: (0,) * _nd)

    # VMEM budget with Mosaic (8, 128) tile padding accounted for.
    def _lanes(n):
        return -(-n // 128) * 128

    def _subl(n):
        return -(-n // 8) * 8

    est = 0
    est += 2 * _subl(C) * _lanes(R_tot) * 4        # x blocks (double-buffered)
    est += 2 * _subl(C) * _lanes(R) * 4            # out blocks
    est += 2 * _subl(1) * _lanes(r_out) * 4        # mask
    est += 4 * _subl(C) * _lanes(kcc) * 4          # w1m, w2m (double-buffered)
    est += 8 * _subl(C) * _lanes(C) * 4            # small SE params (overcount)
    est += 2 * _subl(kcc) * _lanes(r_out) * 4      # col1, col2 scratch
    est += _subl(C) * _lanes(R_tot) * 4            # h1 padded-volume scratch
    est += 2 << 20                                 # compiler slack

    try:
        hw_vmem = int(pltpu.get_tpu_info().vmem_capacity_bytes)
    except Exception:
        hw_vmem = 64 * 2 ** 20
    # ~100 MiB scoped on v5e/v6e (128 MiB parts), ~48 MiB on v7x (64 MiB part).
    cap = min(100 * 2 ** 20, (hw_vmem * 3) // 4)
    vmem_limit = int(min(max(2 * est, 32 * 2 ** 20), cap))

    out_rows = pl.pallas_call(
        kernel,
        out_shape=jax.ShapeDtypeStruct((N, C, R), x_ncdhw.dtype),
        grid_spec=pltpu.PrefetchScalarGridSpec(
            num_scalar_prefetch=0,
            grid=(N,),
            in_specs=[
                pl.BlockSpec((pl.Squeezed(), C, R_tot), lambda n: (n, 0, 0)),
                _full(mask_row),
                _full(w1m), _full(b1c),
                _full(w2m), _full(b2c),
                _full(wd), _full(bdc),
                _full(wu), _full(buc),
            ],
            out_specs=pl.BlockSpec((pl.Squeezed(), C, R), lambda n: (n, 0, 0)),
            scratch_shapes=[pltpu.VMEM((kcc, r_out), jnp.float32),
                            pltpu.VMEM((kcc, r_out), jnp.float32),
                            pltpu.VMEM((C, R_tot), jnp.float32)],
        ),
        compiler_params=pltpu.CompilerParams(
            dimension_semantics=("parallel",),
            vmem_limit_bytes=vmem_limit),
    )(x_rows, mask_row, w1m, b1c, w2m, b2c, wd, bdc, wu, buc)

    # Valid rows are the low-corner (d < D, h < H, w < W) of the padded space.
    return out_rows.reshape(N, C, Dp, Hp, Wp)[:, :, :D, :H, :W]


# ---------------------------- parameter setup ------------------------------

def _wn_weight(v, g):
    # PyTorch weight_norm (dim=0): w[o] = g[o] * v[o] / ||v[o]||_2
    axes = tuple(range(1, v.ndim))
    norm = jnp.sqrt(jnp.sum(v * v, axis=axes, keepdims=True))
    gshape = (-1,) + (1,) * (v.ndim - 1)
    return v * (g.reshape(gshape) / norm)


def make_params(key, C, k, r):
    Cr = C // r
    ks = jax.random.split(key, 12)

    def mk(shape, kk, scale):
        return (scale * jax.random.normal(kk, shape)).astype(jnp.float32)

    # PyTorch Conv3d weight layout: [Cout, Cin, kD, kH, kW]
    v1 = mk((C, C, k, k, k), ks[0], 0.1)
    g1 = (1.0 + 0.1 * jax.random.normal(ks[1], (C,))).astype(jnp.float32)
    b1 = mk((C,), ks[2], 0.1)
    v2 = mk((C, C, k, k, k), ks[3], 0.1)
    g2 = (1.0 + 0.1 * jax.random.normal(ks[4], (C,))).astype(jnp.float32)
    b2 = mk((C,), ks[5], 0.1)
    vd = mk((Cr, C, 1, 1, 1), ks[6], 0.2)
    gd = (1.0 + 0.1 * jax.random.normal(ks[7], (Cr,))).astype(jnp.float32)
    bd = mk((Cr,), ks[8], 0.1)
    vu = mk((C, Cr, 1, 1, 1), ks[9], 0.2)
    gu = (1.0 + 0.1 * jax.random.normal(ks[10], (C,))).astype(jnp.float32)
    bu = mk((C,), ks[11], 0.1)

    w1 = _wn_weight(v1, g1)                       # [C, C, k, k, k]
    w2 = _wn_weight(v2, g2)
    wd = _wn_weight(vd, gd)[:, :, 0, 0, 0]        # [Cr, C]
    wu = _wn_weight(vu, gu)[:, :, 0, 0, 0]        # [C, Cr]
    return (w1, b1, w2, b2, wd, bd, wu, bu)


# ------------------------- plain-JAX reference -----------------------------

def rfab_ref(x, params):
    w1, b1, w2, b2, wd, bd, wu, bu = params
    dnums = lax.conv_dimension_numbers(x.shape, w1.shape,
                                       ('NCDHW', 'OIDHW', 'NCDHW'))

    def conv(h, w, b):
        y = lax.conv_general_dilated(h, w, (1, 1, 1), 'SAME',
                                     dimension_numbers=dnums,
                                     precision=lax.Precision.HIGHEST)
        return y + b.reshape(1, -1, 1, 1, 1)

    h = jax.nn.relu(conv(x, w1, b1))
    h2 = conv(h, w2, b2)
    pooled = jnp.mean(h2, axis=(2, 3, 4), keepdims=True)           # [N,C,1,1,1]
    z = jax.nn.relu(jnp.einsum('ncxyz,rc->nrxyz', pooled, wd)
                    + bd.reshape(1, -1, 1, 1, 1))
    s = jax.nn.sigmoid(jnp.einsum('nrxyz,cr->ncxyz', z, wu)
                       + bu.reshape(1, -1, 1, 1, 1))
    return h2 * s + x


if __name__ == "__main__":
    key = jax.random.PRNGKey(0)
    N, C, D, H, W = 2, 8, 4, 8, 8          # NCDHW (PyTorch convention)
    k_size, r = 3, 2
    kx, kp = jax.random.split(key)
    x = jax.random.normal(kx, (N, C, D, H, W), jnp.float32)
    params = make_params(kp, C, k_size, r)

    out = jax.block_until_ready(rfab_pallas(x, params))
    ref = rfab_ref(x, params)
    assert out.shape == (N, C, D, H, W)
    max_err = float(jnp.max(jnp.abs(out - ref)))
    assert max_err < 2e-3, f"mismatch vs reference: {max_err}"
    print("KERNEL_OK")
</pallas_src>

<mosaic_0001>
module attributes {stable_mosaic.version = 11 : i64} {
  func.func @_rfab_kernel(%arg0: i32, %arg1: memref<1x8x617xf32, #tpu.memory_space<vmem>>, %arg2: memref<1x378xf32, #tpu.memory_space<vmem>>, %arg3: memref<8x216xf32, #tpu.memory_space<vmem>>, %arg4: memref<8x1xf32, #tpu.memory_space<vmem>>, %arg5: memref<8x216xf32, #tpu.memory_space<vmem>>, %arg6: memref<8x1xf32, #tpu.memory_space<vmem>>, %arg7: memref<4x8xf32, #tpu.memory_space<vmem>>, %arg8: memref<4x1xf32, #tpu.memory_space<vmem>>, %arg9: memref<8x4xf32, #tpu.memory_space<vmem>>, %arg10: memref<8x1xf32, #tpu.memory_space<vmem>>, %arg11: memref<1x8x600xf32, #tpu.memory_space<vmem>>, %arg12: memref<216x378xf32, #tpu.memory_space<vmem>>, %arg13: memref<216x378xf32, #tpu.memory_space<vmem>>, %arg14: memref<8x617xf32, #tpu.memory_space<vmem>>) attributes {dimension_semantics = [#tpu.dimension_semantics<parallel>], iteration_bounds = array<i64: 2>, scalar_prefetch = 0 : i64, scratch_operands = 3 : i64, tpu.core_type = #tpu.core_type<tc>, window_params = [{transform_indices = @transform_0, window_bounds = array<i64: 1, 8, 617>}, {pipeline_mode = #tpu.pipeline_mode<synchronous>, transform_indices = @transform_1, window_bounds = array<i64: 1, 378>}, {pipeline_mode = #tpu.pipeline_mode<synchronous>, transform_indices = @transform_2, window_bounds = array<i64: 8, 216>}, {pipeline_mode = #tpu.pipeline_mode<synchronous>, transform_indices = @transform_3, window_bounds = array<i64: 8, 1>}, {pipeline_mode = #tpu.pipeline_mode<synchronous>, transform_indices = @transform_4, window_bounds = array<i64: 8, 216>}, {pipeline_mode = #tpu.pipeline_mode<synchronous>, transform_indices = @transform_5, window_bounds = array<i64: 8, 1>}, {pipeline_mode = #tpu.pipeline_mode<synchronous>, transform_indices = @transform_6, window_bounds = array<i64: 4, 8>}, {pipeline_mode = #tpu.pipeline_mode<synchronous>, transform_indices = @transform_7, window_bounds = array<i64: 4, 1>}, {pipeline_mode = #tpu.pipeline_mode<synchronous>, transform_indices = @transform_8, window_bounds = array<i64: 8, 4>}, {pipeline_mode = #tpu.pipeline_mode<synchronous>, transform_indices = @transform_9, window_bounds = array<i64: 8, 1>}, {transform_indices = @transform_10, window_bounds = array<i64: 1, 8, 600>}]} {
    %c0 = arith.constant 0 : index
    %c0_0 = arith.constant 0 : index
    %c17 = arith.constant 17 : index
    %0 = vector.load %arg1[%c0, %c0_0, %c17] : memref<1x8x617xf32, #tpu.memory_space<vmem>>, vector<1x8x378xf32>
    %1 = vector.shape_cast %0 : vector<1x8x378xf32> to vector<8x378xf32>
    %c0_1 = arith.constant 0 : index
    %c0_2 = arith.constant 0 : index
    %2 = vector.load %arg12[%c0_1, %c0_2] : memref<216x378xf32, #tpu.memory_space<vmem>>, vector<8x378xf32>
    tpu.vector_store %arg12[%c0_1, %c0_2], %1 {strides = array<i32>} : memref<216x378xf32, #tpu.memory_space<vmem>>, vector<8x378xf32>,
    %c0_3 = arith.constant 0 : index
    %c0_4 = arith.constant 0 : index
    %c18 = arith.constant 18 : index
    %3 = vector.load %arg1[%c0_3, %c0_4, %c18] : memref<1x8x617xf32, #tpu.memory_space<vmem>>, vector<1x8x378xf32>
    %4 = vector.shape_cast %3 : vector<1x8x378xf32> to vector<8x378xf32>
    %c8 = arith.constant 8 : index
    %c0_5 = arith.constant 0 : index
    %5 = vector.load %arg12[%c8, %c0_5] : memref<216x378xf32, #tpu.memory_space<vmem>>, vector<8x378xf32>
    tpu.vector_store %arg12[%c8, %c0_5], %4 {strides = array<i32>} : memref<216x378xf32, #tpu.memory_space<vmem>>, vector<8x378xf32>,
    %c0_6 = arith.constant 0 : index
    %c0_7 = arith.constant 0 : index
    %c19 = arith.constant 19 : index
    %6 = vector.load %arg1[%c0_6, %c0_7, %c19] : memref<1x8x617xf32, #tpu.memory_space<vmem>>, vector<1x8x378xf32>
    %7 = vector.shape_cast %6 : vector<1x8x378xf32> to vector<8x378xf32>
    %c16 = arith.constant 16 : index
    %c0_8 = arith.constant 0 : index
    %8 = vector.load %arg12[%c16, %c0_8] : memref<216x378xf32, #tpu.memory_space<vmem>>, vector<8x378xf32>
    tpu.vector_store %arg12[%c16, %c0_8], %7 {strides = array<i32>} : memref<216x378xf32, #tpu.memory_space<vmem>>, vector<8x378xf32>,
    %c0_9 = arith.constant 0 : index
    %c0_10 = arith.constant 0 : index
    %c27 = arith.constant 27 : index
    %9 = vector.load %arg1[%c0_9, %c0_10, %c27] : memref<1x8x617xf32, #tpu.memory_space<vmem>>, vector<1x8x378xf32>
    %10 = vector.shape_cast %9 : vector<1x8x378xf32> to vector<8x378xf32>
    %c24 = arith.constant 24 : index
    %c0_11 = arith.constant 0 : index
    %11 = vector.load %arg12[%c24, %c0_11] : memref<216x378xf32, #tpu.memory_space<vmem>>, vector<8x378xf32>
    tpu.vector_store %arg12[%c24, %c0_11], %10 {strides = array<i32>} : memref<216x378xf32, #tpu.memory_space<vmem>>, vector<8x378xf32>,
    %c0_12 = arith.constant 0 : index
    %c0_13 = arith.constant 0 : index
    %c28 = arith.constant 28 : index
    %12 = vector.load %arg1[%c0_12, %c0_13, %c28] : memref<1x8x617xf32, #tpu.memory_space<vmem>>, vector<1x8x378xf32>
    %13 = vector.shape_cast %12 : vector<1x8x378xf32> to vector<8x378xf32>
    %c32 = arith.constant 32 : index
    %c0_14 = arith.constant 0 : index
    %14 = vector.load %arg12[%c32, %c0_14] : memref<216x378xf32, #tpu.memory_space<vmem>>, vector<8x378xf32>
    tpu.vector_store %arg12[%c32, %c0_14], %13 {strides = array<i32>} : memref<216x378xf32, #tpu.memory_space<vmem>>, vector<8x378xf32>,
    %c0_15 = arith.constant 0 : index
    %c0_16 = arith.constant 0 : index
    %c29 = arith.constant 29 : index
    %15 = vector.load %arg1[%c0_15, %c0_16, %c29] : memref<1x8x617xf32, #tpu.memory_space<vmem>>, vector<1x8x378xf32>
    %16 = vector.shape_cast %15 : vector<1x8x378xf32> to vector<8x378xf32>
    %c40 = arith.constant 40 : index
    %c0_17 = arith.constant 0 : index
    %17 = vector.load %arg12[%c40, %c0_17] : memref<216x378xf32, #tpu.memory_space<vmem>>, vector<8x378xf32>
    tpu.vector_store %arg12[%c40, %c0_17], %16 {strides = array<i32>} : memref<216x378xf32, #tpu.memory_space<vmem>>, vector<8x378xf32>,
    %c0_18 = arith.constant 0 : index
    %c0_19 = arith.constant 0 : index
    %c37 = arith.constant 37 : index
    %18 = vector.load %arg1[%c0_18, %c0_19, %c37] : memref<1x8x617xf32, #tpu.memory_space<vmem>>, vector<1x8x378xf32>
    %19 = vector.shape_cast %18 : vector<1x8x378xf32> to vector<8x378xf32>
    %c48 = arith.constant 48 : index
    %c0_20 = arith.constant 0 : index
    %20 = vector.load %arg12[%c48, %c0_20] : memref<216x378xf32, #tpu.memory_space<vmem>>, vector<8x378xf32>
    tpu.vector_store %arg12[%c48, %c0_20], %19 {strides = array<i32>} : memref<216x378xf32, #tpu.memory_space<vmem>>, vector<8x378xf32>,
    %c0_21 = arith.constant 0 : index
    %c0_22 = arith.constant 0 : index
    %c38 = arith.constant 38 : index
    %21 = vector.load %arg1[%c0_21, %c0_22, %c38] : memref<1x8x617xf32, #tpu.memory_space<vmem>>, vector<1x8x378xf32>
    %22 = vector.shape_cast %21 : vector<1x8x378xf32> to vector<8x378xf32>
    %c56 = arith.constant 56 : index
    %c0_23 = arith.constant 0 : index
    %23 = vector.load %arg12[%c56, %c0_23] : memref<216x378xf32, #tpu.memory_space<vmem>>, vector<8x378xf32>
    tpu.vector_store %arg12[%c56, %c0_23], %22 {strides = array<i32>} : memref<216x378xf32, #tpu.memory_space<vmem>>, vector<8x378xf32>,
    %c0_24 = arith.constant 0 : index
    %c0_25 = arith.constant 0 : index
    %c39 = arith.constant 39 : index
    %24 = vector.load %arg1[%c0_24, %c0_25, %c39] : memref<1x8x617xf32, #tpu.memory_space<vmem>>, vector<1x8x378xf32>
    %25 = vector.shape_cast %24 : vector<1x8x378xf32> to vector<8x378xf32>
    %c64 = arith.constant 64 : index
    %c0_26 = arith.constant 0 : index
    %26 = vector.load %arg12[%c64, %c0_26] : memref<216x378xf32, #tpu.memory_space<vmem>>, vector<8x378xf32>
    tpu.vector_store %arg12[%c64, %c0_26], %25 {strides = array<i32>} : memref<216x378xf32, #tpu.memory_space<vmem>>, vector<8x378xf32>,
    %c0_27 = arith.constant 0 : index
    %c0_28 = arith.constant 0 : index
    %c117 = arith.constant 117 : index
    %27 = vector.load %arg1[%c0_27, %c0_28, %c117] : memref<1x8x617xf32, #tpu.memory_space<vmem>>, vector<1x8x378xf32>
    %28 = vector.shape_cast %27 : vector<1x8x378xf32> to vector<8x378xf32>
    %c72 = arith.constant 72 : index
    %c0_29 = arith.constant 0 : index
    %29 = vector.load %arg12[%c72, %c0_29] : memref<216x378xf32, #tpu.memory_space<vmem>>, vector<8x378xf32>
    tpu.vector_store %arg12[%c72, %c0_29], %28 {strides = array<i32>} : memref<216x378xf32, #tpu.memory_space<vmem>>, vector<8x378xf32>,
    %c0_30 = arith.constant 0 : index
    %c0_31 = arith.constant 0 : index
    %c118 = arith.constant 118 : index
    %30 = vector.load %arg1[%c0_30, %c0_31, %c118] : memref<1x8x617xf32, #tpu.memory_space<vmem>>, vector<1x8x378xf32>
    %31 = vector.shape_cast %30 : vector<1x8x378xf32> to vector<8x378xf32>
    %c80 = arith.constant 80 : index
    %c0_32 = arith.constant 0 : index
    %32 = vector.load %arg12[%c80, %c0_32] : memref<216x378xf32, #tpu.memory_space<vmem>>, vector<8x378xf32>
    tpu.vector_store %arg12[%c80, %c0_32], %31 {strides = array<i32>} : memref<216x378xf32, #tpu.memory_space<vmem>>, vector<8x378xf32>,
    %c0_33 = arith.constant 0 : index
    %c0_34 = arith.constant 0 : index
    %c119 = arith.constant 119 : index
    %33 = vector.load %arg1[%c0_33, %c0_34, %c119] : memref<1x8x617xf32, #tpu.memory_space<vmem>>, vector<1x8x378xf32>
    %34 = vector.shape_cast %33 : vector<1x8x378xf32> to vector<8x378xf32>
    %c88 = arith.constant 88 : index
    %c0_35 = arith.constant 0 : index
    %35 = vector.load %arg12[%c88, %c0_35] : memref<216x378xf32, #tpu.memory_space<vmem>>, vector<8x378xf32>
    tpu.vector_store %arg12[%c88, %c0_35], %34 {strides = array<i32>} : memref<216x378xf32, #tpu.memory_space<vmem>>, vector<8x378xf32>,
    %c0_36 = arith.constant 0 : index
    %c0_37 = arith.constant 0 : index
    %c127 = arith.constant 127 : index
    %36 = vector.load %arg1[%c0_36, %c0_37, %c127] : memref<1x8x617xf32, #tpu.memory_space<vmem>>, vector<1x8x378xf32>
    %37 = vector.shape_cast %36 : vector<1x8x378xf32> to vector<8x378xf32>
    %c96 = arith.constant 96 : index
    %c0_38 = arith.constant 0 : index
    %38 = vector.load %arg12[%c96, %c0_38] : memref<216x378xf32, #tpu.memory_space<vmem>>, vector<8x378xf32>
    tpu.vector_store %arg12[%c96, %c0_38], %37 {strides = array<i32>} : memref<216x378xf32, #tpu.memory_space<vmem>>, vector<8x378xf32>,
    %c0_39 = arith.constant 0 : index
    %c0_40 = arith.constant 0 : index
    %c128 = arith.constant 128 : index
    %39 = vector.load %arg1[%c0_39, %c0_40, %c128] : memref<1x8x617xf32, #tpu.memory_space<vmem>>, vector<1x8x378xf32>
    %40 = vector.shape_cast %39 : vector<1x8x378xf32> to vector<8x378xf32>
    %c104 = arith.constant 104 : index
    %c0_41 = arith.constant 0 : index
    %41 = vector.load %arg12[%c104, %c0_41] : memref<216x378xf32, #tpu.memory_space<vmem>>, vector<8x378xf32>
    tpu.vector_store %arg12[%c104, %c0_41], %40 {strides = array<i32>} : memref<216x378xf32, #tpu.memory_space<vmem>>, vector<8x378xf32>,
    %c0_42 = arith.constant 0 : index
    %c0_43 = arith.constant 0 : index
    %c129 = arith.constant 129 : index
    %42 = vector.load %arg1[%c0_42, %c0_43, %c129] : memref<1x8x617xf32, #tpu.memory_space<vmem>>, vector<1x8x378xf32>
    %43 = vector.shape_cast %42 : vector<1x8x378xf32> to vector<8x378xf32>
    %c112 = arith.constant 112 : index
    %c0_44 = arith.constant 0 : index
    %44 = vector.load %arg12[%c112, %c0_44] : memref<216x378xf32, #tpu.memory_space<vmem>>, vector<8x378xf32>
    tpu.vector_store %arg12[%c112, %c0_44], %43 {strides = array<i32>} : memref<216x378xf32, #tpu.memory_space<vmem>>, vector<8x378xf32>,
    %c0_45 = arith.constant 0 : index
    %c0_46 = arith.constant 0 : index
    %c137 = arith.constant 137 : index
    %45 = vector.load %arg1[%c0_45, %c0_46, %c137] : memref<1x8x617xf32, #tpu.memory_space<vmem>>, vector<1x8x378xf32>
    %46 = vector.shape_cast %45 : vector<1x8x378xf32> to vector<8x378xf32>
    %c120 = arith.constant 120 : index
    %c0_47 = arith.constant 0 : index
    %47 = vector.load %arg12[%c120, %c0_47] : memref<216x378xf32, #tpu.memory_space<vmem>>, vector<8x378xf32>
    tpu.vector_store %arg12[%c120, %c0_47], %46 {strides = array<i32>} : memref<216x378xf32, #tpu.memory_space<vmem>>, vector<8x378xf32>,
    %c0_48 = arith.constant 0 : index
    %c0_49 = arith.constant 0 : index
    %c138 = arith.constant 138 : index
    %48 = vector.load %arg1[%c0_48, %c0_49, %c138] : memref<1x8x617xf32, #tpu.memory_space<vmem>>, vector<1x8x378xf32>
    %49 = vector.shape_cast %48 : vector<1x8x378xf32> to vector<8x378xf32>
    %c128_50 = arith.constant 128 : index
    %c0_51 = arith.constant 0 : index
    %50 = vector.load %arg12[%c128_50, %c0_51] : memref<216x378xf32, #tpu.memory_space<vmem>>, vector<8x378xf32>
    tpu.vector_store %arg12[%c128_50, %c0_51], %49 {strides = array<i32>} : memref<216x378xf32, #tpu.memory_space<vmem>>, vector<8x378xf32>,
    %c0_52 = arith.constant 0 : index
    %c0_53 = arith.constant 0 : index
    %c139 = arith.constant 139 : index
    %51 = vector.load %arg1[%c0_52, %c0_53, %c139] : memref<1x8x617xf32, #tpu.memory_space<vmem>>, vector<1x8x378xf32>
    %52 = vector.shape_cast %51 : vector<1x8x378xf32> to vector<8x378xf32>
    %c136 = arith.constant 136 : index
    %c0_54 = arith.constant 0 : index
    %53 = vector.load %arg12[%c136, %c0_54] : memref<216x378xf32, #tpu.memory_space<vmem>>, vector<8x378xf32>
    tpu.vector_store %arg12[%c136, %c0_54], %52 {strides = array<i32>} : memref<216x378xf32, #tpu.memory_space<vmem>>, vector<8x378xf32>,
    %c0_55 = arith.constant 0 : index
    %c0_56 = arith.constant 0 : index
    %c217 = arith.constant 217 : index
    %54 = vector.load %arg1[%c0_55, %c0_56, %c217] : memref<1x8x617xf32, #tpu.memory_space<vmem>>, vector<1x8x378xf32>
    %55 = vector.shape_cast %54 : vector<1x8x378xf32> to vector<8x378xf32>
    %c144 = arith.constant 144 : index
    %c0_57 = arith.constant 0 : index
    %56 = vector.load %arg12[%c144, %c0_57] : memref<216x378xf32, #tpu.memory_space<vmem>>, vector<8x378xf32>
    tpu.vector_store %arg12[%c144, %c0_57], %55 {strides = array<i32>} : memref<216x378xf32, #tpu.memory_space<vmem>>, vector<8x378xf32>,
    %c0_58 = arith.constant 0 : index
    %c0_59 = arith.constant 0 : index
    %c218 = arith.constant 218 : index
    %57 = vector.load %arg1[%c0_58, %c0_59, %c218] : memref<1x8x617xf32, #tpu.memory_space<vmem>>, vector<1x8x378xf32>
    %58 = vector.shape_cast %57 : vector<1x8x378xf32> to vector<8x378xf32>
    %c152 = arith.constant 152 : index
    %c0_60 = arith.constant 0 : index
    %59 = vector.load %arg12[%c152, %c0_60] : memref<216x378xf32, #tpu.memory_space<vmem>>, vector<8x378xf32>
    tpu.vector_store %arg12[%c152, %c0_60], %58 {strides = array<i32>} : memref<216x378xf32, #tpu.memory_space<vmem>>, vector<8x378xf32>,
    %c0_61 = arith.constant 0 : index
    %c0_62 = arith.constant 0 : index
    %c219 = arith.constant 219 : index
    %60 = vector.load %arg1[%c0_61, %c0_62, %c219] : memref<1x8x617xf32, #tpu.memory_space<vmem>>, vector<1x8x378xf32>
    %61 = vector.shape_cast %60 : vector<1x8x378xf32> to vector<8x378xf32>
    %c160 = arith.constant 160 : index
    %c0_63 = arith.constant 0 : index
    %62 = vector.load %arg12[%c160, %c0_63] : memref<216x378xf32, #tpu.memory_space<vmem>>, vector<8x378xf32>
    tpu.vector_store %arg12[%c160, %c0_63], %61 {strides = array<i32>} : memref<216x378xf32, #tpu.memory_space<vmem>>, vector<8x378xf32>,
    %c0_64 = arith.constant 0 : index
    %c0_65 = arith.constant 0 : index
    %c227 = arith.constant 227 : index
    %63 = vector.load %arg1[%c0_64, %c0_65, %c227] : memref<1x8x617xf32, #tpu.memory_space<vmem>>, vector<1x8x378xf32>
    %64 = vector.shape_cast %63 : vector<1x8x378xf32> to vector<8x378xf32>
    %c168 = arith.constant 168 : index
    %c0_66 = arith.constant 0 : index
    %65 = vector.load %arg12[%c168, %c0_66] : memref<216x378xf32, #tpu.memory_space<vmem>>, vector<8x378xf32>
    tpu.vector_store %arg12[%c168, %c0_66], %64 {strides = array<i32>} : memref<216x378xf32, #tpu.memory_space<vmem>>, vector<8x378xf32>,
    %c0_67 = arith.constant 0 : index
    %c0_68 = arith.constant 0 : index
    %c228 = arith.constant 228 : index
    %66 = vector.load %arg1[%c0_67, %c0_68, %c228] : memref<1x8x617xf32, #tpu.memory_space<vmem>>, vector<1x8x378xf32>
    %67 = vector.shape_cast %66 : vector<1x8x378xf32> to vector<8x378xf32>
    %c176 = arith.constant 176 : index
    %c0_69 = arith.constant 0 : index
    %68 = vector.load %arg12[%c176, %c0_69] : memref<216x378xf32, #tpu.memory_space<vmem>>, vector<8x378xf32>
    tpu.vector_store %arg12[%c176, %c0_69], %67 {strides = array<i32>} : memref<216x378xf32, #tpu.memory_space<vmem>>, vector<8x378xf32>,
    %c0_70 = arith.constant 0 : index
    %c0_71 = arith.constant 0 : index
    %c229 = arith.constant 229 : index
    %69 = vector.load %arg1[%c0_70, %c0_71, %c229] : memref<1x8x617xf32, #tpu.memory_space<vmem>>, vector<1x8x378xf32>
    %70 = vector.shape_cast %69 : vector<1x8x378xf32> to vector<8x378xf32>
    %c184 = arith.constant 184 : index
    %c0_72 = arith.constant 0 : index
    %71 = vector.load %arg12[%c184, %c0_72] : memref<216x378xf32, #tpu.memory_space<vmem>>, vector<8x378xf32>
    tpu.vector_store %arg12[%c184, %c0_72], %70 {strides = array<i32>} : memref<216x378xf32, #tpu.memory_space<vmem>>, vector<8x378xf32>,
    %c0_73 = arith.constant 0 : index
    %c0_74 = arith.constant 0 : index
    %c237 = arith.constant 237 : index
    %72 = vector.load %arg1[%c0_73, %c0_74, %c237] : memref<1x8x617xf32, #tpu.memory_space<vmem>>, vector<1x8x378xf32>
    %73 = vector.shape_cast %72 : vector<1x8x378xf32> to vector<8x378xf32>
    %c192 = arith.constant 192 : index
    %c0_75 = arith.constant 0 : index
    %74 = vector.load %arg12[%c192, %c0_75] : memref<216x378xf32, #tpu.memory_space<vmem>>, vector<8x378xf32>
    tpu.vector_store %arg12[%c192, %c0_75], %73 {strides = array<i32>} : memref<216x378xf32, #tpu.memory_space<vmem>>, vector<8x378xf32>,
    %c0_76 = arith.constant 0 : index
    %c0_77 = arith.constant 0 : index
    %c238 = arith.constant 238 : index
    %75 = vector.load %arg1[%c0_76, %c0_77, %c238] : memref<1x8x617xf32, #tpu.memory_space<vmem>>, vector<1x8x378xf32>
    %76 = vector.shape_cast %75 : vector<1x8x378xf32> to vector<8x378xf32>
    %c200 = arith.constant 200 : index
    %c0_78 = arith.constant 0 : index
    %77 = vector.load %arg12[%c200, %c0_78] : memref<216x378xf32, #tpu.memory_space<vmem>>, vector<8x378xf32>
    tpu.vector_store %arg12[%c200, %c0_78], %76 {strides = array<i32>} : memref<216x378xf32, #tpu.memory_space<vmem>>, vector<8x378xf32>,
    %c0_79 = arith.constant 0 : index
    %c0_80 = arith.constant 0 : index
    %c239 = arith.constant 239 : index
    %78 = vector.load %arg1[%c0_79, %c0_80, %c239] : memref<1x8x617xf32, #tpu.memory_space<vmem>>, vector<1x8x378xf32>
    %79 = vector.shape_cast %78 : vector<1x8x378xf32> to vector<8x378xf32>
    %c208 = arith.constant 208 : index
    %c0_81 = arith.constant 0 : index
    %80 = vector.load %arg12[%c208, %c0_81] : memref<216x378xf32, #tpu.memory_space<vmem>>, vector<8x378xf32>
    tpu.vector_store %arg12[%c208, %c0_81], %79 {strides = array<i32>} : memref<216x378xf32, #tpu.memory_space<vmem>>, vector<8x378xf32>,
    %c0_82 = arith.constant 0 : index
    %c0_83 = arith.constant 0 : index
    %81 = vector.load %arg3[%c0_82, %c0_83] : memref<8x216xf32, #tpu.memory_space<vmem>>, vector<8x216xf32>
    %c0_84 = arith.constant 0 : index
    %c0_85 = arith.constant 0 : index
    %82 = vector.load %arg12[%c0_84, %c0_85] : memref<216x378xf32, #tpu.memory_space<vmem>>, vector<216x378xf32>
    %cst = arith.constant dense<0.000000e+00> : vector<8x378xf32>
    %83 = tpu.matmul %81, %82, %cst {dimension_numbers = #tpu.dot_dimension_numbers<[1], [0], [0], [1], [0, 0, 1, 1], [], []>} : vector<8x216xf32>, vector<216x378xf32>, vector<8x378xf32> -> vector<8x378xf32>
    %c0_86 = arith.constant 0 : index
    %c0_87 = arith.constant 0 : index
    %84 = vector.load %arg4[%c0_86, %c0_87] : memref<8x1xf32, #tpu.memory_space<vmem>>, vector<8x1xf32>
    %85 = vector.broadcast %84 : vector<8x1xf32> to vector<8x378xf32>
    %86 = arith.addf %83, %85 : vector<8x378xf32>
    %cst_88 = arith.constant 0.000000e+00 : f32
    %87 = vector.broadcast %cst_88 : f32 to vector<8x378xf32>
    %88 = arith.maximumf %86, %87 : vector<8x378xf32>
    %c0_89 = arith.constant 0 : index
    %c0_90 = arith.constant 0 : index
    %89 = vector.load %arg2[%c0_89, %c0_90] : memref<1x378xf32, #tpu.memory_space<vmem>>, vector<1x378xf32>
    %90 = vector.broadcast %89 : vector<1x378xf32> to vector<8x378xf32>
    %91 = arith.mulf %88, %90 : vector<8x378xf32>
    %cst_91 = arith.constant 0.000000e+00 : f32
    %92 = vector.broadcast %cst_91 : f32 to vector<8x128xf32>
    %c0_92 = arith.constant 0 : index
    %c0_93 = arith.constant 0 : index
    %93 = vector.load %arg14[%c0_92, %c0_93] : memref<8x617xf32, #tpu.memory_space<vmem>>, vector<8x128xf32>
    tpu.vector_store %arg14[%c0_92, %c0_93], %92 {strides = array<i32>} : memref<8x617xf32, #tpu.memory_space<vmem>>, vector<8x128xf32>,
    %c0_94 = arith.constant 0 : index
    %c128_95 = arith.constant 128 : index
    %94 = vector.load %arg14[%c0_94, %c128_95] : memref<8x617xf32, #tpu.memory_space<vmem>>, vector<8x378xf32>
    tpu.vector_store %arg14[%c0_94, %c128_95], %91 {strides = array<i32>} : memref<8x617xf32, #tpu.memory_space<vmem>>, vector<8x378xf32>,
    %cst_96 = arith.constant 0.000000e+00 : f32
    %95 = vector.broadcast %cst_96 : f32 to vector<8x111xf32>
    %c0_97 = arith.constant 0 : index
    %c506 = arith.constant 506 : index
    %96 = vector.load %arg14[%c0_97, %c506] : memref<8x617xf32, #tpu.memory_space<vmem>>, vector<8x111xf32>
    tpu.vector_store %arg14[%c0_97, %c506], %95 {strides = array<i32>} : memref<8x617xf32, #tpu.memory_space<vmem>>, vector<8x111xf32>,
    %c0_98 = arith.constant 0 : index
    %c17_99 = arith.constant 17 : index
    %97 = vector.load %arg14[%c0_98, %c17_99] : memref<8x617xf32, #tpu.memory_space<vmem>>, vector<8x378xf32>
    %c0_100 = arith.constant 0 : index
    %c0_101 = arith.constant 0 : index
    %98 = vector.load %arg13[%c0_100, %c0_101] : memref<216x378xf32, #tpu.memory_space<vmem>>, vector<8x378xf32>
    tpu.vector_store %arg13[%c0_100, %c0_101], %97 {strides = array<i32>} : memref<216x378xf32, #tpu.memory_space<vmem>>, vector<8x378xf32>,
    %c0_102 = arith.constant 0 : index
    %c18_103 = arith.constant 18 : index
    %99 = vector.load %arg14[%c0_102, %c18_103] : memref<8x617xf32, #tpu.memory_space<vmem>>, vector<8x378xf32>
    %c8_104 = arith.constant 8 : index
    %c0_105 = arith.constant 0 : index
    %100 = vector.load %arg13[%c8_104, %c0_105] : memref<216x378xf32, #tpu.memory_space<vmem>>, vector<8x378xf32>
    tpu.vector_store %arg13[%c8_104, %c0_105], %99 {strides = array<i32>} : memref<216x378xf32, #tpu.memory_space<vmem>>, vector<8x378xf32>,
    %c0_106 = arith.constant 0 : index
    %c19_107 = arith.constant 19 : index
    %101 = vector.load %arg14[%c0_106, %c19_107] : memref<8x617xf32, #tpu.memory_space<vmem>>, vector<8x378xf32>
    %c16_108 = arith.constant 16 : index
    %c0_109 = arith.constant 0 : index
    %102 = vector.load %arg13[%c16_108, %c0_109] : memref<216x378xf32, #tpu.memory_space<vmem>>, vector<8x378xf32>
    tpu.vector_store %arg13[%c16_108, %c0_109], %101 {strides = array<i32>} : memref<216x378xf32, #tpu.memory_space<vmem>>, vector<8x378xf32>,
    %c0_110 = arith.constant 0 : index
    %c27_111 = arith.constant 27 : index
    %103 = vector.load %arg14[%c0_110, %c27_111] : memref<8x617xf32, #tpu.memory_space<vmem>>, vector<8x378xf32>
    %c24_112 = arith.constant 24 : index
    %c0_113 = arith.constant 0 : index
    %104 = vector.load %arg13[%c24_112, %c0_113] : memref<216x378xf32, #tpu.memory_space<vmem>>, vector<8x378xf32>
    tpu.vector_store %arg13[%c24_112, %c0_113], %103 {strides = array<i32>} : memref<216x378xf32, #tpu.memory_space<vmem>>, vector<8x378xf32>,
    %c0_114 = arith.constant 0 : index
    %c28_115 = arith.constant 28 : index
    %105 = vector.load %arg14[%c0_114, %c28_115] : memref<8x617xf32, #tpu.memory_space<vmem>>, vector<8x378xf32>
    %c32_116 = arith.constant 32 : index
    %c0_117 = arith.constant 0 : index
    %106 = vector.load %arg13[%c32_116, %c0_117] : memref<216x378xf32, #tpu.memory_space<vmem>>, vector<8x378xf32>
    tpu.vector_store %arg13[%c32_116, %c0_117], %105 {strides = array<i32>} : memref<216x378xf32, #tpu.memory_space<vmem>>, vector<8x378xf32>,
    %c0_118 = arith.constant 0 : index
    %c29_119 = arith.constant 29 : index
    %107 = vector.load %arg14[%c0_118, %c29_119] : memref<8x617xf32, #tpu.memory_space<vmem>>, vector<8x378xf32>
    %c40_120 = arith.constant 40 : index
    %c0_121 = arith.constant 0 : index
    %108 = vector.load %arg13[%c40_120, %c0_121] : memref<216x378xf32, #tpu.memory_space<vmem>>, vector<8x378xf32>
    tpu.vector_store %arg13[%c40_120, %c0_121], %107 {strides = array<i32>} : memref<216x378xf32, #tpu.memory_space<vmem>>, vector<8x378xf32>,
    %c0_122 = arith.constant 0 : index
    %c37_123 = arith.constant 37 : index
    %109 = vector.load %arg14[%c0_122, %c37_123] : memref<8x617xf32, #tpu.memory_space<vmem>>, vector<8x378xf32>
    %c48_124 = arith.constant 48 : index
    %c0_125 = arith.constant 0 : index
    %110 = vector.load %arg13[%c48_124, %c0_125] : memref<216x378xf32, #tpu.memory_space<vmem>>, vector<8x378xf32>
    tpu.vector_store %arg13[%c48_124, %c0_125], %109 {strides = array<i32>} : memref<216x378xf32, #tpu.memory_space<vmem>>, vector<8x378xf32>,
    %c0_126 = arith.constant 0 : index
    %c38_127 = arith.constant 38 : index
    %111 = vector.load %arg14[%c0_126, %c38_127] : memref<8x617xf32, #tpu.memory_space<vmem>>, vector<8x378xf32>
    %c56_128 = arith.constant 56 : index
    %c0_129 = arith.constant 0 : index
    %112 = vector.load %arg13[%c56_128, %c0_129] : memref<216x378xf32, #tpu.memory_space<vmem>>, vector<8x378xf32>
    tpu.vector_store %arg13[%c56_128, %c0_129], %111 {strides = array<i32>} : memref<216x378xf32, #tpu.memory_space<vmem>>, vector<8x378xf32>,
    %c0_130 = arith.constant 0 : index
    %c39_131 = arith.constant 39 : index
    %113 = vector.load %arg14[%c0_130, %c39_131] : memref<8x617xf32, #tpu.memory_space<vmem>>, vector<8x378xf32>
    %c64_132 = arith.constant 64 : index
    %c0_133 = arith.constant 0 : index
    %114 = vector.load %arg13[%c64_132, %c0_133] : memref<216x378xf32, #tpu.memory_space<vmem>>, vector<8x378xf32>
    tpu.vector_store %arg13[%c64_132, %c0_133], %113 {strides = array<i32>} : memref<216x378xf32, #tpu.memory_space<vmem>>, vector<8x378xf32>,
    %c0_134 = arith.constant 0 : index
    %c117_135 = arith.constant 117 : index
    %115 = vector.load %arg14[%c0_134, %c117_135] : memref<8x617xf32, #tpu.memory_space<vmem>>, vector<8x378xf32>
    %c72_136 = arith.constant 72 : index
    %c0_137 = arith.constant 0 : index
    %116 = vector.load %arg13[%c72_136, %c0_137] : memref<216x378xf32, #tpu.memory_space<vmem>>, vector<8x378xf32>
    tpu.vector_store %arg13[%c72_136, %c0_137], %115 {strides = array<i32>} : memref<216x378xf32, #tpu.memory_space<vmem>>, vector<8x378xf32>,
    %c0_138 = arith.constant 0 : index
    %c118_139 = arith.constant 118 : index
    %117 = vector.load %arg14[%c0_138, %c118_139] : memref<8x617xf32, #tpu.memory_space<vmem>>, vector<8x378xf32>
    %c80_140 = arith.constant 80 : index
    %c0_141 = arith.constant 0 : index
    %118 = vector.load %arg13[%c80_140, %c0_141] : memref<216x378xf32, #tpu.memory_space<vmem>>, vector<8x378xf32>
    tpu.vector_store %arg13[%c80_140, %c0_141], %117 {strides = array<i32>} : memref<216x378xf32, #tpu.memory_space<vmem>>, vector<8x378xf32>,
    %c0_142 = arith.constant 0 : index
    %c119_143 = arith.constant 119 : index
    %119 = vector.load %arg14[%c0_142, %c119_143] : memref<8x617xf32, #tpu.memory_space<vmem>>, vector<8x378xf32>
    %c88_144 = arith.constant 88 : index
    %c0_145 = arith.constant 0 : index
    %120 = vector.load %arg13[%c88_144, %c0_145] : memref<216x378xf32, #tpu.memory_space<vmem>>, vector<8x378xf32>
    tpu.vector_store %arg13[%c88_144, %c0_145], %119 {strides = array<i32>} : memref<216x378xf32, #tpu.memory_space<vmem>>, vector<8x378xf32>,
    %c0_146 = arith.constant 0 : index
    %c127_147 = arith.constant 127 : index
    %121 = vector.load %arg14[%c0_146, %c127_147] : memref<8x617xf32, #tpu.memory_space<vmem>>, vector<8x378xf32>
    %c96_148 = arith.constant 96 : index
    %c0_149 = arith.constant 0 : index
    %122 = vector.load %arg13[%c96_148, %c0_149] : memref<216x378xf32, #tpu.memory_space<vmem>>, vector<8x378xf32>
    tpu.vector_store %arg13[%c96_148, %c0_149], %121 {strides = array<i32>} : memref<216x378xf32, #tpu.memory_space<vmem>>, vector<8x378xf32>,
    %c0_150 = arith.constant 0 : index
    %c128_151 = arith.constant 128 : index
    %123 = vector.load %arg14[%c0_150, %c128_151] : memref<8x617xf32, #tpu.memory_space<vmem>>, vector<8x378xf32>
    %c104_152 = arith.constant 104 : index
    %c0_153 = arith.constant 0 : index
    %124 = vector.load %arg13[%c104_152, %c0_153] : memref<216x378xf32, #tpu.memory_space<vmem>>, vector<8x378xf32>
    tpu.vector_store %arg13[%c104_152, %c0_153], %123 {strides = array<i32>} : memref<216x378xf32, #tpu.memory_space<vmem>>, vector<8x378xf32>,
    %c0_154 = arith.constant 0 : index
    %c129_155 = arith.constant 129 : index
    %125 = vector.load %arg14[%c0_154, %c129_155] : memref<8x617xf32, #tpu.memory_space<vmem>>, vector<8x378xf32>
    %c112_156 = arith.constant 112 : index
    %c0_157 = arith.constant 0 : index
    %126 = vector.load %arg13[%c112_156, %c0_157] : memref<216x378xf32, #tpu.memory_space<vmem>>, vector<8x378xf32>
    tpu.vector_store %arg13[%c112_156, %c0_157], %125 {strides = array<i32>} : memref<216x378xf32, #tpu.memory_space<vmem>>, vector<8x378xf32>,
    %c0_158 = arith.constant 0 : index
    %c137_159 = arith.constant 137 : index
    %127 = vector.load %arg14[%c0_158, %c137_159] : memref<8x617xf32, #tpu.memory_space<vmem>>, vector<8x378xf32>
    %c120_160 = arith.constant 120 : index
    %c0_161 = arith.constant 0 : index
    %128 = vector.load %arg13[%c120_160, %c0_161] : memref<216x378xf32, #tpu.memory_space<vmem>>, vector<8x378xf32>
    tpu.vector_store %arg13[%c120_160, %c0_161], %127 {strides = array<i32>} : memref<216x378xf32, #tpu.memory_space<vmem>>, vector<8x378xf32>,
    %c0_162 = arith.constant 0 : index
    %c138_163 = arith.constant 138 : index
    %129 = vector.load %arg14[%c0_162, %c138_163] : memref<8x617xf32, #tpu.memory_space<vmem>>, vector<8x378xf32>
    %c128_164 = arith.constant 128 : index
    %c0_165 = arith.constant 0 : index
    %130 = vector.load %arg13[%c128_164, %c0_165] : memref<216x378xf32, #tpu.memory_space<vmem>>, vector<8x378xf32>
    tpu.vector_store %arg13[%c128_164, %c0_165], %129 {strides = array<i32>} : memref<216x378xf32, #tpu.memory_space<vmem>>, vector<8x378xf32>,
    %c0_166 = arith.constant 0 : index
    %c139_167 = arith.constant 139 : index
    %131 = vector.load %arg14[%c0_166, %c139_167] : memref<8x617xf32, #tpu.memory_space<vmem>>, vector<8x378xf32>
    %c136_168 = arith.constant 136 : index
    %c0_169 = arith.constant 0 : index
    %132 = vector.load %arg13[%c136_168, %c0_169] : memref<216x378xf32, #tpu.memory_space<vmem>>, vector<8x378xf32>
    tpu.vector_store %arg13[%c136_168, %c0_169], %131 {strides = array<i32>} : memref<216x378xf32, #tpu.memory_space<vmem>>, vector<8x378xf32>,
    %c0_170 = arith.constant 0 : index
    %c217_171 = arith.constant 217 : index
    %133 = vector.load %arg14[%c0_170, %c217_171] : memref<8x617xf32, #tpu.memory_space<vmem>>, vector<8x378xf32>
    %c144_172 = arith.constant 144 : index
    %c0_173 = arith.constant 0 : index
    %134 = vector.load %arg13[%c144_172, %c0_173] : memref<216x378xf32, #tpu.memory_space<vmem>>, vector<8x378xf32>
    tpu.vector_store %arg13[%c144_172, %c0_173], %133 {strides = array<i32>} : memref<216x378xf32, #tpu.memory_space<vmem>>, vector<8x378xf32>,
    %c0_174 = arith.constant 0 : index
    %c218_175 = arith.constant 218 : index
    %135 = vector.load %arg14[%c0_174, %c218_175] : memref<8x617xf32, #tpu.memory_space<vmem>>, vector<8x378xf32>
    %c152_176 = arith.constant 152 : index
    %c0_177 = arith.constant 0 : index
    %136 = vector.load %arg13[%c152_176, %c0_177] : memref<216x378xf32, #tpu.memory_space<vmem>>, vector<8x378xf32>
    tpu.vector_store %arg13[%c152_176, %c0_177], %135 {strides = array<i32>} : memref<216x378xf32, #tpu.memory_space<vmem>>, vector<8x378xf32>,
    %c0_178 = arith.constant 0 : index
    %c219_179 = arith.constant 219 : index
    %137 = vector.load %arg14[%c0_178, %c219_179] : memref<8x617xf32, #tpu.memory_space<vmem>>, vector<8x378xf32>
    %c160_180 = arith.constant 160 : index
    %c0_181 = arith.constant 0 : index
    %138 = vector.load %arg13[%c160_180, %c0_181] : memref<216x378xf32, #tpu.memory_space<vmem>>, vector<8x378xf32>
    tpu.vector_store %arg13[%c160_180, %c0_181], %137 {strides = array<i32>} : memref<216x378xf32, #tpu.memory_space<vmem>>, vector<8x378xf32>,
    %c0_182 = arith.constant 0 : index
    %c227_183 = arith.constant 227 : index
    %139 = vector.load %arg14[%c0_182, %c227_183] : memref<8x617xf32, #tpu.memory_space<vmem>>, vector<8x378xf32>
    %c168_184 = arith.constant 168 : index
    %c0_185 = arith.constant 0 : index
    %140 = vector.load %arg13[%c168_184, %c0_185] : memref<216x378xf32, #tpu.memory_space<vmem>>, vector<8x378xf32>
    tpu.vector_store %arg13[%c168_184, %c0_185], %139 {strides = array<i32>} : memref<216x378xf32, #tpu.memory_space<vmem>>, vector<8x378xf32>,
    %c0_186 = arith.constant 0 : index
    %c228_187 = arith.constant 228 : index
    %141 = vector.load %arg14[%c0_186, %c228_187] : memref<8x617xf32, #tpu.memory_space<vmem>>, vector<8x378xf32>
    %c176_188 = arith.constant 176 : index
    %c0_189 = arith.constant 0 : index
    %142 = vector.load %arg13[%c176_188, %c0_189] : memref<216x378xf32, #tpu.memory_space<vmem>>, vector<8x378xf32>
    tpu.vector_store %arg13[%c176_188, %c0_189], %141 {strides = array<i32>} : memref<216x378xf32, #tpu.memory_space<vmem>>, vector<8x378xf32>,
    %c0_190 = arith.constant 0 : index
    %c229_191 = arith.constant 229 : index
    %143 = vector.load %arg14[%c0_190, %c229_191] : memref<8x617xf32, #tpu.memory_space<vmem>>, vector<8x378xf32>
    %c184_192 = arith.constant 184 : index
    %c0_193 = arith.constant 0 : index
    %144 = vector.load %arg13[%c184_192, %c0_193] : memref<216x378xf32, #tpu.memory_space<vmem>>, vector<8x378xf32>
    tpu.vector_store %arg13[%c184_192, %c0_193], %143 {strides = array<i32>} : memref<216x378xf32, #tpu.memory_space<vmem>>, vector<8x378xf32>,
    %c0_194 = arith.constant 0 : index
    %c237_195 = arith.constant 237 : index
    %145 = vector.load %arg14[%c0_194, %c237_195] : memref<8x617xf32, #tpu.memory_space<vmem>>, vector<8x378xf32>
    %c192_196 = arith.constant 192 : index
    %c0_197 = arith.constant 0 : index
    %146 = vector.load %arg13[%c192_196, %c0_197] : memref<216x378xf32, #tpu.memory_space<vmem>>, vector<8x378xf32>
    tpu.vector_store %arg13[%c192_196, %c0_197], %145 {strides = array<i32>} : memref<216x378xf32, #tpu.memory_space<vmem>>, vector<8x378xf32>,
    %c0_198 = arith.constant 0 : index
    %c238_199 = arith.constant 238 : index
    %147 = vector.load %arg14[%c0_198, %c238_199] : memref<8x617xf32, #tpu.memory_space<vmem>>, vector<8x378xf32>
    %c200_200 = arith.constant 200 : index
    %c0_201 = arith.constant 0 : index
    %148 = vector.load %arg13[%c200_200, %c0_201] : memref<216x378xf32, #tpu.memory_space<vmem>>, vector<8x378xf32>
    tpu.vector_store %arg13[%c200_200, %c0_201], %147 {strides = array<i32>} : memref<216x378xf32, #tpu.memory_space<vmem>>, vector<8x378xf32>,
    %c0_202 = arith.constant 0 : index
    %c239_203 = arith.constant 239 : index
    %149 = vector.load %arg14[%c0_202, %c239_203] : memref<8x617xf32, #tpu.memory_space<vmem>>, vector<8x378xf32>
    %c208_204 = arith.constant 208 : index
    %c0_205 = arith.constant 0 : index
    %150 = vector.load %arg13[%c208_204, %c0_205] : memref<216x378xf32, #tpu.memory_space<vmem>>, vector<8x378xf32>
    tpu.vector_store %arg13[%c208_204, %c0_205], %149 {strides = array<i32>} : memref<216x378xf32, #tpu.memory_space<vmem>>, vector<8x378xf32>,
    %c0_206 = arith.constant 0 : index
    %c0_207 = arith.constant 0 : index
    %151 = vector.load %arg5[%c0_206, %c0_207] : memref<8x216xf32, #tpu.memory_space<vmem>>, vector<8x216xf32>
    %c0_208 = arith.constant 0 : index
    %c0_209 = arith.constant 0 : index
    %152 = vector.load %arg13[%c0_208, %c0_209] : memref<216x378xf32, #tpu.memory_space<vmem>>, vector<216x378xf32>
    %cst_210 = arith.constant dense<0.000000e+00> : vector<8x378xf32>
    %153 = tpu.matmul %151, %152, %cst_210 {dimension_numbers = #tpu.dot_dimension_numbers<[1], [0], [0], [1], [0, 0, 1, 1], [], []>} : vector<8x216xf32>, vector<216x378xf32>, vector<8x378xf32> -> vector<8x378xf32>
    %c0_211 = arith.constant 0 : index
    %c0_212 = arith.constant 0 : index
    %154 = vector.load %arg6[%c0_211, %c0_212] : memref<8x1xf32, #tpu.memory_space<vmem>>, vector<8x1xf32>
    %155 = vector.broadcast %154 : vector<8x1xf32> to vector<8x378xf32>
    %156 = arith.addf %153, %155 : vector<8x378xf32>
    %c0_213 = arith.constant 0 : index
    %c0_214 = arith.constant 0 : index
    %157 = vector.load %arg2[%c0_213, %c0_214] : memref<1x378xf32, #tpu.memory_space<vmem>>, vector<1x378xf32>
    %158 = vector.broadcast %157 : vector<1x378xf32> to vector<8x378xf32>
    %159 = arith.mulf %156, %158 : vector<8x378xf32>
    %cst_215 = arith.constant dense<0.000000e+00> : vector<8xf32>
    %160 = vector.multi_reduction <add>, %159, %cst_215 [1] : vector<8x378xf32> to vector<8xf32>
    %161 = vector.shape_cast %160 : vector<8xf32> to vector<8x1xf32>
    %cst_216 = arith.constant 3.906250e-03 : f32
    %162 = vector.broadcast %cst_216 : f32 to vector<8x1xf32>
    %163 = arith.mulf %161, %162 : vector<8x1xf32>
    %c0_217 = arith.constant 0 : index
    %c0_218 = arith.constant 0 : index
    %164 = vector.load %arg7[%c0_217, %c0_218] : memref<4x8xf32, #tpu.memory_space<vmem>>, vector<4x8xf32>
    %cst_219 = arith.constant dense<0.000000e+00> : vector<4x1xf32>
    %165 = tpu.matmul %164, %163, %cst_219 {dimension_numbers = #tpu.dot_dimension_numbers<[1], [0], [0], [1], [0, 0, 1, 1], [], []>} : vector<4x8xf32>, vector<8x1xf32>, vector<4x1xf32> -> vector<4x1xf32>
    %c0_220 = arith.constant 0 : index
    %c0_221 = arith.constant 0 : index
    %166 = vector.load %arg8[%c0_220, %c0_221] : memref<4x1xf32, #tpu.memory_space<vmem>>, vector<4x1xf32>
    %167 = arith.addf %165, %166 : vector<4x1xf32>
    %cst_222 = arith.constant 0.000000e+00 : f32
    %168 = vector.broadcast %cst_222 : f32 to vector<4x1xf32>
    %169 = arith.maximumf %167, %168 : vector<4x1xf32>
    %c0_223 = arith.constant 0 : index
    %c0_224 = arith.constant 0 : index
    %170 = vector.load %arg9[%c0_223, %c0_224] : memref<8x4xf32, #tpu.memory_space<vmem>>, vector<8x4xf32>
    %cst_225 = arith.constant dense<0.000000e+00> : vector<8x1xf32>
    %171 = tpu.matmul %170, %169, %cst_225 {dimension_numbers = #tpu.dot_dimension_numbers<[1], [0], [0], [1], [0, 0, 1, 1], [], []>} : vector<8x4xf32>, vector<4x1xf32>, vector<8x1xf32> -> vector<8x1xf32>
    %c0_226 = arith.constant 0 : index
    %c0_227 = arith.constant 0 : index
    %172 = vector.load %arg10[%c0_226, %c0_227] : memref<8x1xf32, #tpu.memory_space<vmem>>, vector<8x1xf32>
    %173 = arith.addf %171, %172 : vector<8x1xf32>
    %174 = arith.negf %173 : vector<8x1xf32>
    %175 = math.exp %174 : vector<8x1xf32>
    %cst_228 = arith.constant 1.000000e+00 : f32
    %176 = vector.broadcast %cst_228 : f32 to vector<8x1xf32>
    %177 = arith.addf %176, %175 : vector<8x1xf32>
    %178 = arith.divf %176, %177 : vector<8x1xf32>
    %c0_229 = arith.constant 0 : index
    %c0_230 = arith.constant 0 : index
    %c128_231 = arith.constant 128 : index
    %179 = vector.load %arg1[%c0_229, %c0_230, %c128_231] : memref<1x8x617xf32, #tpu.memory_space<vmem>>, vector<1x8x378xf32>
    %180 = vector.shape_cast %179 : vector<1x8x378xf32> to vector<8x378xf32>
    %181 = vector.broadcast %178 : vector<8x1xf32> to vector<8x378xf32>
    %182 = arith.mulf %156, %181 : vector<8x378xf32>
    %183 = arith.addf %182, %180 : vector<8x378xf32>
    %c0_232 = arith.constant 0 : index
    %c0_233 = arith.constant 0 : index
    %c0_234 = arith.constant 0 : index
    %184 = vector.load %arg11[%c0_232, %c0_233, %c0_234] : memref<1x8x600xf32, #tpu.memory_space<vmem>>, vector<1x8x378xf32>
    %185 = vector.shape_cast %184 : vector<1x8x378xf32> to vector<8x378xf32>
    %186 = vector.shape_cast %183 : vector<8x378xf32> to vector<1x8x378xf32>
    tpu.vector_store %arg11[%c0_232, %c0_233, %c0_234], %186 {strides = array<i32>} : memref<1x8x600xf32, #tpu.memory_space<vmem>>, vector<1x8x378xf32>,
    %cst_235 = arith.constant 0.000000e+00 : f32
    %187 = vector.broadcast %cst_235 : f32 to vector<8x222xf32>
    %c0_236 = arith.constant 0 : index
    %c0_237 = arith.constant 0 : index
    %c378 = arith.constant 378 : index
    %188 = vector.load %arg11[%c0_236, %c0_237, %c378] : memref<1x8x600xf32, #tpu.memory_space<vmem>>, vector<1x8x222xf32>
    %189 = vector.shape_cast %188 : vector<1x8x222xf32> to vector<8x222xf32>
    %190 = vector.shape_cast %187 : vector<8x222xf32> to vector<1x8x222xf32>
    tpu.vector_store %arg11[%c0_236, %c0_237, %c378], %190 {strides = array<i32>} : memref<1x8x600xf32, #tpu.memory_space<vmem>>, vector<1x8x222xf32>,
    return
  }
  func.func @transform_0(%arg0: i32) -> (i32, i32, i32) {
    %c0_i32 = arith.constant 0 : i32
    %c0_i32_0 = arith.constant 0 : i32
    %c0_i32_1 = arith.constant 0 : i32
    return %arg0, %c0_i32, %c0_i32_0 : i32, i32, i32
  }
  func.func @transform_1(%arg0: i32) -> (i32, i32) {
    %c0_i32 = arith.constant 0 : i32
    %c0_i32_0 = arith.constant 0 : i32
    %c0_i32_1 = arith.constant 0 : i32
    return %c0_i32, %c0_i32_0 : i32, i32
  }
  func.func @transform_2(%arg0: i32) -> (i32, i32) {
    %c0_i32 = arith.constant 0 : i32
    %c0_i32_0 = arith.constant 0 : i32
    %c0_i32_1 = arith.constant 0 : i32
    return %c0_i32, %c0_i32_0 : i32, i32
  }
  func.func @transform_3(%arg0: i32) -> (i32, i32) {
    %c0_i32 = arith.constant 0 : i32
    %c0_i32_0 = arith.constant 0 : i32
    %c0_i32_1 = arith.constant 0 : i32
    return %c0_i32, %c0_i32_0 : i32, i32
  }
  func.func @transform_4(%arg0: i32) -> (i32, i32) {
    %c0_i32 = arith.constant 0 : i32
    %c0_i32_0 = arith.constant 0 : i32
    %c0_i32_1 = arith.constant 0 : i32
    return %c0_i32, %c0_i32_0 : i32, i32
  }
  func.func @transform_5(%arg0: i32) -> (i32, i32) {
    %c0_i32 = arith.constant 0 : i32
    %c0_i32_0 = arith.constant 0 : i32
    %c0_i32_1 = arith.constant 0 : i32
    return %c0_i32, %c0_i32_0 : i32, i32
  }
  func.func @transform_6(%arg0: i32) -> (i32, i32) {
    %c0_i32 = arith.constant 0 : i32
    %c0_i32_0 = arith.constant 0 : i32
    %c0_i32_1 = arith.constant 0 : i32
    return %c0_i32, %c0_i32_0 : i32, i32
  }
  func.func @transform_7(%arg0: i32) -> (i32, i32) {
    %c0_i32 = arith.constant 0 : i32
    %c0_i32_0 = arith.constant 0 : i32
    %c0_i32_1 = arith.constant 0 : i32
    return %c0_i32, %c0_i32_0 : i32, i32
  }
  func.func @transform_8(%arg0: i32) -> (i32, i32) {
    %c0_i32 = arith.constant 0 : i32
    %c0_i32_0 = arith.constant 0 : i32
    %c0_i32_1 = arith.constant 0 : i32
    return %c0_i32, %c0_i32_0 : i32, i32
  }
  func.func @transform_9(%arg0: i32) -> (i32, i32) {
    %c0_i32 = arith.constant 0 : i32
    %c0_i32_0 = arith.constant 0 : i32
    %c0_i32_1 = arith.constant 0 : i32
    return %c0_i32, %c0_i32_0 : i32, i32
  }
  func.func @transform_10(%arg0: i32) -> (i32, i32, i32) {
    %c0_i32 = arith.constant 0 : i32
    %c0_i32_0 = arith.constant 0 : i32
    %c0_i32_1 = arith.constant 0 : i32
    return %arg0, %c0_i32, %c0_i32_0 : i32, i32, i32
  }
}

</mosaic_0001>

<llo_original>
// kernel: tpu_custom_call.1
$region0: #{tpu_custom_call.1}
  #allocation0 [shape = 'u32[]', space=smem, size = 0x4, offset = 0x4, fixed_abs, tag = 'smem constant byte address 0x4 - core index']
  #allocation1 [shape = 'u32[72,128]{1,0:T(1,128)}', space=vmem, size = 0x9000, scoped, tag = 'internal scratch']
  #allocation2 [shape = 'f32[216,378]{1,0:T(8,128)}', space=vmem, size = 0x51000, scoped, tag = 'scratch operand']
  #allocation3 [shape = 'f32[216,378]{1,0:T(8,128)}', space=vmem, size = 0x51000, scoped, tag = 'scratch operand']
  #allocation4 [shape = 'f32[8,617]{1,0:T(8,128)}', space=vmem, size = 0x5000, scoped, tag = 'scratch operand']
  %s0 = inlined_call_operand.hbm [shape: f32[2,8,617], index: 0, kind: input, shape index: {}]
  %s1 = inlined_call_operand.vmem [shape: f32[1,378], index: 1, kind: input, shape index: {}]
  %s2 = inlined_call_operand.vmem [shape: f32[8,216], index: 2, kind: input, shape index: {}]
  %s3 = inlined_call_operand.vmem [shape: f32[8,1], index: 3, kind: input, shape index: {}]
  %s4 = inlined_call_operand.hbm [shape: f32[8,216], index: 4, kind: input, shape index: {}]
  %s5 = inlined_call_operand.vmem [shape: f32[8,1], index: 5, kind: input, shape index: {}]
  %s6 = inlined_call_operand.vmem [shape: f32[4,8], index: 6, kind: input, shape index: {}]
  %s7 = inlined_call_operand.vmem [shape: f32[4,1], index: 7, kind: input, shape index: {}]
  %s8 = inlined_call_operand.vmem [shape: f32[8,4], index: 8, kind: input, shape index: {}]
  %s9 = inlined_call_operand.vmem [shape: f32[8,1], index: 9, kind: input, shape index: {}]
  %s10 = inlined_call_operand.hbm [shape: f32[2,8,600], index: 10, kind: output, shape index: {}]
  %s11 = sld [smem:[#allocation0]]
  $region81: #{tpu_custom_call.1} parent=0
    _
  %s13 = ssub.s32 1, %s11
  %s14 = scalar_select 0, %s13, %s11
  $region1: #{tpu_custom_call.1} parent=0
    #allocation5 [shape = 'u8[40960]{0}', space=vmem, size = 0xa000, scoped, tag = 'input window, operand 0']
    #allocation6 [shape = 's32[2]{0}', space=sflag, size = 0x8, scoped, tag = 'scoped memory for tpu_custom_call.1']
    #allocation7 [shape = 's32[2]{0}', space=sflag, size = 0x8, scoped, tag = 'scoped memory for tpu_custom_call.1']
    #allocation8 [shape = 'u8[8192]{0}', space=vmem, size = 0x2000, scoped, tag = 'input window, operand 4, single buffered']
    #allocation9 [shape = 's32[1]{0}', space=sflag, size = 0x4, scoped, tag = 'scoped memory for tpu_custom_call.1']
    #allocation10 [shape = 'u8[40960]{0}', space=vmem, size = 0xa000, scoped, tag = 'output window, operand 0']
    %15 = vsyncpa [#allocation6], 0
    %s16 = scalar_lea.sflag [#allocation6], 1
    %17 = vsyncpa %s16, 0
    %18 = vsyncpa [#allocation9], 0
    %19 = vsyncpa [#allocation7], 0
    %s20 = scalar_lea.sflag [#allocation7], 1
    %21 = vsyncpa %s20, 0
    loop: start=0, step=1, limit=4
    $region2: #{tpu_custom_call.1} parent=1 // loop_pre_header
      _
    $region3: #{tpu_custom_call.1} parent=1 // loop_header
      %s23 = sphi 0, %s27
      %p24 = scmp.ge.s32.totalorder %s23, 4
      %s33 = sphi 0, %s35
      %s36 = sphi 0, %s33
      %s37 = sphi 0, %s36
      %s53 = sphi 0, %s37
      %s57 = sphi 0, %s57
      %s59 = sphi 0, %s57
      %s60 = sphi 0, %s59
      %s74 = sphi 0, %s60
      %s78 = sphi 0, %s78
      %s80 = sphi 0, %s78
      %s81 = sphi 0, %s80
      %s95 = sphi 0, %s81
      %s99 = sphi 0, %s99
      %s101 = sphi 0, %s99
      %s102 = sphi 0, %s101
      %s116 = sphi 0, %s102
      %s120 = sphi 0, %s120
      %s122 = sphi 0, %s120
      %s123 = sphi 0, %s122
      %s137 = sphi 0, %s123
      %s141 = sphi 0, %s141
      %s143 = sphi 0, %s141
      %s144 = sphi 0, %s143
      %s158 = sphi 0, %s144
      %s162 = sphi 0, %s162
      %s164 = sphi 0, %s162
      %s165 = sphi 0, %s164
      %s179 = sphi 0, %s165
      %s183 = sphi 0, %s183
      %s185 = sphi 0, %s183
      %s186 = sphi 0, %s185
      %s200 = sphi 0, %s186
      %s204 = sphi 0, %s204
      %s206 = sphi 0, %s204
      %s207 = sphi 0, %s206
      %s221 = sphi 0, %s207
      %s225 = sphi 0, %s225
      %s227 = sphi 0, %s225
      %s228 = sphi 0, %s227
      %s242 = sphi 0, %s228
      %s248 = sphi 0, %s250
      %s251 = sphi 0, %s248
      %s252 = sphi 0, %s251
      %s268 = sphi 0, %s252
    $region4: #{tpu_custom_call.1} parent=1 // loop_header_branch
      %26 = sbr.rel (%p24) target = $region8
    $region5: #{tpu_custom_call.1} parent=1 // loop_body
      %s28 = ssub.s32 %s23, 1
      %s29 = ssub.s32 %s23, 2
      %s30 = sadd.s32 %s23, 1
      %s31 = ssub.s32 %s23, %s30
      %p32 = scmp.eq.s32.totalorder %s31, 0
      %s34 = sadd.s32 %s33, 1
      %s35 = scalar_select %p32, %s33, %s34
      %p38 = pneg %p32
      %p39 = scmp.eq.s32.totalorder %s23, 1
      %p40 = por %p38, %p39
      %p41 = scmp.ne.s32.totalorder %s33, %s36
      %p42 = scmp.eq.s32.totalorder %s23, 0
      %p43 = por %p41, %p42
      %p44 = scmp.ne.s32.totalorder %s33, %s36
      %p45 = scmp.eq.s32.totalorder %s28, 1
      %p46 = por %p44, %p45
      %p47 = scmp.ne.s32.totalorder %s36, %s37
      %p48 = scmp.eq.s32.totalorder %s28, 0
      %p49 = por %p47, %p48
      %p50 = scmp.ne.s32.totalorder %s36, %s37
      %p51 = scmp.eq.s32.totalorder %s29, 1
      %p52 = por %p50, %p51
      %p54 = scmp.ne.s32.totalorder %s37, %s53
      %p55 = scmp.eq.s32.totalorder %s29, 0
      %p56 = por %p54, %p55
      %s58 = sadd.s32 %s57, 1
      %p61 = scmp.eq.s32.totalorder %s23, 1
      %p62 = scmp.ne.s32.totalorder %s57, %s59
      %p63 = scmp.eq.s32.totalorder %s23, 0
      %p64 = por %p62, %p63
      %p65 = scmp.ne.s32.totalorder %s57, %s59
      %p66 = scmp.eq.s32.totalorder %s28, 1
      %p67 = por %p65, %p66
      %p68 = scmp.ne.s32.totalorder %s59, %s60
      %p69 = scmp.eq.s32.totalorder %s28, 0
      %p70 = por %p68, %p69
      %p71 = scmp.ne.s32.totalorder %s59, %s60
      %p72 = scmp.eq.s32.totalorder %s29, 1
      %p73 = por %p71, %p72
      %p75 = scmp.ne.s32.totalorder %s60, %s74
      %p76 = scmp.eq.s32.totalorder %s29, 0
      %p77 = por %p75, %p76
      %s79 = sadd.s32 %s78, 1
      %p82 = scmp.eq.s32.totalorder %s23, 1
      %p83 = scmp.ne.s32.totalorder %s78, %s80
      %p84 = scmp.eq.s32.totalorder %s23, 0
      %p85 = por %p83, %p84
      %p86 = scmp.ne.s32.totalorder %s78, %s80
      %p87 = scmp.eq.s32.totalorder %s28, 1
      %p88 = por %p86, %p87
      %p89 = scmp.ne.s32.totalorder %s80, %s81
      %p90 = scmp.eq.s32.totalorder %s28, 0
      %p91 = por %p89, %p90
      %p92 = scmp.ne.s32.totalorder %s80, %s81
      %p93 = scmp.eq.s32.totalorder %s29, 1
      %p94 = por %p92, %p93
      %p96 = scmp.ne.s32.totalorder %s81, %s95
      %p97 = scmp.eq.s32.totalorder %s29, 0
      %p98 = por %p96, %p97
      %s100 = sadd.s32 %s99, 1
      %p103 = scmp.eq.s32.totalorder %s23, 1
      %p104 = scmp.ne.s32.totalorder %s99, %s101
      %p105 = scmp.eq.s32.totalorder %s23, 0
      %p106 = por %p104, %p105
      %p107 = scmp.ne.s32.totalorder %s99, %s101
      %p108 = scmp.eq.s32.totalorder %s28, 1
      %p109 = por %p107, %p108
      %p110 = scmp.ne.s32.totalorder %s101, %s102
      %p111 = scmp.eq.s32.totalorder %s28, 0
      %p112 = por %p110, %p111
      %p113 = scmp.ne.s32.totalorder %s101, %s102
      %p114 = scmp.eq.s32.totalorder %s29, 1
      %p115 = por %p113, %p114
      %p117 = scmp.ne.s32.totalorder %s102, %s116
      %p118 = scmp.eq.s32.totalorder %s29, 0
      %p119 = por %p117, %p118
      %s121 = sadd.s32 %s120, 1
      %p124 = scmp.eq.s32.totalorder %s23, 1
      %p125 = scmp.ne.s32.totalorder %s120, %s122
      %p126 = scmp.eq.s32.totalorder %s23, 0
      %p127 = por %p125, %p126
      %p128 = scmp.ne.s32.totalorder %s120, %s122
      %p129 = scmp.eq.s32.totalorder %s28, 1
      %p130 = por %p128, %p129
      %p131 = scmp.ne.s32.totalorder %s122, %s123
      %p132 = scmp.eq.s32.totalorder %s28, 0
      %p133 = por %p131, %p132
      %p134 = scmp.ne.s32.totalorder %s122, %s123
      %p135 = scmp.eq.s32.totalorder %s29, 1
      %p136 = por %p134, %p135
      %p138 = scmp.ne.s32.totalorder %s123, %s137
      %p139 = scmp.eq.s32.totalorder %s29, 0
      %p140 = por %p138, %p139
      %s142 = sadd.s32 %s141, 1
      %p145 = scmp.eq.s32.totalorder %s23, 1
      %p146 = scmp.ne.s32.totalorder %s141, %s143
      %p147 = scmp.eq.s32.totalorder %s23, 0
      %p148 = por %p146, %p147
      %p149 = scmp.ne.s32.totalorder %s141, %s143
      %p150 = scmp.eq.s32.totalorder %s28, 1
      %p151 = por %p149, %p150
      %p152 = scmp.ne.s32.totalorder %s143, %s144
      %p153 = scmp.eq.s32.totalorder %s28, 0
      %p154 = por %p152, %p153
      %p155 = scmp.ne.s32.totalorder %s143, %s144
      %p156 = scmp.eq.s32.totalorder %s29, 1
      %p157 = por %p155, %p156
      %p159 = scmp.ne.s32.totalorder %s144, %s158
      %p160 = scmp.eq.s32.totalorder %s29, 0
      %p161 = por %p159, %p160
      %s163 = sadd.s32 %s162, 1
      %p166 = scmp.eq.s32.totalorder %s23, 1
      %p167 = scmp.ne.s32.totalorder %s162, %s164
      %p168 = scmp.eq.s32.totalorder %s23, 0
      %p169 = por %p167, %p168
      %p170 = scmp.ne.s32.totalorder %s162, %s164
      %p171 = scmp.eq.s32.totalorder %s28, 1
      %p172 = por %p170, %p171
      %p173 = scmp.ne.s32.totalorder %s164, %s165
      %p174 = scmp.eq.s32.totalorder %s28, 0
      %p175 = por %p173, %p174
      %p176 = scmp.ne.s32.totalorder %s164, %s165
      %p177 = scmp.eq.s32.totalorder %s29, 1
      %p178 = por %p176, %p177
      %p180 = scmp.ne.s32.totalorder %s165, %s179
      %p181 = scmp.eq.s32.totalorder %s29, 0
      %p182 = por %p180, %p181
      %s184 = sadd.s32 %s183, 1
      %p187 = scmp.eq.s32.totalorder %s23, 1
      %p188 = scmp.ne.s32.totalorder %s183, %s185
      %p189 = scmp.eq.s32.totalorder %s23, 0
      %p190 = por %p188, %p189
      %p191 = scmp.ne.s32.totalorder %s183, %s185
      %p192 = scmp.eq.s32.totalorder %s28, 1
      %p193 = por %p191, %p192
      %p194 = scmp.ne.s32.totalorder %s185, %s186
      %p195 = scmp.eq.s32.totalorder %s28, 0
      %p196 = por %p194, %p195
      %p197 = scmp.ne.s32.totalorder %s185, %s186
      %p198 = scmp.eq.s32.totalorder %s29, 1
      %p199 = por %p197, %p198
      %p201 = scmp.ne.s32.totalorder %s186, %s200
      %p202 = scmp.eq.s32.totalorder %s29, 0
      %p203 = por %p201, %p202
      %s205 = sadd.s32 %s204, 1
      %p208 = scmp.eq.s32.totalorder %s23, 1
      %p209 = scmp.ne.s32.totalorder %s204, %s206
      %p210 = scmp.eq.s32.totalorder %s23, 0
      %p211 = por %p209, %p210
      %p212 = scmp.ne.s32.totalorder %s204, %s206
      %p213 = scmp.eq.s32.totalorder %s28, 1
      %p214 = por %p212, %p213
      %p215 = scmp.ne.s32.totalorder %s206, %s207
      %p216 = scmp.eq.s32.totalorder %s28, 0
      %p217 = por %p215, %p216
      %p218 = scmp.ne.s32.totalorder %s206, %s207
      %p219 = scmp.eq.s32.totalorder %s29, 1
      %p220 = por %p218, %p219
      %p222 = scmp.ne.s32.totalorder %s207, %s221
      %p223 = scmp.eq.s32.totalorder %s29, 0
      %p224 = por %p222, %p223
      %s226 = sadd.s32 %s225, 1
      %p229 = scmp.eq.s32.totalorder %s23, 1
      %p230 = scmp.ne.s32.totalorder %s225, %s227
      %p231 = scmp.eq.s32.totalorder %s23, 0
      %p232 = por %p230, %p231
      %p233 = scmp.ne.s32.totalorder %s225, %s227
      %p234 = scmp.eq.s32.totalorder %s28, 1
      %p235 = por %p233, %p234
      %p236 = scmp.ne.s32.totalorder %s227, %s228
      %p237 = scmp.eq.s32.totalorder %s28, 0
      %p238 = por %p236, %p237
      %p239 = scmp.ne.s32.totalorder %s227, %s228
      %p240 = scmp.eq.s32.totalorder %s29, 1
      %p241 = por %p239, %p240
      %p243 = scmp.ne.s32.totalorder %s228, %s242
      %p244 = scmp.eq.s32.totalorder %s29, 0
      %p245 = por %p243, %p244
      %s246 = ssub.s32 %s23, %s30
      %p247 = scmp.eq.s32.totalorder %s246, 0
      %s249 = sadd.s32 %s248, 1
      %s250 = scalar_select %p247, %s248, %s249
      %p253 = pneg %p247
      %p254 = scmp.eq.s32.totalorder %s23, 1
      %p255 = por %p253, %p254
      %p256 = scmp.ne.s32.totalorder %s248, %s251
      %p257 = scmp.eq.s32.totalorder %s23, 0
      %p258 = por %p256, %p257
      %p259 = scmp.ne.s32.totalorder %s248, %s251
      %p260 = scmp.eq.s32.totalorder %s28, 1
      %p261 = por %p259, %p260
      %p262 = scmp.ne.s32.totalorder %s251, %s252
      %p263 = scmp.eq.s32.totalorder %s28, 0
      %p264 = por %p262, %p263
      %p265 = scmp.ne.s32.totalorder %s251, %s252
      %p266 = scmp.eq.s32.totalorder %s29, 1
      %p267 = por %p265, %p266
      %p269 = scmp.ne.s32.totalorder %s252, %s268
      %p270 = scmp.eq.s32.totalorder %s29, 0
      %p271 = por %p269, %p270
      %p272 = scmp.le.s32.totalorder 1, %s23
      %p273 = scmp.lt.s32.totalorder %s23, 3
      %p274 = pnand %p272, %p273
      %p275 = pneg %p274
      // Predicated region
      $region9: #{tpu_custom_call.1} parent=5 // pred_check
        _
      $region10: #{tpu_custom_call.1} parent=5 // pred_check_branch
        %277 = sbr.rel (%p274) target = $region12
      $region11: #{tpu_custom_call.1} parent=5 // pred_region
        %s278 = ssub.s32 %s23, 1
        // Predicated region
        $region13: #{tpu_custom_call.1} parent=11 // pred_check
          %p279 = pneg %p70
        $region14: #{tpu_custom_call.1} parent=11 // pred_check_branch
          %281 = sbr.rel (%p279) target = $region16
        $region15: #{tpu_custom_call.1} parent=11 // pred_region
          _
        $region16: #{tpu_custom_call.1} parent=11 // pred_fallthru
          _
        // Predicated region
        $region17: #{tpu_custom_call.1} parent=11 // pred_check
          %p282 = pneg %p91
        $region18: #{tpu_custom_call.1} parent=11 // pred_check_branch
          %284 = sbr.rel (%p282) target = $region20
        $region19: #{tpu_custom_call.1} parent=11 // pred_region
          _
        $region20: #{tpu_custom_call.1} parent=11 // pred_fallthru
          _
        // Predicated region
        $region21: #{tpu_custom_call.1} parent=11 // pred_check
          %p285 = pneg %p112
        $region22: #{tpu_custom_call.1} parent=11 // pred_check_branch
          %287 = sbr.rel (%p285) target = $region24
        $region23: #{tpu_custom_call.1} parent=11 // pred_region
          _
        $region24: #{tpu_custom_call.1} parent=11 // pred_fallthru
          _
        // Predicated region
        $region25: #{tpu_custom_call.1} parent=11 // pred_check
          %p288 = pneg %p133
        $region26: #{tpu_custom_call.1} parent=11 // pred_check_branch
          %290 = sbr.rel (%p288) target = $region28
        $region27: #{tpu_custom_call.1} parent=11 // pred_region
          %292 = vsyncadd [#allocation9], 0
          %s294 = sshll.u32 %s4, 4
          %s295 = int_to_ptr.hbm [resolvable:$true] %s294
          %s296 = sshll.u32 [#allocation8], 4
          %s297 = int_to_ptr.vmem [resolvable:$true] %s296
          %299 = dma.hbm_to_vmem [thread:$0]  %s295, 256, %s297, [#allocation9]
        $region28: #{tpu_custom_call.1} parent=11 // pred_fallthru
          _
        // Predicated region
        $region29: #{tpu_custom_call.1} parent=11 // pred_check
          %p300 = pneg %p154
        $region30: #{tpu_custom_call.1} parent=11 // pred_check_branch
          %302 = sbr.rel (%p300) target = $region32
        $region31: #{tpu_custom_call.1} parent=11 // pred_region
          _
        $region32: #{tpu_custom_call.1} parent=11 // pred_fallthru
          _
        // Predicated region
        $region33: #{tpu_custom_call.1} parent=11 // pred_check
          %p303 = pneg %p175
        $region34: #{tpu_custom_call.1} parent=11 // pred_check_branch
          %305 = sbr.rel (%p303) target = $region36
        $region35: #{tpu_custom_call.1} parent=11 // pred_region
          _
        $region36: #{tpu_custom_call.1} parent=11 // pred_fallthru
          _
        // Predicated region
        $region37: #{tpu_custom_call.1} parent=11 // pred_check
          %p306 = pneg %p196
        $region38: #{tpu_custom_call.1} parent=11 // pred_check_branch
          %308 = sbr.rel (%p306) target = $region40
        $region39: #{tpu_custom_call.1} parent=11 // pred_region
          _
        $region40: #{tpu_custom_call.1} parent=11 // pred_fallthru
          _
        // Predicated region
        $region41: #{tpu_custom_call.1} parent=11 // pred_check
          %p309 = pneg %p217
        $region42: #{tpu_custom_call.1} parent=11 // pred_check_branch
          %311 = sbr.rel (%p309) target = $region44
        $region43: #{tpu_custom_call.1} parent=11 // pred_region
          _
        $region44: #{tpu_custom_call.1} parent=11 // pred_fallthru
          _
        // Predicated region
        $region45: #{tpu_custom_call.1} parent=11 // pred_check
          %p312 = pneg %p238
        $region46: #{tpu_custom_call.1} parent=11 // pred_check_branch
          %314 = sbr.rel (%p312) target = $region48
        $region47: #{tpu_custom_call.1} parent=11 // pred_region
          _
        $region48: #{tpu_custom_call.1} parent=11 // pred_fallthru
          _
      $region12: #{tpu_custom_call.1} parent=5 // pred_fallthru
        _
      %p315 = scmp.lt.s32.totalorder %s23, 2
      // Predicated region
      $region49: #{tpu_custom_call.1} parent=5 // pred_check
        %p316 = pneg %p315
      $region50: #{tpu_custom_call.1} parent=5 // pred_check_branch
        %318 = sbr.rel (%p316) target = $region52
      $region51: #{tpu_custom_call.1} parent=5 // pred_region
        // Predicated region
        $region53: #{tpu_custom_call.1} parent=51 // pred_check
          %p319 = pneg %p43
        $region54: #{tpu_custom_call.1} parent=51 // pred_check_branch
          %321 = sbr.rel (%p319) target = $region56
        $region55: #{tpu_custom_call.1} parent=51 // pred_region
          %s322 = sand.u32 %s33, 1
          %s323 = scalar_lea.sflag [#allocation6], %s322
          %s324 = sand.u32 %s33, 1
          %s325 = smul.addr %s324, 40
          %s326 = scalar_lea.vmem [#allocation5], %s325
          %328 = vsyncadd %s323, 0
          %s329 = smul.addr %s23, 5
          %s330 = smul.addr %s329, 8
          %s331 = scalar_lea.hbm %s0, %s330
          %s333 = sshll.u32 %s331, 4
          %s334 = int_to_ptr.hbm [resolvable:$true] %s333
          %s335 = sshll.u32 %s326, 4
          %s336 = int_to_ptr.vmem [resolvable:$true] %s335
          %338 = dma.hbm_to_vmem [thread:$0]  %s334, 640, %s336, %s323
        $region56: #{tpu_custom_call.1} parent=51 // pred_fallthru
          _
      $region52: #{tpu_custom_call.1} parent=5 // pred_fallthru
        _
      %p339 = scmp.le.s32.totalorder 1, %s23
      %p340 = scmp.lt.s32.totalorder %s23, 3
      %p341 = pnand %p339, %p340
      %p342 = pneg %p341
      // Predicated region
      $region57: #{tpu_custom_call.1} parent=5 // pred_check
        _
      $region58: #{tpu_custom_call.1} parent=5 // pred_check_branch
        %344 = sbr.rel (%p341) target = $region60
      $region59: #{tpu_custom_call.1} parent=5 // pred_region
        %s345 = ssub.s32 %s23, 1
        %s346 = sand.u32 %s36, 1
        %s347 = scalar_lea.sflag [#allocation6], %s346
        %s348 = sand.u32 %s36, 1
        %s349 = smul.addr %s348, 40
        %s350 = scalar_lea.vmem [#allocation5], %s349
        // Predicated region
        $region61: #{tpu_custom_call.1} parent=59 // pred_check
          %p351 = pneg %p49
        $region62: #{tpu_custom_call.1} parent=59 // pred_check_branch
          %353 = sbr.rel (%p351) target = $region64
        $region63: #{tpu_custom_call.1} parent=59 // pred_region
          %355 = dma.done %s347, 640
        $region64: #{tpu_custom_call.1} parent=59 // pred_fallthru
          _
        // Predicated region
        $region65: #{tpu_custom_call.1} parent=59 // pred_check
          %p356 = pneg %p133
        $region66: #{tpu_custom_call.1} parent=59 // pred_check_branch
          %358 = sbr.rel (%p356) target = $region68
        $region67: #{tpu_custom_call.1} parent=59 // pred_region
          %360 = dma.done [#allocation9], 256
        $region68: #{tpu_custom_call.1} parent=59 // pred_fallthru
          _
        %s361 = sand.u32 %s36, 1
        %s362 = scalar_lea.sflag [#allocation6], %s361
        %s363 = sand.u32 %s36, 1
        %s364 = smul.addr %s363, 40
        %s365 = scalar_lea.vmem [#allocation5], %s364
        %p366 = pneg %p49
        %p367 = pneg %p46
        %p368 = pneg %p70
        %p369 = pneg %p67
        %p370 = pneg %p91
        %p371 = pneg %p88
        %p372 = pneg %p112
        %p373 = pneg %p109
        %p374 = pneg %p133
        %p375 = pneg %p130
        %p376 = pneg %p154
        %p377 = pneg %p151
        %p378 = pneg %p175
        %p379 = pneg %p172
        %p380 = pneg %p196
        %p381 = pneg %p193
        %p382 = pneg %p217
        %p383 = pneg %p214
        %p384 = pneg %p238
        %p385 = pneg %p235
        %p386 = pneg %p264
        %p387 = pneg %p261
        %s388 = sand.u32 %s251, 1
        %s389 = scalar_lea.sflag [#allocation7], %s388
        %s390 = sand.u32 %s251, 1
        %s391 = smul.addr %s390, 40
        %s392 = scalar_lea.vmem [#allocation10], %s391
        %v393 = vld [vmem:[%s350] sm:$0xff]
        %v394 = vld [vmem:[%s350 + $0x8] sm:$0xff]
        %v395 = vld [vmem:[%s350 + $0x10] sm:$0xff]
        %v396 = vld [vmem:[%s350 + $0x18] sm:$0xff]
        %401 = vrot.lane.b32.xlu0 %v393, 111
        %v402 = vpop.permute.xlu0 %401
        %403 = vrot.lane.b32.xlu0 %v394, 111
        %v404 = vpop.permute.xlu0 %403
        %405 = vrot.lane.b32.xlu0 %v395, 111
        %v406 = vpop.permute.xlu0 %405
        %407 = vrot.lane.b32.xlu0 %v396, 111
        %v408 = vpop.permute.xlu0 %407
        %vm409 = vcmask 908288
        %v410 = vsel %vm409, %v402, %v404
        %v411 = vsel %vm409, %v404, %v406
        %v412 = vsel %vm409, %v406, %v408
        %416 = vst [vmem:[#allocation2] sm:$0xff] %v410
        %417 = vst [vmem:[#allocation2 + $0x8] sm:$0xff] %v411
        %vm418 = vcmask 998400
        %419 = vst.msk [vmem:[#allocation2 + $0x10] sm:$0xff] %vm418, %v412
        %v420 = vld [vmem:[%s350] sm:$0xff]
        %v421 = vld [vmem:[%s350 + $0x8] sm:$0xff]
        %v422 = vld [vmem:[%s350 + $0x10] sm:$0xff]
        %v423 = vld [vmem:[%s350 + $0x18] sm:$0xff]
        %428 = vrot.lane.b32.xlu0 %v420, 110
        %v429 = vpop.permute.xlu0 %428
        %430 = vrot.lane.b32.xlu0 %v421, 110
        %v431 = vpop.permute.xlu0 %430
        %432 = vrot.lane.b32.xlu0 %v422, 110
        %v433 = vpop.permute.xlu0 %432
        %434 = vrot.lane.b32.xlu0 %v423, 110
        %v435 = vpop.permute.xlu0 %434
        %vm436 = vcmask 900096
        %v437 = vsel %vm436, %v429, %v431
        %v438 = vsel %vm436, %v431, %v433
        %v439 = vsel %vm436, %v433, %v435
        %443 = vst [vmem:[#allocation2 + $0x18] sm:$0xff] %v437
        %444 = vst [vmem:[#allocation2 + $0x20] sm:$0xff] %v438
        %445 = vst.msk [vmem:[#allocation2 + $0x28] sm:$0xff] %vm418, %v439
        %v446 = vld [vmem:[%s350] sm:$0xff]
        %v447 = vld [vmem:[%s350 + $0x8] sm:$0xff]
        %v448 = vld [vmem:[%s350 + $0x10] sm:$0xff]
        %v449 = vld [vmem:[%s350 + $0x18] sm:$0xff]
        %454 = vrot.lane.b32.xlu0 %v446, 109
        %v455 = vpop.permute.xlu0 %454
        %456 = vrot.lane.b32.xlu0 %v447, 109
        %v457 = vpop.permute.xlu0 %456
        %458 = vrot.lane.b32.xlu0 %v448, 109
        %v459 = vpop.permute.xlu0 %458
        %460 = vrot.lane.b32.xlu0 %v449, 109
        %v461 = vpop.permute.xlu0 %460
        %vm462 = vcmask 891904
        %v463 = vsel %vm462, %v455, %v457
        %v464 = vsel %vm462, %v457, %v459
        %v465 = vsel %vm462, %v459, %v461
        %469 = vst [vmem:[#allocation2 + $0x30] sm:$0xff] %v463
        %470 = vst [vmem:[#allocation2 + $0x38] sm:$0xff] %v464
        %471 = vst.msk [vmem:[#allocation2 + $0x40] sm:$0xff] %vm418, %v465
        %v472 = vld [vmem:[%s350] sm:$0xff]
        %v473 = vld [vmem:[%s350 + $0x8] sm:$0xff]
        %v474 = vld [vmem:[%s350 + $0x10] sm:$0xff]
        %v475 = vld [vmem:[%s350 + $0x18] sm:$0xff]
        %480 = vrot.lane.b32.xlu0 %v472, 101
        %v481 = vpop.permute.xlu0 %480
        %482 = vrot.lane.b32.xlu0 %v473, 101
        %v483 = vpop.permute.xlu0 %482
        %484 = vrot.lane.b32.xlu0 %v474, 101
        %v485 = vpop.permute.xlu0 %484
        %486 = vrot.lane.b32.xlu0 %v475, 101
        %v487 = vpop.permute.xlu0 %486
        %vm488 = vcmask 826368
        %v489 = vsel %vm488, %v481, %v483
        %v490 = vsel %vm488, %v483, %v485
        %v491 = vsel %vm488, %v485, %v487
        %495 = vst [vmem:[#allocation2 + $0x48] sm:$0xff] %v489
        %496 = vst [vmem:[#allocation2 + $0x50] sm:$0xff] %v490
        %497 = vst.msk [vmem:[#allocation2 + $0x58] sm:$0xff] %vm418, %v491
        %v498 = vld [vmem:[%s350] sm:$0xff]
        %v499 = vld [vmem:[%s350 + $0x8] sm:$0xff]
        %v500 = vld [vmem:[%s350 + $0x10] sm:$0xff]
        %v501 = vld [vmem:[%s350 + $0x18] sm:$0xff]
        %506 = vrot.lane.b32.xlu0 %v498, 100
        %v507 = vpop.permute.xlu0 %506
        %508 = vrot.lane.b32.xlu0 %v499, 100
        %v509 = vpop.permute.xlu0 %508
        %510 = vrot.lane.b32.xlu0 %v500, 100
        %v511 = vpop.permute.xlu0 %510
        %512 = vrot.lane.b32.xlu0 %v501, 100
        %v513 = vpop.permute.xlu0 %512
        %vm514 = vcmask 818176
        %v515 = vsel %vm514, %v507, %v509
        %v516 = vsel %vm514, %v509, %v511
        %v517 = vsel %vm514, %v511, %v513
        %521 = vst [vmem:[#allocation2 + $0x60] sm:$0xff] %v515
        %522 = vst [vmem:[#allocation2 + $0x68] sm:$0xff] %v516
        %523 = vst.msk [vmem:[#allocation2 + $0x70] sm:$0xff] %vm418, %v517
        %v524 = vld [vmem:[%s350] sm:$0xff]
        %v525 = vld [vmem:[%s350 + $0x8] sm:$0xff]
        %v526 = vld [vmem:[%s350 + $0x10] sm:$0xff]
        %v527 = vld [vmem:[%s350 + $0x18] sm:$0xff]
        %532 = vrot.lane.b32.xlu0 %v524, 99
        %v533 = vpop.permute.xlu0 %532
        %534 = vrot.lane.b32.xlu0 %v525, 99
        %v535 = vpop.permute.xlu0 %534
        %536 = vrot.lane.b32.xlu0 %v526, 99
        %v537 = vpop.permute.xlu0 %536
        %538 = vrot.lane.b32.xlu0 %v527, 99
        %v539 = vpop.permute.xlu0 %538
        %vm540 = vcmask 809984
        %v541 = vsel %vm540, %v533, %v535
        %v542 = vsel %vm540, %v535, %v537
        %v543 = vsel %vm540, %v537, %v539
        %547 = vst [vmem:[#allocation2 + $0x78] sm:$0xff] %v541
        %548 = vst [vmem:[#allocation2 + $0x80] sm:$0xff] %v542
        %549 = vst.msk [vmem:[#allocation2 + $0x88] sm:$0xff] %vm418, %v543
        %v550 = vld [vmem:[%s350] sm:$0xff]
        %v551 = vld [vmem:[%s350 + $0x8] sm:$0xff]
        %v552 = vld [vmem:[%s350 + $0x10] sm:$0xff]
        %v553 = vld [vmem:[%s350 + $0x18] sm:$0xff]
        %558 = vrot.lane.b32.xlu0 %v550, 91
        %v559 = vpop.permute.xlu0 %558
        %560 = vrot.lane.b32.xlu0 %v551, 91
        %v561 = vpop.permute.xlu0 %560
        %562 = vrot.lane.b32.xlu0 %v552, 91
        %v563 = vpop.permute.xlu0 %562
        %564 = vrot.lane.b32.xlu0 %v553, 91
        %v565 = vpop.permute.xlu0 %564
        %vm566 = vcmask 744448
        %v567 = vsel %vm566, %v559, %v561
        %v568 = vsel %vm566, %v561, %v563
        %v569 = vsel %vm566, %v563, %v565
        %573 = vst [vmem:[#allocation2 + $0x90] sm:$0xff] %v567
        %574 = vst [vmem:[#allocation2 + $0x98] sm:$0xff] %v568
        %575 = vst.msk [vmem:[#allocation2 + $0xa0] sm:$0xff] %vm418, %v569
        %v576 = vld [vmem:[%s350] sm:$0xff]
        %v577 = vld [vmem:[%s350 + $0x8] sm:$0xff]
        %v578 = vld [vmem:[%s350 + $0x10] sm:$0xff]
        %v579 = vld [vmem:[%s350 + $0x18] sm:$0xff]
        %584 = vrot.lane.b32.xlu0 %v576, 90
        %v585 = vpop.permute.xlu0 %584
        %586 = vrot.lane.b32.xlu0 %v577, 90
        %v587 = vpop.permute.xlu0 %586
        %588 = vrot.lane.b32.xlu0 %v578, 90
        %v589 = vpop.permute.xlu0 %588
        %590 = vrot.lane.b32.xlu0 %v579, 90
        %v591 = vpop.permute.xlu0 %590
        %vm592 = vcmask 736256
        %v593 = vsel %vm592, %v585, %v587
        %v594 = vsel %vm592, %v587, %v589
        %v595 = vsel %vm592, %v589, %v591
        %599 = vst [vmem:[#allocation2 + $0xa8] sm:$0xff] %v593
        %600 = vst [vmem:[#allocation2 + $0xb0] sm:$0xff] %v594
        %601 = vst.msk [vmem:[#allocation2 + $0xb8] sm:$0xff] %vm418, %v595
        %v602 = vld [vmem:[%s350] sm:$0xff]
        %v603 = vld [vmem:[%s350 + $0x8] sm:$0xff]
        %v604 = vld [vmem:[%s350 + $0x10] sm:$0xff]
        %v605 = vld [vmem:[%s350 + $0x18] sm:$0xff]
        %610 = vrot.lane.b32.xlu0 %v602, 89
        %v611 = vpop.permute.xlu0 %610
        %612 = vrot.lane.b32.xlu0 %v603, 89
        %v613 = vpop.permute.xlu0 %612
        %614 = vrot.lane.b32.xlu0 %v604, 89
        %v615 = vpop.permute.xlu0 %614
        %616 = vrot.lane.b32.xlu0 %v605, 89
        %v617 = vpop.permute.xlu0 %616
        %vm618 = vcmask 728064
        %v619 = vsel %vm618, %v611, %v613
        %v620 = vsel %vm618, %v613, %v615
        %v621 = vsel %vm618, %v615, %v617
        %625 = vst [vmem:[#allocation2 + $0xc0] sm:$0xff] %v619
        %626 = vst [vmem:[#allocation2 + $0xc8] sm:$0xff] %v620
        %627 = vst.msk [vmem:[#allocation2 + $0xd0] sm:$0xff] %vm418, %v621
        %v628 = vld [vmem:[%s350] sm:$0xff]
        %v629 = vld [vmem:[%s350 + $0x8] sm:$0xff]
        %v630 = vld [vmem:[%s350 + $0x10] sm:$0xff]
        %v631 = vld [vmem:[%s350 + $0x18] sm:$0xff]
        %636 = vrot.lane.b32.xlu0 %v628, 11
        %v637 = vpop.permute.xlu0 %636
        %638 = vrot.lane.b32.xlu0 %v629, 11
        %v639 = vpop.permute.xlu0 %638
        %640 = vrot.lane.b32.xlu0 %v630, 11
        %v641 = vpop.permute.xlu0 %640
        %642 = vrot.lane.b32.xlu0 %v631, 11
        %v643 = vpop.permute.xlu0 %642
        %vm644 = vcmask 89088
        %v645 = vsel %vm644, %v637, %v639
        %v646 = vsel %vm644, %v639, %v641
        %v647 = vsel %vm644, %v641, %v643
        %651 = vst [vmem:[#allocation2 + $0xd8] sm:$0xff] %v645
        %652 = vst [vmem:[#allocation2 + $0xe0] sm:$0xff] %v646
        %653 = vst.msk [vmem:[#allocation2 + $0xe8] sm:$0xff] %vm418, %v647
        %v654 = vld [vmem:[%s350] sm:$0xff]
        %v655 = vld [vmem:[%s350 + $0x8] sm:$0xff]
        %v656 = vld [vmem:[%s350 + $0x10] sm:$0xff]
        %v657 = vld [vmem:[%s350 + $0x18] sm:$0xff]
        %662 = vrot.lane.b32.xlu0 %v654, 10
        %v663 = vpop.permute.xlu0 %662
        %664 = vrot.lane.b32.xlu0 %v655, 10
        %v665 = vpop.permute.xlu0 %664
        %666 = vrot.lane.b32.xlu0 %v656, 10
        %v667 = vpop.permute.xlu0 %666
        %668 = vrot.lane.b32.xlu0 %v657, 10
        %v669 = vpop.permute.xlu0 %668
        %vm670 = vcmask 80896
        %v671 = vsel %vm670, %v663, %v665
        %v672 = vsel %vm670, %v665, %v667
        %v673 = vsel %vm670, %v667, %v669
        %677 = vst [vmem:[#allocation2 + $0xf0] sm:$0xff] %v671
        %678 = vst [vmem:[#allocation2 + $0xf8] sm:$0xff] %v672
        %679 = vst.msk [vmem:[#allocation2 + $0x100] sm:$0xff] %vm418, %v673
        %v680 = vld [vmem:[%s350] sm:$0xff]
        %v681 = vld [vmem:[%s350 + $0x8] sm:$0xff]
        %v682 = vld [vmem:[%s350 + $0x10] sm:$0xff]
        %v683 = vld [vmem:[%s350 + $0x18] sm:$0xff]
        %688 = vrot.lane.b32.xlu0 %v680, 9
        %v689 = vpop.permute.xlu0 %688
        %690 = vrot.lane.b32.xlu0 %v681, 9
        %v691 = vpop.permute.xlu0 %690
        %692 = vrot.lane.b32.xlu0 %v682, 9
        %v693 = vpop.permute.xlu0 %692
        %694 = vrot.lane.b32.xlu0 %v683, 9
        %v695 = vpop.permute.xlu0 %694
        %vm696 = vcmask 72704
        %v697 = vsel %vm696, %v689, %v691
        %v698 = vsel %vm696, %v691, %v693
        %v699 = vsel %vm696, %v693, %v695
        %703 = vst [vmem:[#allocation2 + $0x108] sm:$0xff] %v697
        %704 = vst [vmem:[#allocation2 + $0x110] sm:$0xff] %v698
        %705 = vst.msk [vmem:[#allocation2 + $0x118] sm:$0xff] %vm418, %v699
        %v706 = vld [vmem:[%s350] sm:$0xff]
        %v707 = vld [vmem:[%s350 + $0x8] sm:$0xff]
        %v708 = vld [vmem:[%s350 + $0x10] sm:$0xff]
        %v709 = vld [vmem:[%s350 + $0x18] sm:$0xff]
        %714 = vrot.lane.b32.xlu0 %v706, 1
        %v715 = vpop.permute.xlu0 %714
        %716 = vrot.lane.b32.xlu0 %v707, 1
        %v717 = vpop.permute.xlu0 %716
        %718 = vrot.lane.b32.xlu0 %v708, 1
        %v719 = vpop.permute.xlu0 %718
        %720 = vrot.lane.b32.xlu0 %v709, 1
        %v721 = vpop.permute.xlu0 %720
        %vm722 = vcmask 7168
        %v723 = vsel %vm722, %v715, %v717
        %v724 = vsel %vm722, %v717, %v719
        %v725 = vsel %vm722, %v719, %v721
        %729 = vst [vmem:[#allocation2 + $0x120] sm:$0xff] %v723
        %730 = vst [vmem:[#allocation2 + $0x128] sm:$0xff] %v724
        %731 = vst.msk [vmem:[#allocation2 + $0x130] sm:$0xff] %vm418, %v725
        %v732 = vld [vmem:[%s350 + $0x8] sm:$0xff]
        %v733 = vld [vmem:[%s350 + $0x10] sm:$0xff]
        %v734 = vld [vmem:[%s350 + $0x18] sm:$0xff]
        %735 = vst [vmem:[#allocation2 + $0x138] sm:$0xff] %v732
        %736 = vst [vmem:[#allocation2 + $0x140] sm:$0xff] %v733
        %737 = vst.msk [vmem:[#allocation2 + $0x148] sm:$0xff] %vm418, %v734
        %v738 = vld [vmem:[%s350 + $0x8] sm:$0xff]
        %v739 = vld [vmem:[%s350 + $0x10] sm:$0xff]
        %v740 = vld [vmem:[%s350 + $0x18] sm:$0xff]
        %744 = vrot.lane.b32.xlu0 %v738, 127
        %v745 = vpop.permute.xlu0 %744
        %746 = vrot.lane.b32.xlu0 %v739, 127
        %v747 = vpop.permute.xlu0 %746
        %748 = vrot.lane.b32.xlu0 %v740, 127
        %v749 = vpop.permute.xlu0 %748
        %vm750 = vcmask 1039360
        %v751 = vsel %vm750, %v745, %v747
        %v752 = vsel %vm750, %v747, %v749
        %756 = vst [vmem:[#allocation2 + $0x150] sm:$0xff] %v751
        %757 = vst [vmem:[#allocation2 + $0x158] sm:$0xff] %v752
        %758 = vst.msk [vmem:[#allocation2 + $0x160] sm:$0xff] %vm418, %v749
        %v759 = vld [vmem:[%s350 + $0x8] sm:$0xff]
        %v760 = vld [vmem:[%s350 + $0x10] sm:$0xff]
        %v761 = vld [vmem:[%s350 + $0x18] sm:$0xff]
        %v762 = vld [vmem:[%s350 + $0x20] sm:$0xff]
        %767 = vrot.lane.b32.xlu0 %v759, 119
        %v768 = vpop.permute.xlu0 %767
        %769 = vrot.lane.b32.xlu0 %v760, 119
        %v770 = vpop.permute.xlu0 %769
        %771 = vrot.lane.b32.xlu0 %v761, 119
        %v772 = vpop.permute.xlu0 %771
        %773 = vrot.lane.b32.xlu0 %v762, 119
        %v774 = vpop.permute.xlu0 %773
        %vm775 = vcmask 973824
        %v776 = vsel %vm775, %v768, %v770
        %v777 = vsel %vm775, %v770, %v772
        %v778 = vsel %vm775, %v772, %v774
        %782 = vst [vmem:[#allocation2 + $0x168] sm:$0xff] %v776
        %783 = vst [vmem:[#allocation2 + $0x170] sm:$0xff] %v777
        %784 = vst.msk [vmem:[#allocation2 + $0x178] sm:$0xff] %vm418, %v778
        %v785 = vld [vmem:[%s350 + $0x8] sm:$0xff]
        %v786 = vld [vmem:[%s350 + $0x10] sm:$0xff]
        %v787 = vld [vmem:[%s350 + $0x18] sm:$0xff]
        %v788 = vld [vmem:[%s350 + $0x20] sm:$0xff]
        %793 = vrot.lane.b32.xlu0 %v785, 118
        %v794 = vpop.permute.xlu0 %793
        %795 = vrot.lane.b32.xlu0 %v786, 118
        %v796 = vpop.permute.xlu0 %795
        %797 = vrot.lane.b32.xlu0 %v787, 118
        %v798 = vpop.permute.xlu0 %797
        %799 = vrot.lane.b32.xlu0 %v788, 118
        %v800 = vpop.permute.xlu0 %799
        %vm801 = vcmask 965632
        %v802 = vsel %vm801, %v794, %v796
        %v803 = vsel %vm801, %v796, %v798
        %v804 = vsel %vm801, %v798, %v800
        %808 = vst [vmem:[#allocation2 + $0x180] sm:$0xff] %v802
        %809 = vst [vmem:[#allocation2 + $0x188] sm:$0xff] %v803
        %810 = vst.msk [vmem:[#allocation2 + $0x190] sm:$0xff] %vm418, %v804
        %v811 = vld [vmem:[%s350 + $0x8] sm:$0xff]
        %v812 = vld [vmem:[%s350 + $0x10] sm:$0xff]
        %v813 = vld [vmem:[%s350 + $0x18] sm:$0xff]
        %v814 = vld [vmem:[%s350 + $0x20] sm:$0xff]
        %819 = vrot.lane.b32.xlu0 %v811, 117
        %v820 = vpop.permute.xlu0 %819
        %821 = vrot.lane.b32.xlu0 %v812, 117
        %v822 = vpop.permute.xlu0 %821
        %823 = vrot.lane.b32.xlu0 %v813, 117
        %v824 = vpop.permute.xlu0 %823
        %825 = vrot.lane.b32.xlu0 %v814, 117
        %v826 = vpop.permute.xlu0 %825
        %vm827 = vcmask 957440
        %v828 = vsel %vm827, %v820, %v822
        %v829 = vsel %vm827, %v822, %v824
        %v830 = vsel %vm827, %v824, %v826
        %834 = vst [vmem:[#allocation2 + $0x198] sm:$0xff] %v828
        %835 = vst [vmem:[#allocation2 + $0x1a0] sm:$0xff] %v829
        %836 = vst.msk [vmem:[#allocation2 + $0x1a8] sm:$0xff] %vm418, %v830
        %v837 = vld [vmem:[%s350 + $0x8] sm:$0xff]
        %v838 = vld [vmem:[%s350 + $0x10] sm:$0xff]
        %v839 = vld [vmem:[%s350 + $0x18] sm:$0xff]
        %v840 = vld [vmem:[%s350 + $0x20] sm:$0xff]
        %845 = vrot.lane.b32.xlu0 %v837, 39
        %v846 = vpop.permute.xlu0 %845
        %847 = vrot.lane.b32.xlu0 %v838, 39
        %v848 = vpop.permute.xlu0 %847
        %849 = vrot.lane.b32.xlu0 %v839, 39
        %v850 = vpop.permute.xlu0 %849
        %851 = vrot.lane.b32.xlu0 %v840, 39
        %v852 = vpop.permute.xlu0 %851
        %vm853 = vcmask 318464
        %v854 = vsel %vm853, %v846, %v848
        %v855 = vsel %vm853, %v848, %v850
        %v856 = vsel %vm853, %v850, %v852
        %860 = vst [vmem:[#allocation2 + $0x1b0] sm:$0xff] %v854
        %861 = vst [vmem:[#allocation2 + $0x1b8] sm:$0xff] %v855
        %862 = vst.msk [vmem:[#allocation2 + $0x1c0] sm:$0xff] %vm418, %v856
        %v863 = vld [vmem:[%s350 + $0x8] sm:$0xff]
        %v864 = vld [vmem:[%s350 + $0x10] sm:$0xff]
        %v865 = vld [vmem:[%s350 + $0x18] sm:$0xff]
        %v866 = vld [vmem:[%s350 + $0x20] sm:$0xff]
        %871 = vrot.lane.b32.xlu0 %v863, 38
        %v872 = vpop.permute.xlu0 %871
        %873 = vrot.lane.b32.xlu0 %v864, 38
        %v874 = vpop.permute.xlu0 %873
        %875 = vrot.lane.b32.xlu0 %v865, 38
        %v876 = vpop.permute.xlu0 %875
        %877 = vrot.lane.b32.xlu0 %v866, 38
        %v878 = vpop.permute.xlu0 %877
        %vm879 = vcmask 310272
        %v880 = vsel %vm879, %v872, %v874
        %v881 = vsel %vm879, %v874, %v876
        %v882 = vsel %vm879, %v876, %v878
        %886 = vst [vmem:[#allocation2 + $0x1c8] sm:$0xff] %v880
        %887 = vst [vmem:[#allocation2 + $0x1d0] sm:$0xff] %v881
        %888 = vst.msk [vmem:[#allocation2 + $0x1d8] sm:$0xff] %vm418, %v882
        %v889 = vld [vmem:[%s350 + $0x8] sm:$0xff]
        %v890 = vld [vmem:[%s350 + $0x10] sm:$0xff]
        %v891 = vld [vmem:[%s350 + $0x18] sm:$0xff]
        %v892 = vld [vmem:[%s350 + $0x20] sm:$0xff]
        %897 = vrot.lane.b32.xlu0 %v889, 37
        %v898 = vpop.permute.xlu0 %897
        %899 = vrot.lane.b32.xlu0 %v890, 37
        %v900 = vpop.permute.xlu0 %899
        %901 = vrot.lane.b32.xlu0 %v891, 37
        %v902 = vpop.permute.xlu0 %901
        %903 = vrot.lane.b32.xlu0 %v892, 37
        %v904 = vpop.permute.xlu0 %903
        %vm905 = vcmask 302080
        %v906 = vsel %vm905, %v898, %v900
        %v907 = vsel %vm905, %v900, %v902
        %v908 = vsel %vm905, %v902, %v904
        %912 = vst [vmem:[#allocation2 + $0x1e0] sm:$0xff] %v906
        %913 = vst [vmem:[#allocation2 + $0x1e8] sm:$0xff] %v907
        %914 = vst.msk [vmem:[#allocation2 + $0x1f0] sm:$0xff] %vm418, %v908
        %v915 = vld [vmem:[%s350 + $0x8] sm:$0xff]
        %v916 = vld [vmem:[%s350 + $0x10] sm:$0xff]
        %v917 = vld [vmem:[%s350 + $0x18] sm:$0xff]
        %v918 = vld [vmem:[%s350 + $0x20] sm:$0xff]
        %923 = vrot.lane.b32.xlu0 %v915, 29
        %v924 = vpop.permute.xlu0 %923
        %925 = vrot.lane.b32.xlu0 %v916, 29
        %v926 = vpop.permute.xlu0 %925
        %927 = vrot.lane.b32.xlu0 %v917, 29
        %v928 = vpop.permute.xlu0 %927
        %929 = vrot.lane.b32.xlu0 %v918, 29
        %v930 = vpop.permute.xlu0 %929
        %vm931 = vcmask 236544
        %v932 = vsel %vm931, %v924, %v926
        %v933 = vsel %vm931, %v926, %v928
        %v934 = vsel %vm931, %v928, %v930
        %938 = vst [vmem:[#allocation2 + $0x1f8] sm:$0xff] %v932
        %939 = vst [vmem:[#allocation2 + $0x200] sm:$0xff] %v933
        %940 = vst.msk [vmem:[#allocation2 + $0x208] sm:$0xff] %vm418, %v934
        %v941 = vld [vmem:[%s350 + $0x8] sm:$0xff]
        %v942 = vld [vmem:[%s350 + $0x10] sm:$0xff]
        %v943 = vld [vmem:[%s350 + $0x18] sm:$0xff]
        %v944 = vld [vmem:[%s350 + $0x20] sm:$0xff]
        %949 = vrot.lane.b32.xlu0 %v941, 28
        %v950 = vpop.permute.xlu0 %949
        %951 = vrot.lane.b32.xlu0 %v942, 28
        %v952 = vpop.permute.xlu0 %951
        %953 = vrot.lane.b32.xlu0 %v943, 28
        %v954 = vpop.permute.xlu0 %953
        %955 = vrot.lane.b32.xlu0 %v944, 28
        %v956 = vpop.permute.xlu0 %955
        %vm957 = vcmask 228352
        %v958 = vsel %vm957, %v950, %v952
        %v959 = vsel %vm957, %v952, %v954
        %v960 = vsel %vm957, %v954, %v956
        %964 = vst [vmem:[#allocation2 + $0x210] sm:$0xff] %v958
        %965 = vst [vmem:[#allocation2 + $0x218] sm:$0xff] %v959
        %966 = vst.msk [vmem:[#allocation2 + $0x220] sm:$0xff] %vm418, %v960
        %v967 = vld [vmem:[%s350 + $0x8] sm:$0xff]
        %v968 = vld [vmem:[%s350 + $0x10] sm:$0xff]
        %v969 = vld [vmem:[%s350 + $0x18] sm:$0xff]
        %v970 = vld [vmem:[%s350 + $0x20] sm:$0xff]
        %975 = vrot.lane.b32.xlu0 %v967, 27
        %v976 = vpop.permute.xlu0 %975
        %977 = vrot.lane.b32.xlu0 %v968, 27
        %v978 = vpop.permute.xlu0 %977
        %979 = vrot.lane.b32.xlu0 %v969, 27
        %v980 = vpop.permute.xlu0 %979
        %981 = vrot.lane.b32.xlu0 %v970, 27
        %v982 = vpop.permute.xlu0 %981
        %vm983 = vcmask 220160
        %v984 = vsel %vm983, %v976, %v978
        %v985 = vsel %vm983, %v978, %v980
        %v986 = vsel %vm983, %v980, %v982
        %990 = vst [vmem:[#allocation2 + $0x228] sm:$0xff] %v984
        %991 = vst [vmem:[#allocation2 + $0x230] sm:$0xff] %v985
        %992 = vst.msk [vmem:[#allocation2 + $0x238] sm:$0xff] %vm418, %v986
        %v993 = vld [vmem:[%s350 + $0x8] sm:$0xff]
        %v994 = vld [vmem:[%s350 + $0x10] sm:$0xff]
        %v995 = vld [vmem:[%s350 + $0x18] sm:$0xff]
        %v996 = vld [vmem:[%s350 + $0x20] sm:$0xff]
        %1001 = vrot.lane.b32.xlu0 %v993, 19
        %v1002 = vpop.permute.xlu0 %1001
        %1003 = vrot.lane.b32.xlu0 %v994, 19
        %v1004 = vpop.permute.xlu0 %1003
        %1005 = vrot.lane.b32.xlu0 %v995, 19
        %v1006 = vpop.permute.xlu0 %1005
        %1007 = vrot.lane.b32.xlu0 %v996, 19
        %v1008 = vpop.permute.xlu0 %1007
        %vm1009 = vcmask 154624
        %v1010 = vsel %vm1009, %v1002, %v1004
        %v1011 = vsel %vm1009, %v1004, %v1006
        %v1012 = vsel %vm1009, %v1006, %v1008
        %1016 = vst [vmem:[#allocation2 + $0x240] sm:$0xff] %v1010
        %1017 = vst [vmem:[#allocation2 + $0x248] sm:$0xff] %v1011
        %1018 = vst.msk [vmem:[#allocation2 + $0x250] sm:$0xff] %vm418, %v1012
        %v1019 = vld [vmem:[%s350 + $0x8] sm:$0xff]
        %v1020 = vld [vmem:[%s350 + $0x10] sm:$0xff]
        %v1021 = vld [vmem:[%s350 + $0x18] sm:$0xff]
        %v1022 = vld [vmem:[%s350 + $0x20] sm:$0xff]
        %1027 = vrot.lane.b32.xlu0 %v1019, 18
        %v1028 = vpop.permute.xlu0 %1027
        %1029 = vrot.lane.b32.xlu0 %v1020, 18
        %v1030 = vpop.permute.xlu0 %1029
        %1031 = vrot.lane.b32.xlu0 %v1021, 18
        %v1032 = vpop.permute.xlu0 %1031
        %1033 = vrot.lane.b32.xlu0 %v1022, 18
        %v1034 = vpop.permute.xlu0 %1033
        %vm1035 = vcmask 146432
        %v1036 = vsel %vm1035, %v1028, %v1030
        %v1037 = vsel %vm1035, %v1030, %v1032
        %v1038 = vsel %vm1035, %v1032, %v1034
        %1042 = vst [vmem:[#allocation2 + $0x258] sm:$0xff] %v1036
        %1043 = vst [vmem:[#allocation2 + $0x260] sm:$0xff] %v1037
        %1044 = vst.msk [vmem:[#allocation2 + $0x268] sm:$0xff] %vm418, %v1038
        %v1045 = vld [vmem:[%s350 + $0x8] sm:$0xff]
        %v1046 = vld [vmem:[%s350 + $0x10] sm:$0xff]
        %v1047 = vld [vmem:[%s350 + $0x18] sm:$0xff]
        %v1048 = vld [vmem:[%s350 + $0x20] sm:$0xff]
        %1053 = vrot.lane.b32.xlu0 %v1045, 17
        %v1054 = vpop.permute.xlu0 %1053
        %1055 = vrot.lane.b32.xlu0 %v1046, 17
        %v1056 = vpop.permute.xlu0 %1055
        %1057 = vrot.lane.b32.xlu0 %v1047, 17
        %v1058 = vpop.permute.xlu0 %1057
        %1059 = vrot.lane.b32.xlu0 %v1048, 17
        %v1060 = vpop.permute.xlu0 %1059
        %vm1061 = vcmask 138240
        %v1062 = vsel %vm1061, %v1054, %v1056
        %v1063 = vsel %vm1061, %v1056, %v1058
        %v1064 = vsel %vm1061, %v1058, %v1060
        %1068 = vst [vmem:[#allocation2 + $0x270] sm:$0xff] %v1062
        %1069 = vst [vmem:[#allocation2 + $0x278] sm:$0xff] %v1063
        %1070 = vst.msk [vmem:[#allocation2 + $0x280] sm:$0xff] %vm418, %v1064
        %v1071 = vld [vmem:[%s2] sm:$0xff]
        %v1072 = vld [vmem:[%s2 + $0x8] sm:$0xff]
        %v1073 = vld [vmem:[#allocation2] sm:$0xff]
        %v1074 = vld [vmem:[#allocation2 + $0x8] sm:$0xff]
        %v1075 = vld [vmem:[#allocation2 + $0x10] sm:$0xff]
        %v1076 = vld [vmem:[#allocation2 + $0x18] sm:$0xff]
        %v1077 = vld [vmem:[#allocation2 + $0x20] sm:$0xff]
        %v1078 = vld [vmem:[#allocation2 + $0x28] sm:$0xff]
        %v1079 = vld [vmem:[#allocation2 + $0x30] sm:$0xff]
        %v1080 = vld [vmem:[#allocation2 + $0x38] sm:$0xff]
        %v1081 = vld [vmem:[#allocation2 + $0x40] sm:$0xff]
        %v1082 = vld [vmem:[#allocation2 + $0x48] sm:$0xff]
        %v1083 = vld [vmem:[#allocation2 + $0x50] sm:$0xff]
        %v1084 = vld [vmem:[#allocation2 + $0x58] sm:$0xff]
        %v1085 = vld [vmem:[#allocation2 + $0x60] sm:$0xff]
        %v1086 = vld [vmem:[#allocation2 + $0x68] sm:$0xff]
        %v1087 = vld [vmem:[#allocation2 + $0x70] sm:$0xff]
        %v1088 = vld [vmem:[#allocation2 + $0x78] sm:$0xff]
        %v1089 = vld [vmem:[#allocation2 + $0x80] sm:$0xff]
        %v1090 = vld [vmem:[#allocation2 + $0x88] sm:$0xff]
        %v1091 = vld [vmem:[#allocation2 + $0x90] sm:$0xff]
        %v1092 = vld [vmem:[#allocation2 + $0x98] sm:$0xff]
        %v1093 = vld [vmem:[#allocation2 + $0xa0] sm:$0xff]
        %v1094 = vld [vmem:[#allocation2 + $0xa8] sm:$0xff]
        %v1095 = vld [vmem:[#allocation2 + $0xb0] sm:$0xff]
        %v1096 = vld [vmem:[#allocation2 + $0xb8] sm:$0xff]
        %v1097 = vld [vmem:[#allocation2 + $0xc0] sm:$0xff]
        %v1098 = vld [vmem:[#allocation2 + $0xc8] sm:$0xff]
        %v1099 = vld [vmem:[#allocation2 + $0xd0] sm:$0xff]
        %v1100 = vld [vmem:[#allocation2 + $0xd8] sm:$0xff]
        %v1101 = vld [vmem:[#allocation2 + $0xe0] sm:$0xff]
        %v1102 = vld [vmem:[#allocation2 + $0xe8] sm:$0xff]
        %v1103 = vld [vmem:[#allocation2 + $0xf0] sm:$0xff]
        %v1104 = vld [vmem:[#allocation2 + $0xf8] sm:$0xff]
        %v1105 = vld [vmem:[#allocation2 + $0x100] sm:$0xff]
        %v1106 = vld [vmem:[#allocation2 + $0x108] sm:$0xff]
        %v1107 = vld [vmem:[#allocation2 + $0x110] sm:$0xff]
        %v1108 = vld [vmem:[#allocation2 + $0x118] sm:$0xff]
        %v1109 = vld [vmem:[#allocation2 + $0x120] sm:$0xff]
        %v1110 = vld [vmem:[#allocation2 + $0x128] sm:$0xff]
        %v1111 = vld [vmem:[#allocation2 + $0x130] sm:$0xff]
        %v1112 = vld [vmem:[#allocation2 + $0x138] sm:$0xff]
        %v1113 = vld [vmem:[#allocation2 + $0x140] sm:$0xff]
        %v1114 = vld [vmem:[#allocation2 + $0x148] sm:$0xff]
        %v1115 = vld [vmem:[#allocation2 + $0x150] sm:$0xff]
        %v1116 = vld [vmem:[#allocation2 + $0x158] sm:$0xff]
        %v1117 = vld [vmem:[#allocation2 + $0x160] sm:$0xff]
        %v1118 = vld [vmem:[#allocation2 + $0x168] sm:$0xff]
        %v1119 = vld [vmem:[#allocation2 + $0x170] sm:$0xff]
        %v1120 = vld [vmem:[#allocation2 + $0x178] sm:$0xff]
        %v1121 = vld [vmem:[#allocation2 + $0x180] sm:$0xff]
        %v1122 = vld [vmem:[#allocation2 + $0x188] sm:$0xff]
        %v1123 = vld [vmem:[#allocation2 + $0x190] sm:$0xff]
        %v1124 = vld [vmem:[#allocation2 + $0x198] sm:$0xff]
        %v1125 = vld [vmem:[#allocation2 + $0x1a0] sm:$0xff]
        %v1126 = vld [vmem:[#allocation2 + $0x1a8] sm:$0xff]
        %v1127 = vld [vmem:[#allocation2 + $0x1b0] sm:$0xff]
        %v1128 = vld [vmem:[#allocation2 + $0x1b8] sm:$0xff]
        %v1129 = vld [vmem:[#allocation2 + $0x1c0] sm:$0xff]
        %v1130 = vld [vmem:[#allocation2 + $0x1c8] sm:$0xff]
        %v1131 = vld [vmem:[#allocation2 + $0x1d0] sm:$0xff]
        %v1132 = vld [vmem:[#allocation2 + $0x1d8] sm:$0xff]
        %v1133 = vld [vmem:[#allocation2 + $0x1e0] sm:$0xff]
        %v1134 = vld [vmem:[#allocation2 + $0x1e8] sm:$0xff]
        %v1135 = vld [vmem:[#allocation2 + $0x1f0] sm:$0xff]
        %v1136 = vld [vmem:[#allocation2 + $0x1f8] sm:$0xff]
        %v1137 = vld [vmem:[#allocation2 + $0x200] sm:$0xff]
        %v1138 = vld [vmem:[#allocation2 + $0x208] sm:$0xff]
        %v1139 = vld [vmem:[#allocation2 + $0x210] sm:$0xff]
        %v1140 = vld [vmem:[#allocation2 + $0x218] sm:$0xff]
        %v1141 = vld [vmem:[#allocation2 + $0x220] sm:$0xff]
        %v1142 = vld [vmem:[#allocation2 + $0x228] sm:$0xff]
        %v1143 = vld [vmem:[#allocation2 + $0x230] sm:$0xff]
        %v1144 = vld [vmem:[#allocation2 + $0x238] sm:$0xff]
        %v1145 = vld [vmem:[#allocation2 + $0x240] sm:$0xff]
        %v1146 = vld [vmem:[#allocation2 + $0x248] sm:$0xff]
        %v1147 = vld [vmem:[#allocation2 + $0x250] sm:$0xff]
        %v1148 = vld [vmem:[#allocation2 + $0x258] sm:$0xff]
        %v1149 = vld [vmem:[#allocation2 + $0x260] sm:$0xff]
        %v1150 = vld [vmem:[#allocation2 + $0x268] sm:$0xff]
        %v1151 = vld [vmem:[#allocation2 + $0x270] sm:$0xff]
        %v1152 = vld [vmem:[#allocation2 + $0x278] sm:$0xff]
        %v1153 = vld [vmem:[#allocation2 + $0x280] sm:$0xff]
        %v1154 = vld [vmem:[%s3] sm:$0xff]
        %1156 = vset.pattern.permute.xlu0 0
        %1157 = vperm.xlu0 %1156, %v1154
        %v1158 = vpop.permute.xlu0 %1157
        %vm1160 = vcmask 719872
        %v1162 = vsel %vm1160, %v1072, 0
        %1164 = vmatpush.msra.mxu0 %v1118
        %1165 = vmatpush.msra.mxu0 %v1115
        %1166 = vmatpush.msra.mxu0 %v1112
        %1167 = vmatpush.msra.mxu0 %v1109
        %1168 = vmatpush.msra.mxu0 %v1106
        %1169 = vmatpush.msra.mxu0 %v1103
        %1170 = vmatpush.msra.mxu0 %v1100
        %1171 = vmatpush.msra.mxu0 %v1097
        %1172 = vmatpush.msra.mxu0 %v1094
        %1173 = vmatpush.msra.mxu0 %v1091
        %1174 = vmatpush.msra.mxu0 %v1088
        %1175 = vmatpush.msra.mxu0 %v1085
        %1176 = vmatpush.msra.mxu0 %v1082
        %1177 = vmatpush.msra.mxu0 %v1079
        %1178 = vmatpush.msra.mxu0 %v1076
        %1179 = vmatpush.msra.mxu0 %v1073
        %1180 = vmatmul.f32.gmra.mxu0 %v1071
        %v1181 = vpop.f32.mrf.mxu0
        %v1182 = vadd.f32 %v1158, %v1181
        %1183 = vdwg.mxu0
        %1184 = vmatpush.msra.mxu0 0.0
        %1185 = vmatpush.msra.mxu0 0.0
        %1186 = vmatpush.msra.mxu0 0.0
        %1187 = vmatpush.msra.mxu0 0.0
        %1188 = vmatpush.msra.mxu0 0.0
        %1189 = vmatpush.msra.mxu0 %v1151
        %1190 = vmatpush.msra.mxu0 %v1148
        %1191 = vmatpush.msra.mxu0 %v1145
        %1192 = vmatpush.msra.mxu0 %v1142
        %1193 = vmatpush.msra.mxu0 %v1139
        %1194 = vmatpush.msra.mxu0 %v1136
        %1195 = vmatpush.msra.mxu0 %v1133
        %1196 = vmatpush.msra.mxu0 %v1130
        %1197 = vmatpush.msra.mxu0 %v1127
        %1198 = vmatpush.msra.mxu0 %v1124
        %1199 = vmatpush.msra.mxu0 %v1121
        %1200 = vmatmul.f32.gmra.mxu0 %v1162
        %v1201 = vpop.f32.mrf.mxu0
        %v1202 = vadd.f32 %v1182, %v1201
        %1203 = vdwg.mxu0
        %1204 = vmatpush.msra.mxu0 %v1119
        %1205 = vmatpush.msra.mxu0 %v1116
        %1206 = vmatpush.msra.mxu0 %v1113
        %1207 = vmatpush.msra.mxu0 %v1110
        %1208 = vmatpush.msra.mxu0 %v1107
        %1209 = vmatpush.msra.mxu0 %v1104
        %1210 = vmatpush.msra.mxu0 %v1101
        %1211 = vmatpush.msra.mxu0 %v1098
        %1212 = vmatpush.msra.mxu0 %v1095
        %1213 = vmatpush.msra.mxu0 %v1092
        %1214 = vmatpush.msra.mxu0 %v1089
        %1215 = vmatpush.msra.mxu0 %v1086
        %1216 = vmatpush.msra.mxu0 %v1083
        %1217 = vmatpush.msra.mxu0 %v1080
        %1218 = vmatpush.msra.mxu0 %v1077
        %1219 = vmatpush.msra.mxu0 %v1074
        %1220 = vmatmul.f32.gmra.mxu0 %v1071
        %v1221 = vpop.f32.mrf.mxu0
        %v1222 = vadd.f32 %v1158, %v1221
        %1223 = vdwg.mxu0
        %1224 = vmatpush.msra.mxu0 0.0
        %1225 = vmatpush.msra.mxu0 0.0
        %1226 = vmatpush.msra.mxu0 0.0
        %1227 = vmatpush.msra.mxu0 0.0
        %1228 = vmatpush.msra.mxu0 0.0
        %1229 = vmatpush.msra.mxu0 %v1152
        %1230 = vmatpush.msra.mxu0 %v1149
        %1231 = vmatpush.msra.mxu0 %v1146
        %1232 = vmatpush.msra.mxu0 %v1143
        %1233 = vmatpush.msra.mxu0 %v1140
        %1234 = vmatpush.msra.mxu0 %v1137
        %1235 = vmatpush.msra.mxu0 %v1134
        %1236 = vmatpush.msra.mxu0 %v1131
        %1237 = vmatpush.msra.mxu0 %v1128
        %1238 = vmatpush.msra.mxu0 %v1125
        %1239 = vmatpush.msra.mxu0 %v1122
        %1240 = vmatmul.f32.gmra.mxu0 %v1162
        %v1241 = vpop.f32.mrf.mxu0
        %v1242 = vadd.f32 %v1222, %v1241
        %1243 = vdwg.mxu0
        %1244 = vmatpush.msra.mxu0 %v1120
        %1245 = vmatpush.msra.mxu0 %v1117
        %1246 = vmatpush.msra.mxu0 %v1114
        %1247 = vmatpush.msra.mxu0 %v1111
        %1248 = vmatpush.msra.mxu0 %v1108
        %1249 = vmatpush.msra.mxu0 %v1105
        %1250 = vmatpush.msra.mxu0 %v1102
        %1251 = vmatpush.msra.mxu0 %v1099
        %1252 = vmatpush.msra.mxu0 %v1096
        %1253 = vmatpush.msra.mxu0 %v1093
        %1254 = vmatpush.msra.mxu0 %v1090
        %1255 = vmatpush.msra.mxu0 %v1087
        %1256 = vmatpush.msra.mxu0 %v1084
        %1257 = vmatpush.msra.mxu0 %v1081
        %1258 = vmatpush.msra.mxu0 %v1078
        %1259 = vmatpush.msra.mxu0 %v1075
        %1260 = vmatmul.f32.gmra.mxu0 %v1071
        %v1261 = vpop.f32.mrf.mxu0
        %v1262 = vadd.f32 %v1158, %v1261
        %1263 = vdwg.mxu0
        %1264 = vmatpush.msra.mxu0 0.0
        %1265 = vmatpush.msra.mxu0 0.0
        %1266 = vmatpush.msra.mxu0 0.0
        %1267 = vmatpush.msra.mxu0 0.0
        %1268 = vmatpush.msra.mxu0 0.0
        %1269 = vmatpush.msra.mxu0 %v1153
        %1270 = vmatpush.msra.mxu0 %v1150
        %1271 = vmatpush.msra.mxu0 %v1147
        %1272 = vmatpush.msra.mxu0 %v1144
        %1273 = vmatpush.msra.mxu0 %v1141
        %1274 = vmatpush.msra.mxu0 %v1138
        %1275 = vmatpush.msra.mxu0 %v1135
        %1276 = vmatpush.msra.mxu0 %v1132
        %1277 = vmatpush.msra.mxu0 %v1129
        %1278 = vmatpush.msra.mxu0 %v1126
        %1279 = vmatpush.msra.mxu0 %v1123
        %1280 = vmatmul.f32.gmra.mxu0 %v1162
        %v1281 = vpop.f32.mrf.mxu0
        %v1282 = vadd.f32 %v1262, %v1281
        %1283 = vdwg.mxu0
        %v1284 = vmax.f32 %v1202, 0.0
        %v1285 = vmax.f32 %v1242, 0.0
        %v1286 = vmax.f32 %v1282, 0.0
        %v1287 = vld [vmem:[%s1] sm:$0x7]
        %v1289 = vperm.slane %v1287, 0
        %v1290 = vperm.slane %v1287, 1
        %v1291 = vperm.slane %v1287, 2
        %v1295 = vmul.f32 %v1284, %v1289
        %v1296 = vmul.f32 %v1285, %v1290
        %v1297 = vmul.f32 %v1286, %v1291
        %1298 = vst [vmem:[#allocation4] sm:$0xff] 0.0
        %1299 = vst [vmem:[#allocation4 + $0x8] sm:$0xff] %v1295
        %1300 = vst [vmem:[#allocation4 + $0x10] sm:$0xff] %v1296
        %1301 = vst.msk [vmem:[#allocation4 + $0x18] sm:$0xff] %vm418, %v1297
        %vm1302 = vcmask 1048528
        %1303 = vst.msk [vmem:[#allocation4 + $0x18] sm:$0xff] %vm1302, 0.0
        %vm1304 = vcmask 859136
        %1305 = vst.msk [vmem:[#allocation4 + $0x20] sm:$0xff] %vm1304, 0.0
        %v1306 = vld [vmem:[#allocation4] sm:$0xff]
        %v1307 = vld [vmem:[#allocation4 + $0x8] sm:$0xff]
        %v1308 = vld [vmem:[#allocation4 + $0x10] sm:$0xff]
        %v1309 = vld [vmem:[#allocation4 + $0x18] sm:$0xff]
        %1314 = vrot.lane.b32.xlu0 %v1306, 111
        %v1315 = vpop.permute.xlu0 %1314
        %1316 = vrot.lane.b32.xlu0 %v1307, 111
        %v1317 = vpop.permute.xlu0 %1316
        %1318 = vrot.lane.b32.xlu0 %v1308, 111
        %v1319 = vpop.permute.xlu0 %1318
        %1320 = vrot.lane.b32.xlu0 %v1309, 111
        %v1321 = vpop.permute.xlu0 %1320
        %v1322 = vsel %vm409, %v1315, %v1317
        %v1323 = vsel %vm409, %v1317, %v1319
        %v1324 = vsel %vm409, %v1319, %v1321
        %1328 = vst [vmem:[#allocation3] sm:$0xff] %v1322
        %1329 = vst [vmem:[#allocation3 + $0x8] sm:$0xff] %v1323
        %1330 = vst.msk [vmem:[#allocation3 + $0x10] sm:$0xff] %vm418, %v1324
        %v1331 = vld [vmem:[#allocation4] sm:$0xff]
        %v1332 = vld [vmem:[#allocation4 + $0x8] sm:$0xff]
        %v1333 = vld [vmem:[#allocation4 + $0x10] sm:$0xff]
        %v1334 = vld [vmem:[#allocation4 + $0x18] sm:$0xff]
        %1339 = vrot.lane.b32.xlu0 %v1331, 110
        %v1340 = vpop.permute.xlu0 %1339
        %1341 = vrot.lane.b32.xlu0 %v1332, 110
        %v1342 = vpop.permute.xlu0 %1341
        %1343 = vrot.lane.b32.xlu0 %v1333, 110
        %v1344 = vpop.permute.xlu0 %1343
        %1345 = vrot.lane.b32.xlu0 %v1334, 110
        %v1346 = vpop.permute.xlu0 %1345
        %v1347 = vsel %vm436, %v1340, %v1342
        %v1348 = vsel %vm436, %v1342, %v1344
        %v1349 = vsel %vm436, %v1344, %v1346
        %1353 = vst [vmem:[#allocation3 + $0x18] sm:$0xff] %v1347
        %1354 = vst [vmem:[#allocation3 + $0x20] sm:$0xff] %v1348
        %1355 = vst.msk [vmem:[#allocation3 + $0x28] sm:$0xff] %vm418, %v1349
        %v1356 = vld [vmem:[#allocation4] sm:$0xff]
        %v1357 = vld [vmem:[#allocation4 + $0x8] sm:$0xff]
        %v1358 = vld [vmem:[#allocation4 + $0x10] sm:$0xff]
        %v1359 = vld [vmem:[#allocation4 + $0x18] sm:$0xff]
        %1364 = vrot.lane.b32.xlu0 %v1356, 109
        %v1365 = vpop.permute.xlu0 %1364
        %1366 = vrot.lane.b32.xlu0 %v1357, 109
        %v1367 = vpop.permute.xlu0 %1366
        %1368 = vrot.lane.b32.xlu0 %v1358, 109
        %v1369 = vpop.permute.xlu0 %1368
        %1370 = vrot.lane.b32.xlu0 %v1359, 109
        %v1371 = vpop.permute.xlu0 %1370
        %v1372 = vsel %vm462, %v1365, %v1367
        %v1373 = vsel %vm462, %v1367, %v1369
        %v1374 = vsel %vm462, %v1369, %v1371
        %1378 = vst [vmem:[#allocation3 + $0x30] sm:$0xff] %v1372
        %1379 = vst [vmem:[#allocation3 + $0x38] sm:$0xff] %v1373
        %1380 = vst.msk [vmem:[#allocation3 + $0x40] sm:$0xff] %vm418, %v1374
        %v1381 = vld [vmem:[#allocation4] sm:$0xff]
        %v1382 = vld [vmem:[#allocation4 + $0x8] sm:$0xff]
        %v1383 = vld [vmem:[#allocation4 + $0x10] sm:$0xff]
        %v1384 = vld [vmem:[#allocation4 + $0x18] sm:$0xff]
        %1389 = vrot.lane.b32.xlu0 %v1381, 101
        %v1390 = vpop.permute.xlu0 %1389
        %1391 = vrot.lane.b32.xlu0 %v1382, 101
        %v1392 = vpop.permute.xlu0 %1391
        %1393 = vrot.lane.b32.xlu0 %v1383, 101
        %v1394 = vpop.permute.xlu0 %1393
        %1395 = vrot.lane.b32.xlu0 %v1384, 101
        %v1396 = vpop.permute.xlu0 %1395
        %v1397 = vsel %vm488, %v1390, %v1392
        %v1398 = vsel %vm488, %v1392, %v1394
        %v1399 = vsel %vm488, %v1394, %v1396
        %1403 = vst [vmem:[#allocation3 + $0x48] sm:$0xff] %v1397
        %1404 = vst [vmem:[#allocation3 + $0x50] sm:$0xff] %v1398
        %1405 = vst.msk [vmem:[#allocation3 + $0x58] sm:$0xff] %vm418, %v1399
        %v1406 = vld [vmem:[#allocation4] sm:$0xff]
        %v1407 = vld [vmem:[#allocation4 + $0x8] sm:$0xff]
        %v1408 = vld [vmem:[#allocation4 + $0x10] sm:$0xff]
        %v1409 = vld [vmem:[#allocation4 + $0x18] sm:$0xff]
        %1414 = vrot.lane.b32.xlu0 %v1406, 100
        %v1415 = vpop.permute.xlu0 %1414
        %1416 = vrot.lane.b32.xlu0 %v1407, 100
        %v1417 = vpop.permute.xlu0 %1416
        %1418 = vrot.lane.b32.xlu0 %v1408, 100
        %v1419 = vpop.permute.xlu0 %1418
        %1420 = vrot.lane.b32.xlu0 %v1409, 100
        %v1421 = vpop.permute.xlu0 %1420
        %v1422 = vsel %vm514, %v1415, %v1417
        %v1423 = vsel %vm514, %v1417, %v1419
        %v1424 = vsel %vm514, %v1419, %v1421
        %1428 = vst [vmem:[#allocation3 + $0x60] sm:$0xff] %v1422
        %1429 = vst [vmem:[#allocation3 + $0x68] sm:$0xff] %v1423
        %1430 = vst.msk [vmem:[#allocation3 + $0x70] sm:$0xff] %vm418, %v1424
        %v1431 = vld [vmem:[#allocation4] sm:$0xff]
        %v1432 = vld [vmem:[#allocation4 + $0x8] sm:$0xff]
        %v1433 = vld [vmem:[#allocation4 + $0x10] sm:$0xff]
        %v1434 = vld [vmem:[#allocation4 + $0x18] sm:$0xff]
        %1439 = vrot.lane.b32.xlu0 %v1431, 99
        %v1440 = vpop.permute.xlu0 %1439
        %1441 = vrot.lane.b32.xlu0 %v1432, 99
        %v1442 = vpop.permute.xlu0 %1441
        %1443 = vrot.lane.b32.xlu0 %v1433, 99
        %v1444 = vpop.permute.xlu0 %1443
        %1445 = vrot.lane.b32.xlu0 %v1434, 99
        %v1446 = vpop.permute.xlu0 %1445
        %v1447 = vsel %vm540, %v1440, %v1442
        %v1448 = vsel %vm540, %v1442, %v1444
        %v1449 = vsel %vm540, %v1444, %v1446
        %1453 = vst [vmem:[#allocation3 + $0x78] sm:$0xff] %v1447
        %1454 = vst [vmem:[#allocation3 + $0x80] sm:$0xff] %v1448
        %1455 = vst.msk [vmem:[#allocation3 + $0x88] sm:$0xff] %vm418, %v1449
        %v1456 = vld [vmem:[#allocation4] sm:$0xff]
        %v1457 = vld [vmem:[#allocation4 + $0x8] sm:$0xff]
        %v1458 = vld [vmem:[#allocation4 + $0x10] sm:$0xff]
        %v1459 = vld [vmem:[#allocation4 + $0x18] sm:$0xff]
        %1464 = vrot.lane.b32.xlu0 %v1456, 91
        %v1465 = vpop.permute.xlu0 %1464
        %1466 = vrot.lane.b32.xlu0 %v1457, 91
        %v1467 = vpop.permute.xlu0 %1466
        %1468 = vrot.lane.b32.xlu0 %v1458, 91
        %v1469 = vpop.permute.xlu0 %1468
        %1470 = vrot.lane.b32.xlu0 %v1459, 91
        %v1471 = vpop.permute.xlu0 %1470
        %v1472 = vsel %vm566, %v1465, %v1467
        %v1473 = vsel %vm566, %v1467, %v1469
        %v1474 = vsel %vm566, %v1469, %v1471
        %1478 = vst [vmem:[#allocation3 + $0x90] sm:$0xff] %v1472
        %1479 = vst [vmem:[#allocation3 + $0x98] sm:$0xff] %v1473
        %1480 = vst.msk [vmem:[#allocation3 + $0xa0] sm:$0xff] %vm418, %v1474
        %v1481 = vld [vmem:[#allocation4] sm:$0xff]
        %v1482 = vld [vmem:[#allocation4 + $0x8] sm:$0xff]
        %v1483 = vld [vmem:[#allocation4 + $0x10] sm:$0xff]
        %v1484 = vld [vmem:[#allocation4 + $0x18] sm:$0xff]
        %1489 = vrot.lane.b32.xlu0 %v1481, 90
        %v1490 = vpop.permute.xlu0 %1489
        %1491 = vrot.lane.b32.xlu0 %v1482, 90
        %v1492 = vpop.permute.xlu0 %1491
        %1493 = vrot.lane.b32.xlu0 %v1483, 90
        %v1494 = vpop.permute.xlu0 %1493
        %1495 = vrot.lane.b32.xlu0 %v1484, 90
        %v1496 = vpop.permute.xlu0 %1495
        %v1497 = vsel %vm592, %v1490, %v1492
        %v1498 = vsel %vm592, %v1492, %v1494
        %v1499 = vsel %vm592, %v1494, %v1496
        %1503 = vst [vmem:[#allocation3 + $0xa8] sm:$0xff] %v1497
        %1504 = vst [vmem:[#allocation3 + $0xb0] sm:$0xff] %v1498
        %1505 = vst.msk [vmem:[#allocation3 + $0xb8] sm:$0xff] %vm418, %v1499
        %v1506 = vld [vmem:[#allocation4] sm:$0xff]
        %v1507 = vld [vmem:[#allocation4 + $0x8] sm:$0xff]
        %v1508 = vld [vmem:[#allocation4 + $0x10] sm:$0xff]
        %v1509 = vld [vmem:[#allocation4 + $0x18] sm:$0xff]
        %1514 = vrot.lane.b32.xlu0 %v1506, 89
        %v1515 = vpop.permute.xlu0 %1514
        %1516 = vrot.lane.b32.xlu0 %v1507, 89
        %v1517 = vpop.permute.xlu0 %1516
        %1518 = vrot.lane.b32.xlu0 %v1508, 89
        %v1519 = vpop.permute.xlu0 %1518
        %1520 = vrot.lane.b32.xlu0 %v1509, 89
        %v1521 = vpop.permute.xlu0 %1520
        %v1522 = vsel %vm618, %v1515, %v1517
        %v1523 = vsel %vm618, %v1517, %v1519
        %v1524 = vsel %vm618, %v1519, %v1521
        %1528 = vst [vmem:[#allocation3 + $0xc0] sm:$0xff] %v1522
        %1529 = vst [vmem:[#allocation3 + $0xc8] sm:$0xff] %v1523
        %1530 = vst.msk [vmem:[#allocation3 + $0xd0] sm:$0xff] %vm418, %v1524
        %v1531 = vld [vmem:[#allocation4] sm:$0xff]
        %v1532 = vld [vmem:[#allocation4 + $0x8] sm:$0xff]
        %v1533 = vld [vmem:[#allocation4 + $0x10] sm:$0xff]
        %v1534 = vld [vmem:[#allocation4 + $0x18] sm:$0xff]
        %1539 = vrot.lane.b32.xlu0 %v1531, 11
        %v1540 = vpop.permute.xlu0 %1539
        %1541 = vrot.lane.b32.xlu0 %v1532, 11
        %v1542 = vpop.permute.xlu0 %1541
        %1543 = vrot.lane.b32.xlu0 %v1533, 11
        %v1544 = vpop.permute.xlu0 %1543
        %1545 = vrot.lane.b32.xlu0 %v1534, 11
        %v1546 = vpop.permute.xlu0 %1545
        %v1547 = vsel %vm644, %v1540, %v1542
        %v1548 = vsel %vm644, %v1542, %v1544
        %v1549 = vsel %vm644, %v1544, %v1546
        %1553 = vst [vmem:[#allocation3 + $0xd8] sm:$0xff] %v1547
        %1554 = vst [vmem:[#allocation3 + $0xe0] sm:$0xff] %v1548
        %1555 = vst.msk [vmem:[#allocation3 + $0xe8] sm:$0xff] %vm418, %v1549
        %v1556 = vld [vmem:[#allocation4] sm:$0xff]
        %v1557 = vld [vmem:[#allocation4 + $0x8] sm:$0xff]
        %v1558 = vld [vmem:[#allocation4 + $0x10] sm:$0xff]
        %v1559 = vld [vmem:[#allocation4 + $0x18] sm:$0xff]
        %1564 = vrot.lane.b32.xlu0 %v1556, 10
        %v1565 = vpop.permute.xlu0 %1564
        %1566 = vrot.lane.b32.xlu0 %v1557, 10
        %v1567 = vpop.permute.xlu0 %1566
        %1568 = vrot.lane.b32.xlu0 %v1558, 10
        %v1569 = vpop.permute.xlu0 %1568
        %1570 = vrot.lane.b32.xlu0 %v1559, 10
        %v1571 = vpop.permute.xlu0 %1570
        %v1572 = vsel %vm670, %v1565, %v1567
        %v1573 = vsel %vm670, %v1567, %v1569
        %v1574 = vsel %vm670, %v1569, %v1571
        %1578 = vst [vmem:[#allocation3 + $0xf0] sm:$0xff] %v1572
        %1579 = vst [vmem:[#allocation3 + $0xf8] sm:$0xff] %v1573
        %1580 = vst.msk [vmem:[#allocation3 + $0x100] sm:$0xff] %vm418, %v1574
        %v1581 = vld [vmem:[#allocation4] sm:$0xff]
        %v1582 = vld [vmem:[#allocation4 + $0x8] sm:$0xff]
        %v1583 = vld [vmem:[#allocation4 + $0x10] sm:$0xff]
        %v1584 = vld [vmem:[#allocation4 + $0x18] sm:$0xff]
        %1589 = vrot.lane.b32.xlu0 %v1581, 9
        %v1590 = vpop.permute.xlu0 %1589
        %1591 = vrot.lane.b32.xlu0 %v1582, 9
        %v1592 = vpop.permute.xlu0 %1591
        %1593 = vrot.lane.b32.xlu0 %v1583, 9
        %v1594 = vpop.permute.xlu0 %1593
        %1595 = vrot.lane.b32.xlu0 %v1584, 9
        %v1596 = vpop.permute.xlu0 %1595
        %v1597 = vsel %vm696, %v1590, %v1592
        %v1598 = vsel %vm696, %v1592, %v1594
        %v1599 = vsel %vm696, %v1594, %v1596
        %1603 = vst [vmem:[#allocation3 + $0x108] sm:$0xff] %v1597
        %1604 = vst [vmem:[#allocation3 + $0x110] sm:$0xff] %v1598
        %1605 = vst.msk [vmem:[#allocation3 + $0x118] sm:$0xff] %vm418, %v1599
        %v1606 = vld [vmem:[#allocation4] sm:$0xff]
        %v1607 = vld [vmem:[#allocation4 + $0x8] sm:$0xff]
        %v1608 = vld [vmem:[#allocation4 + $0x10] sm:$0xff]
        %v1609 = vld [vmem:[#allocation4 + $0x18] sm:$0xff]
        %1614 = vrot.lane.b32.xlu0 %v1606, 1
        %v1615 = vpop.permute.xlu0 %1614
        %1616 = vrot.lane.b32.xlu0 %v1607, 1
        %v1617 = vpop.permute.xlu0 %1616
        %1618 = vrot.lane.b32.xlu0 %v1608, 1
        %v1619 = vpop.permute.xlu0 %1618
        %1620 = vrot.lane.b32.xlu0 %v1609, 1
        %v1621 = vpop.permute.xlu0 %1620
        %v1622 = vsel %vm722, %v1615, %v1617
        %v1623 = vsel %vm722, %v1617, %v1619
        %v1624 = vsel %vm722, %v1619, %v1621
        %1628 = vst [vmem:[#allocation3 + $0x120] sm:$0xff] %v1622
        %1629 = vst [vmem:[#allocation3 + $0x128] sm:$0xff] %v1623
        %1630 = vst.msk [vmem:[#allocation3 + $0x130] sm:$0xff] %vm418, %v1624
        %v1631 = vld [vmem:[#allocation4 + $0x8] sm:$0xff]
        %v1632 = vld [vmem:[#allocation4 + $0x10] sm:$0xff]
        %v1633 = vld [vmem:[#allocation4 + $0x18] sm:$0xff]
        %1634 = vst [vmem:[#allocation3 + $0x138] sm:$0xff] %v1631
        %1635 = vst [vmem:[#allocation3 + $0x140] sm:$0xff] %v1632
        %1636 = vst.msk [vmem:[#allocation3 + $0x148] sm:$0xff] %vm418, %v1633
        %v1637 = vld [vmem:[#allocation4 + $0x8] sm:$0xff]
        %v1638 = vld [vmem:[#allocation4 + $0x10] sm:$0xff]
        %v1639 = vld [vmem:[#allocation4 + $0x18] sm:$0xff]
        %1643 = vrot.lane.b32.xlu0 %v1637, 127
        %v1644 = vpop.permute.xlu0 %1643
        %1645 = vrot.lane.b32.xlu0 %v1638, 127
        %v1646 = vpop.permute.xlu0 %1645
        %1647 = vrot.lane.b32.xlu0 %v1639, 127
        %v1648 = vpop.permute.xlu0 %1647
        %v1649 = vsel %vm750, %v1644, %v1646
        %v1650 = vsel %vm750, %v1646, %v1648
        %1654 = vst [vmem:[#allocation3 + $0x150] sm:$0xff] %v1649
        %1655 = vst [vmem:[#allocation3 + $0x158] sm:$0xff] %v1650
        %1656 = vst.msk [vmem:[#allocation3 + $0x160] sm:$0xff] %vm418, %v1648
        %v1657 = vld [vmem:[#allocation4 + $0x8] sm:$0xff]
        %v1658 = vld [vmem:[#allocation4 + $0x10] sm:$0xff]
        %v1659 = vld [vmem:[#allocation4 + $0x18] sm:$0xff]
        %v1660 = vld [vmem:[#allocation4 + $0x20] sm:$0xff]
        %1665 = vrot.lane.b32.xlu0 %v1657, 119
        %v1666 = vpop.permute.xlu0 %1665
        %1667 = vrot.lane.b32.xlu0 %v1658, 119
        %v1668 = vpop.permute.xlu0 %1667
        %1669 = vrot.lane.b32.xlu0 %v1659, 119
        %v1670 = vpop.permute.xlu0 %1669
        %1671 = vrot.lane.b32.xlu0 %v1660, 119
        %v1672 = vpop.permute.xlu0 %1671
        %v1673 = vsel %vm775, %v1666, %v1668
        %v1674 = vsel %vm775, %v1668, %v1670
        %v1675 = vsel %vm775, %v1670, %v1672
        %1679 = vst [vmem:[#allocation3 + $0x168] sm:$0xff] %v1673
        %1680 = vst [vmem:[#allocation3 + $0x170] sm:$0xff] %v1674
        %1681 = vst.msk [vmem:[#allocation3 + $0x178] sm:$0xff] %vm418, %v1675
        %v1682 = vld [vmem:[#allocation4 + $0x8] sm:$0xff]
        %v1683 = vld [vmem:[#allocation4 + $0x10] sm:$0xff]
        %v1684 = vld [vmem:[#allocation4 + $0x18] sm:$0xff]
        %v1685 = vld [vmem:[#allocation4 + $0x20] sm:$0xff]
        %1690 = vrot.lane.b32.xlu0 %v1682, 118
        %v1691 = vpop.permute.xlu0 %1690
        %1692 = vrot.lane.b32.xlu0 %v1683, 118
        %v1693 = vpop.permute.xlu0 %1692
        %1694 = vrot.lane.b32.xlu0 %v1684, 118
        %v1695 = vpop.permute.xlu0 %1694
        %1696 = vrot.lane.b32.xlu0 %v1685, 118
        %v1697 = vpop.permute.xlu0 %1696
        %v1698 = vsel %vm801, %v1691, %v1693
        %v1699 = vsel %vm801, %v1693, %v1695
        %v1700 = vsel %vm801, %v1695, %v1697
        %1704 = vst [vmem:[#allocation3 + $0x180] sm:$0xff] %v1698
        %1705 = vst [vmem:[#allocation3 + $0x188] sm:$0xff] %v1699
        %1706 = vst.msk [vmem:[#allocation3 + $0x190] sm:$0xff] %vm418, %v1700
        %v1707 = vld [vmem:[#allocation4 + $0x8] sm:$0xff]
        %v1708 = vld [vmem:[#allocation4 + $0x10] sm:$0xff]
        %v1709 = vld [vmem:[#allocation4 + $0x18] sm:$0xff]
        %v1710 = vld [vmem:[#allocation4 + $0x20] sm:$0xff]
        %1715 = vrot.lane.b32.xlu0 %v1707, 117
        %v1716 = vpop.permute.xlu0 %1715
        %1717 = vrot.lane.b32.xlu0 %v1708, 117
        %v1718 = vpop.permute.xlu0 %1717
        %1719 = vrot.lane.b32.xlu0 %v1709, 117
        %v1720 = vpop.permute.xlu0 %1719
        %1721 = vrot.lane.b32.xlu0 %v1710, 117
        %v1722 = vpop.permute.xlu0 %1721
        %v1723 = vsel %vm827, %v1716, %v1718
        %v1724 = vsel %vm827, %v1718, %v1720
        %v1725 = vsel %vm827, %v1720, %v1722
        %1729 = vst [vmem:[#allocation3 + $0x198] sm:$0xff] %v1723
        %1730 = vst [vmem:[#allocation3 + $0x1a0] sm:$0xff] %v1724
        %1731 = vst.msk [vmem:[#allocation3 + $0x1a8] sm:$0xff] %vm418, %v1725
        %v1732 = vld [vmem:[#allocation4 + $0x8] sm:$0xff]
        %v1733 = vld [vmem:[#allocation4 + $0x10] sm:$0xff]
        %v1734 = vld [vmem:[#allocation4 + $0x18] sm:$0xff]
        %v1735 = vld [vmem:[#allocation4 + $0x20] sm:$0xff]
        %1740 = vrot.lane.b32.xlu0 %v1732, 39
        %v1741 = vpop.permute.xlu0 %1740
        %1742 = vrot.lane.b32.xlu0 %v1733, 39
        %v1743 = vpop.permute.xlu0 %1742
        %1744 = vrot.lane.b32.xlu0 %v1734, 39
        %v1745 = vpop.permute.xlu0 %1744
        %1746 = vrot.lane.b32.xlu0 %v1735, 39
        %v1747 = vpop.permute.xlu0 %1746
        %v1748 = vsel %vm853, %v1741, %v1743
        %v1749 = vsel %vm853, %v1743, %v1745
        %v1750 = vsel %vm853, %v1745, %v1747
        %1754 = vst [vmem:[#allocation3 + $0x1b0] sm:$0xff] %v1748
        %1755 = vst [vmem:[#allocation3 + $0x1b8] sm:$0xff] %v1749
        %1756 = vst.msk [vmem:[#allocation3 + $0x1c0] sm:$0xff] %vm418, %v1750
        %v1757 = vld [vmem:[#allocation4 + $0x8] sm:$0xff]
        %v1758 = vld [vmem:[#allocation4 + $0x10] sm:$0xff]
        %v1759 = vld [vmem:[#allocation4 + $0x18] sm:$0xff]
        %v1760 = vld [vmem:[#allocation4 + $0x20] sm:$0xff]
        %1765 = vrot.lane.b32.xlu0 %v1757, 38
        %v1766 = vpop.permute.xlu0 %1765
        %1767 = vrot.lane.b32.xlu0 %v1758, 38
        %v1768 = vpop.permute.xlu0 %1767
        %1769 = vrot.lane.b32.xlu0 %v1759, 38
        %v1770 = vpop.permute.xlu0 %1769
        %1771 = vrot.lane.b32.xlu0 %v1760, 38
        %v1772 = vpop.permute.xlu0 %1771
        %v1773 = vsel %vm879, %v1766, %v1768
        %v1774 = vsel %vm879, %v1768, %v1770
        %v1775 = vsel %vm879, %v1770, %v1772
        %1779 = vst [vmem:[#allocation3 + $0x1c8] sm:$0xff] %v1773
        %1780 = vst [vmem:[#allocation3 + $0x1d0] sm:$0xff] %v1774
        %1781 = vst.msk [vmem:[#allocation3 + $0x1d8] sm:$0xff] %vm418, %v1775
        %v1782 = vld [vmem:[#allocation4 + $0x8] sm:$0xff]
        %v1783 = vld [vmem:[#allocation4 + $0x10] sm:$0xff]
        %v1784 = vld [vmem:[#allocation4 + $0x18] sm:$0xff]
        %v1785 = vld [vmem:[#allocation4 + $0x20] sm:$0xff]
        %1790 = vrot.lane.b32.xlu0 %v1782, 37
        %v1791 = vpop.permute.xlu0 %1790
        %1792 = vrot.lane.b32.xlu0 %v1783, 37
        %v1793 = vpop.permute.xlu0 %1792
        %1794 = vrot.lane.b32.xlu0 %v1784, 37
        %v1795 = vpop.permute.xlu0 %1794
        %1796 = vrot.lane.b32.xlu0 %v1785, 37
        %v1797 = vpop.permute.xlu0 %1796
        %v1798 = vsel %vm905, %v1791, %v1793
        %v1799 = vsel %vm905, %v1793, %v1795
        %v1800 = vsel %vm905, %v1795, %v1797
        %1804 = vst [vmem:[#allocation3 + $0x1e0] sm:$0xff] %v1798
        %1805 = vst [vmem:[#allocation3 + $0x1e8] sm:$0xff] %v1799
        %1806 = vst.msk [vmem:[#allocation3 + $0x1f0] sm:$0xff] %vm418, %v1800
        %v1807 = vld [vmem:[#allocation4 + $0x8] sm:$0xff]
        %v1808 = vld [vmem:[#allocation4 + $0x10] sm:$0xff]
        %v1809 = vld [vmem:[#allocation4 + $0x18] sm:$0xff]
        %v1810 = vld [vmem:[#allocation4 + $0x20] sm:$0xff]
        %1815 = vrot.lane.b32.xlu0 %v1807, 29
        %v1816 = vpop.permute.xlu0 %1815
        %1817 = vrot.lane.b32.xlu0 %v1808, 29
        %v1818 = vpop.permute.xlu0 %1817
        %1819 = vrot.lane.b32.xlu0 %v1809, 29
        %v1820 = vpop.permute.xlu0 %1819
        %1821 = vrot.lane.b32.xlu0 %v1810, 29
        %v1822 = vpop.permute.xlu0 %1821
        %v1823 = vsel %vm931, %v1816, %v1818
        %v1824 = vsel %vm931, %v1818, %v1820
        %v1825 = vsel %vm931, %v1820, %v1822
        %1829 = vst [vmem:[#allocation3 + $0x1f8] sm:$0xff] %v1823
        %1830 = vst [vmem:[#allocation3 + $0x200] sm:$0xff] %v1824
        %1831 = vst.msk [vmem:[#allocation3 + $0x208] sm:$0xff] %vm418, %v1825
        %v1832 = vld [vmem:[#allocation4 + $0x8] sm:$0xff]
        %v1833 = vld [vmem:[#allocation4 + $0x10] sm:$0xff]
        %v1834 = vld [vmem:[#allocation4 + $0x18] sm:$0xff]
        %v1835 = vld [vmem:[#allocation4 + $0x20] sm:$0xff]
        %1840 = vrot.lane.b32.xlu0 %v1832, 28
        %v1841 = vpop.permute.xlu0 %1840
        %1842 = vrot.lane.b32.xlu0 %v1833, 28
        %v1843 = vpop.permute.xlu0 %1842
        %1844 = vrot.lane.b32.xlu0 %v1834, 28
        %v1845 = vpop.permute.xlu0 %1844
        %1846 = vrot.lane.b32.xlu0 %v1835, 28
        %v1847 = vpop.permute.xlu0 %1846
        %v1848 = vsel %vm957, %v1841, %v1843
        %v1849 = vsel %vm957, %v1843, %v1845
        %v1850 = vsel %vm957, %v1845, %v1847
        %1854 = vst [vmem:[#allocation3 + $0x210] sm:$0xff] %v1848
        %1855 = vst [vmem:[#allocation3 + $0x218] sm:$0xff] %v1849
        %1856 = vst.msk [vmem:[#allocation3 + $0x220] sm:$0xff] %vm418, %v1850
        %v1857 = vld [vmem:[#allocation4 + $0x8] sm:$0xff]
        %v1858 = vld [vmem:[#allocation4 + $0x10] sm:$0xff]
        %v1859 = vld [vmem:[#allocation4 + $0x18] sm:$0xff]
        %v1860 = vld [vmem:[#allocation4 + $0x20] sm:$0xff]
        %1865 = vrot.lane.b32.xlu0 %v1857, 27
        %v1866 = vpop.permute.xlu0 %1865
        %1867 = vrot.lane.b32.xlu0 %v1858, 27
        %v1868 = vpop.permute.xlu0 %1867
        %1869 = vrot.lane.b32.xlu0 %v1859, 27
        %v1870 = vpop.permute.xlu0 %1869
        %1871 = vrot.lane.b32.xlu0 %v1860, 27
        %v1872 = vpop.permute.xlu0 %1871
        %v1873 = vsel %vm983, %v1866, %v1868
        %v1874 = vsel %vm983, %v1868, %v1870
        %v1875 = vsel %vm983, %v1870, %v1872
        %1879 = vst [vmem:[#allocation3 + $0x228] sm:$0xff] %v1873
        %1880 = vst [vmem:[#allocation3 + $0x230] sm:$0xff] %v1874
        %1881 = vst.msk [vmem:[#allocation3 + $0x238] sm:$0xff] %vm418, %v1875
        %v1882 = vld [vmem:[#allocation4 + $0x8] sm:$0xff]
        %v1883 = vld [vmem:[#allocation4 + $0x10] sm:$0xff]
        %v1884 = vld [vmem:[#allocation4 + $0x18] sm:$0xff]
        %v1885 = vld [vmem:[#allocation4 + $0x20] sm:$0xff]
        %1890 = vrot.lane.b32.xlu0 %v1882, 19
        %v1891 = vpop.permute.xlu0 %1890
        %1892 = vrot.lane.b32.xlu0 %v1883, 19
        %v1893 = vpop.permute.xlu0 %1892
        %1894 = vrot.lane.b32.xlu0 %v1884, 19
        %v1895 = vpop.permute.xlu0 %1894
        %1896 = vrot.lane.b32.xlu0 %v1885, 19
        %v1897 = vpop.permute.xlu0 %1896
        %v1898 = vsel %vm1009, %v1891, %v1893
        %v1899 = vsel %vm1009, %v1893, %v1895
        %v1900 = vsel %vm1009, %v1895, %v1897
        %1904 = vst [vmem:[#allocation3 + $0x240] sm:$0xff] %v1898
        %1905 = vst [vmem:[#allocation3 + $0x248] sm:$0xff] %v1899
        %1906 = vst.msk [vmem:[#allocation3 + $0x250] sm:$0xff] %vm418, %v1900
        %v1907 = vld [vmem:[#allocation4 + $0x8] sm:$0xff]
        %v1908 = vld [vmem:[#allocation4 + $0x10] sm:$0xff]
        %v1909 = vld [vmem:[#allocation4 + $0x18] sm:$0xff]
        %v1910 = vld [vmem:[#allocation4 + $0x20] sm:$0xff]
        %1915 = vrot.lane.b32.xlu0 %v1907, 18
        %v1916 = vpop.permute.xlu0 %1915
        %1917 = vrot.lane.b32.xlu0 %v1908, 18
        %v1918 = vpop.permute.xlu0 %1917
        %1919 = vrot.lane.b32.xlu0 %v1909, 18
        %v1920 = vpop.permute.xlu0 %1919
        %1921 = vrot.lane.b32.xlu0 %v1910, 18
        %v1922 = vpop.permute.xlu0 %1921
        %v1923 = vsel %vm1035, %v1916, %v1918
        %v1924 = vsel %vm1035, %v1918, %v1920
        %v1925 = vsel %vm1035, %v1920, %v1922
        %1929 = vst [vmem:[#allocation3 + $0x258] sm:$0xff] %v1923
        %1930 = vst [vmem:[#allocation3 + $0x260] sm:$0xff] %v1924
        %1931 = vst.msk [vmem:[#allocation3 + $0x268] sm:$0xff] %vm418, %v1925
        %v1932 = vld [vmem:[#allocation4 + $0x8] sm:$0xff]
        %v1933 = vld [vmem:[#allocation4 + $0x10] sm:$0xff]
        %v1934 = vld [vmem:[#allocation4 + $0x18] sm:$0xff]
        %v1935 = vld [vmem:[#allocation4 + $0x20] sm:$0xff]
        %1940 = vrot.lane.b32.xlu0 %v1932, 17
        %v1941 = vpop.permute.xlu0 %1940
        %1942 = vrot.lane.b32.xlu0 %v1933, 17
        %v1943 = vpop.permute.xlu0 %1942
        %1944 = vrot.lane.b32.xlu0 %v1934, 17
        %v1945 = vpop.permute.xlu0 %1944
        %1946 = vrot.lane.b32.xlu0 %v1935, 17
        %v1947 = vpop.permute.xlu0 %1946
        %v1948 = vsel %vm1061, %v1941, %v1943
        %v1949 = vsel %vm1061, %v1943, %v1945
        %v1950 = vsel %vm1061, %v1945, %v1947
        %1954 = vst [vmem:[#allocation3 + $0x270] sm:$0xff] %v1948
        %1955 = vst [vmem:[#allocation3 + $0x278] sm:$0xff] %v1949
        %1956 = vst.msk [vmem:[#allocation3 + $0x280] sm:$0xff] %vm418, %v1950
        %v1957 = vld [vmem:[#allocation8] sm:$0xff]
        %v1958 = vld [vmem:[#allocation8 + $0x8] sm:$0xff]
        %v1959 = vld [vmem:[#allocation3] sm:$0xff]
        %v1960 = vld [vmem:[#allocation3 + $0x8] sm:$0xff]
        %v1961 = vld [vmem:[#allocation3 + $0x10] sm:$0xff]
        %v1962 = vld [vmem:[#allocation3 + $0x18] sm:$0xff]
        %v1963 = vld [vmem:[#allocation3 + $0x20] sm:$0xff]
        %v1964 = vld [vmem:[#allocation3 + $0x28] sm:$0xff]
        %v1965 = vld [vmem:[#allocation3 + $0x30] sm:$0xff]
        %v1966 = vld [vmem:[#allocation3 + $0x38] sm:$0xff]
        %v1967 = vld [vmem:[#allocation3 + $0x40] sm:$0xff]
        %v1968 = vld [vmem:[#allocation3 + $0x48] sm:$0xff]
        %v1969 = vld [vmem:[#allocation3 + $0x50] sm:$0xff]
        %v1970 = vld [vmem:[#allocation3 + $0x58] sm:$0xff]
        %v1971 = vld [vmem:[#allocation3 + $0x60] sm:$0xff]
        %v1972 = vld [vmem:[#allocation3 + $0x68] sm:$0xff]
        %v1973 = vld [vmem:[#allocation3 + $0x70] sm:$0xff]
        %v1974 = vld [vmem:[#allocation3 + $0x78] sm:$0xff]
        %v1975 = vld [vmem:[#allocation3 + $0x80] sm:$0xff]
        %v1976 = vld [vmem:[#allocation3 + $0x88] sm:$0xff]
        %v1977 = vld [vmem:[#allocation3 + $0x90] sm:$0xff]
        %v1978 = vld [vmem:[#allocation3 + $0x98] sm:$0xff]
        %v1979 = vld [vmem:[#allocation3 + $0xa0] sm:$0xff]
        %v1980 = vld [vmem:[#allocation3 + $0xa8] sm:$0xff]
        %v1981 = vld [vmem:[#allocation3 + $0xb0] sm:$0xff]
        %v1982 = vld [vmem:[#allocation3 + $0xb8] sm:$0xff]
        %v1983 = vld [vmem:[#allocation3 + $0xc0] sm:$0xff]
        %v1984 = vld [vmem:[#allocation3 + $0xc8] sm:$0xff]
        %v1985 = vld [vmem:[#allocation3 + $0xd0] sm:$0xff]
        %v1986 = vld [vmem:[#allocation3 + $0xd8] sm:$0xff]
        %v1987 = vld [vmem:[#allocation3 + $0xe0] sm:$0xff]
        %v1988 = vld [vmem:[#allocation3 + $0xe8] sm:$0xff]
        %v1989 = vld [vmem:[#allocation3 + $0xf0] sm:$0xff]
        %v1990 = vld [vmem:[#allocation3 + $0xf8] sm:$0xff]
        %v1991 = vld [vmem:[#allocation3 + $0x100] sm:$0xff]
        %v1992 = vld [vmem:[#allocation3 + $0x108] sm:$0xff]
        %v1993 = vld [vmem:[#allocation3 + $0x110] sm:$0xff]
        %v1994 = vld [vmem:[#allocation3 + $0x118] sm:$0xff]
        %v1995 = vld [vmem:[#allocation3 + $0x120] sm:$0xff]
        %v1996 = vld [vmem:[#allocation3 + $0x128] sm:$0xff]
        %v1997 = vld [vmem:[#allocation3 + $0x130] sm:$0xff]
        %v1998 = vld [vmem:[#allocation3 + $0x138] sm:$0xff]
        %v1999 = vld [vmem:[#allocation3 + $0x140] sm:$0xff]
        %v2000 = vld [vmem:[#allocation3 + $0x148] sm:$0xff]
        %v2001 = vld [vmem:[#allocation3 + $0x150] sm:$0xff]
        %v2002 = vld [vmem:[#allocation3 + $0x158] sm:$0xff]
        %v2003 = vld [vmem:[#allocation3 + $0x160] sm:$0xff]
        %v2004 = vld [vmem:[#allocation3 + $0x168] sm:$0xff]
        %v2005 = vld [vmem:[#allocation3 + $0x170] sm:$0xff]
        %v2006 = vld [vmem:[#allocation3 + $0x178] sm:$0xff]
        %v2007 = vld [vmem:[#allocation3 + $0x180] sm:$0xff]
        %v2008 = vld [vmem:[#allocation3 + $0x188] sm:$0xff]
        %v2009 = vld [vmem:[#allocation3 + $0x190] sm:$0xff]
        %v2010 = vld [vmem:[#allocation3 + $0x198] sm:$0xff]
        %v2011 = vld [vmem:[#allocation3 + $0x1a0] sm:$0xff]
        %v2012 = vld [vmem:[#allocation3 + $0x1a8] sm:$0xff]
        %v2013 = vld [vmem:[#allocation3 + $0x1b0] sm:$0xff]
        %v2014 = vld [vmem:[#allocation3 + $0x1b8] sm:$0xff]
        %v2015 = vld [vmem:[#allocation3 + $0x1c0] sm:$0xff]
        %v2016 = vld [vmem:[#allocation3 + $0x1c8] sm:$0xff]
        %v2017 = vld [vmem:[#allocation3 + $0x1d0] sm:$0xff]
        %v2018 = vld [vmem:[#allocation3 + $0x1d8] sm:$0xff]
        %v2019 = vld [vmem:[#allocation3 + $0x1e0] sm:$0xff]
        %v2020 = vld [vmem:[#allocation3 + $0x1e8] sm:$0xff]
        %v2021 = vld [vmem:[#allocation3 + $0x1f0] sm:$0xff]
        %v2022 = vld [vmem:[#allocation3 + $0x1f8] sm:$0xff]
        %v2023 = vld [vmem:[#allocation3 + $0x200] sm:$0xff]
        %v2024 = vld [vmem:[#allocation3 + $0x208] sm:$0xff]
        %v2025 = vld [vmem:[#allocation3 + $0x210] sm:$0xff]
        %v2026 = vld [vmem:[#allocation3 + $0x218] sm:$0xff]
        %v2027 = vld [vmem:[#allocation3 + $0x220] sm:$0xff]
        %v2028 = vld [vmem:[#allocation3 + $0x228] sm:$0xff]
        %v2029 = vld [vmem:[#allocation3 + $0x230] sm:$0xff]
        %v2030 = vld [vmem:[#allocation3 + $0x238] sm:$0xff]
        %v2031 = vld [vmem:[#allocation3 + $0x240] sm:$0xff]
        %v2032 = vld [vmem:[#allocation3 + $0x248] sm:$0xff]
        %v2033 = vld [vmem:[#allocation3 + $0x250] sm:$0xff]
        %v2034 = vld [vmem:[#allocation3 + $0x258] sm:$0xff]
        %v2035 = vld [vmem:[#allocation3 + $0x260] sm:$0xff]
        %v2036 = vld [vmem:[#allocation3 + $0x268] sm:$0xff]
        %v2037 = vld [vmem:[#allocation3 + $0x270] sm:$0xff]
        %v2038 = vld [vmem:[#allocation3 + $0x278] sm:$0xff]
        %v2039 = vld [vmem:[#allocation3 + $0x280] sm:$0xff]
        %v2040 = vld [vmem:[%s5] sm:$0xff]
        %2042 = vset.pattern.permute.xlu0 0
        %2043 = vperm.xlu0 %2042, %v2040
        %v2044 = vpop.permute.xlu0 %2043
        %v2047 = vsel %vm1160, %v1958, 0
        %2049 = vmatpush.msra.mxu0 %v2004
        %2050 = vmatpush.msra.mxu0 %v2001
        %2051 = vmatpush.msra.mxu0 %v1998
        %2052 = vmatpush.msra.mxu0 %v1995
        %2053 = vmatpush.msra.mxu0 %v1992
        %2054 = vmatpush.msra.mxu0 %v1989
        %2055 = vmatpush.msra.mxu0 %v1986
        %2056 = vmatpush.msra.mxu0 %v1983
        %2057 = vmatpush.msra.mxu0 %v1980
        %2058 = vmatpush.msra.mxu0 %v1977
        %2059 = vmatpush.msra.mxu0 %v1974
        %2060 = vmatpush.msra.mxu0 %v1971
        %2061 = vmatpush.msra.mxu0 %v1968
        %2062 = vmatpush.msra.mxu0 %v1965
        %2063 = vmatpush.msra.mxu0 %v1962
        %2064 = vmatpush.msra.mxu0 %v1959
        %2065 = vmatmul.f32.gmra.mxu0 %v1957
        %v2066 = vpop.f32.mrf.mxu0
        %v2067 = vadd.f32 %v2044, %v2066
        %2068 = vdwg.mxu0
        %2069 = vmatpush.msra.mxu0 0.0
        %2070 = vmatpush.msra.mxu0 0.0
        %2071 = vmatpush.msra.mxu0 0.0
        %2072 = vmatpush.msra.mxu0 0.0
        %2073 = vmatpush.msra.mxu0 0.0
        %2074 = vmatpush.msra.mxu0 %v2037
        %2075 = vmatpush.msra.mxu0 %v2034
        %2076 = vmatpush.msra.mxu0 %v2031
        %2077 = vmatpush.msra.mxu0 %v2028
        %2078 = vmatpush.msra.mxu0 %v2025
        %2079 = vmatpush.msra.mxu0 %v2022
        %2080 = vmatpush.msra.mxu0 %v2019
        %2081 = vmatpush.msra.mxu0 %v2016
        %2082 = vmatpush.msra.mxu0 %v2013
        %2083 = vmatpush.msra.mxu0 %v2010
        %2084 = vmatpush.msra.mxu0 %v2007
        %2085 = vmatmul.f32.gmra.mxu0 %v2047
        %v2086 = vpop.f32.mrf.mxu0
        %v2087 = vadd.f32 %v2067, %v2086
        %2088 = vdwg.mxu0
        %2089 = vmatpush.msra.mxu0 %v2005
        %2090 = vmatpush.msra.mxu0 %v2002
        %2091 = vmatpush.msra.mxu0 %v1999
        %2092 = vmatpush.msra.mxu0 %v1996
        %2093 = vmatpush.msra.mxu0 %v1993
        %2094 = vmatpush.msra.mxu0 %v1990
        %2095 = vmatpush.msra.mxu0 %v1987
        %2096 = vmatpush.msra.mxu0 %v1984
        %2097 = vmatpush.msra.mxu0 %v1981
        %2098 = vmatpush.msra.mxu0 %v1978
        %2099 = vmatpush.msra.mxu0 %v1975
        %2100 = vmatpush.msra.mxu0 %v1972
        %2101 = vmatpush.msra.mxu0 %v1969
        %2102 = vmatpush.msra.mxu0 %v1966
        %2103 = vmatpush.msra.mxu0 %v1963
        %2104 = vmatpush.msra.mxu0 %v1960
        %2105 = vmatmul.f32.gmra.mxu0 %v1957
        %v2106 = vpop.f32.mrf.mxu0
        %v2107 = vadd.f32 %v2044, %v2106
        %2108 = vdwg.mxu0
        %2109 = vmatpush.msra.mxu0 0.0
        %2110 = vmatpush.msra.mxu0 0.0
        %2111 = vmatpush.msra.mxu0 0.0
        %2112 = vmatpush.msra.mxu0 0.0
        %2113 = vmatpush.msra.mxu0 0.0
        %2114 = vmatpush.msra.mxu0 %v2038
        %2115 = vmatpush.msra.mxu0 %v2035
        %2116 = vmatpush.msra.mxu0 %v2032
        %2117 = vmatpush.msra.mxu0 %v2029
        %2118 = vmatpush.msra.mxu0 %v2026
        %2119 = vmatpush.msra.mxu0 %v2023
        %2120 = vmatpush.msra.mxu0 %v2020
        %2121 = vmatpush.msra.mxu0 %v2017
        %2122 = vmatpush.msra.mxu0 %v2014
        %2123 = vmatpush.msra.mxu0 %v2011
        %2124 = vmatpush.msra.mxu0 %v2008
        %2125 = vmatmul.f32.gmra.mxu0 %v2047
        %v2126 = vpop.f32.mrf.mxu0
        %v2127 = vadd.f32 %v2107, %v2126
        %2128 = vdwg.mxu0
        %2129 = vmatpush.msra.mxu0 %v2006
        %2130 = vmatpush.msra.mxu0 %v2003
        %2131 = vmatpush.msra.mxu0 %v2000
        %2132 = vmatpush.msra.mxu0 %v1997
        %2133 = vmatpush.msra.mxu0 %v1994
        %2134 = vmatpush.msra.mxu0 %v1991
        %2135 = vmatpush.msra.mxu0 %v1988
        %2136 = vmatpush.msra.mxu0 %v1985
        %2137 = vmatpush.msra.mxu0 %v1982
        %2138 = vmatpush.msra.mxu0 %v1979
        %2139 = vmatpush.msra.mxu0 %v1976
        %2140 = vmatpush.msra.mxu0 %v1973
        %2141 = vmatpush.msra.mxu0 %v1970
        %2142 = vmatpush.msra.mxu0 %v1967
        %2143 = vmatpush.msra.mxu0 %v1964
        %2144 = vmatpush.msra.mxu0 %v1961
        %2145 = vmatmul.f32.gmra.mxu0 %v1957
        %v2146 = vpop.f32.mrf.mxu0
        %v2147 = vadd.f32 %v2044, %v2146
        %2148 = vdwg.mxu0
        %2149 = vmatpush.msra.mxu0 0.0
        %2150 = vmatpush.msra.mxu0 0.0
        %2151 = vmatpush.msra.mxu0 0.0
        %2152 = vmatpush.msra.mxu0 0.0
        %2153 = vmatpush.msra.mxu0 0.0
        %2154 = vmatpush.msra.mxu0 %v2039
        %2155 = vmatpush.msra.mxu0 %v2036
        %2156 = vmatpush.msra.mxu0 %v2033
        %2157 = vmatpush.msra.mxu0 %v2030
        %2158 = vmatpush.msra.mxu0 %v2027
        %2159 = vmatpush.msra.mxu0 %v2024
        %2160 = vmatpush.msra.mxu0 %v2021
        %2161 = vmatpush.msra.mxu0 %v2018
        %2162 = vmatpush.msra.mxu0 %v2015
        %2163 = vmatpush.msra.mxu0 %v2012
        %2164 = vmatpush.msra.mxu0 %v2009
        %2165 = vmatmul.f32.gmra.mxu0 %v2047
        %v2166 = vpop.f32.mrf.mxu0
        %v2167 = vadd.f32 %v2147, %v2166
        %2168 = vdwg.mxu0
        %v2169 = vld [vmem:[%s1] sm:$0x7]
        %v2171 = vperm.slane %v2169, 0
        %v2172 = vperm.slane %v2169, 1
        %v2173 = vperm.slane %v2169, 2
        %v2177 = vmul.f32 %v2087, %v2171
        %v2178 = vmul.f32 %v2127, %v2172
        %v2179 = vmul.f32 %v2167, %v2173
        %v2180 = vadd.f32 %v2177, %v2178
        %v2181 = vsel %vm418, %v2179, 0.0
        %v2182 = vadd.f32 %v2180, %v2181
        %2183 = vadd.xlane.f32.xlu0 %v2182
        %v2184 = vpop.xlane.xlu0 %2183
        %v2185 = vmul.f32 %v2184, 0.00390625
        %v2186 = vld [vmem:[%s6] sm:$0xf]
        %v2187 = vld [vmem:[%s7] sm:$0xf]
        %vm2188 = vcmask 64512
        %v2190 = vsel %vm2188, %v2186, 0
        %2192 = vmatpush.msra.mxu0 0.0
        %2193 = vmatpush.msra.mxu0 0.0
        %2194 = vmatpush.msra.mxu0 0.0
        %2195 = vmatpush.msra.mxu0 0.0
        %2196 = vmatpush.msra.mxu0 0.0
        %2197 = vmatpush.msra.mxu0 0.0
        %2198 = vmatpush.msra.mxu0 0.0
        %2199 = vmatpush.msra.mxu0 0.0
        %2200 = vmatpush.msra.mxu0 0.0
        %2201 = vmatpush.msra.mxu0 0.0
        %2202 = vmatpush.msra.mxu0 0.0
        %2203 = vmatpush.msra.mxu0 0.0
        %2204 = vmatpush.msra.mxu0 0.0
        %2205 = vmatpush.msra.mxu0 0.0
        %2206 = vmatpush.msra.mxu0 0.0
        %2207 = vmatpush.msra.mxu0 %v2185
        %2208 = vmatmul.f32.gmra.mxu0 %v2190
        %v2209 = vpop.f32.mrf.mxu0
        %v2210 = vadd.f32 %v2187, %v2209
        %2211 = vdwg.mxu0
        %v2212 = vmax.f32 %v2210, 0.0
        %v2213 = vld [vmem:[%s8] sm:$0xff]
        %v2214 = vld [vmem:[%s9] sm:$0xff]
        %vm2215 = vcmask 31744
        %v2217 = vsel %vm2215, %v2213, 0
        %vm2219 = vcmask 1043456
        %v2221 = vsel %vm2219, %v2212, 0
        %2223 = vmatpush.msra.mxu0 0.0
        %2224 = vmatpush.msra.mxu0 0.0
        %2225 = vmatpush.msra.mxu0 0.0
        %2226 = vmatpush.msra.mxu0 0.0
        %2227 = vmatpush.msra.mxu0 0.0
        %2228 = vmatpush.msra.mxu0 0.0
        %2229 = vmatpush.msra.mxu0 0.0
        %2230 = vmatpush.msra.mxu0 0.0
        %2231 = vmatpush.msra.mxu0 0.0
        %2232 = vmatpush.msra.mxu0 0.0
        %2233 = vmatpush.msra.mxu0 0.0
        %2234 = vmatpush.msra.mxu0 0.0
        %2235 = vmatpush.msra.mxu0 0.0
        %2236 = vmatpush.msra.mxu0 0.0
        %2237 = vmatpush.msra.mxu0 0.0
        %2238 = vmatpush.msra.mxu0 %v2221
        %2239 = vmatmul.f32.gmra.mxu0 %v2217
        %v2240 = vpop.f32.mrf.mxu0
        %v2241 = vadd.f32 %v2214, %v2240
        %2242 = vdwg.mxu0
        %v2243 = vxor.u32 %v2241, 2147483648
        %v2244 = vmul.f32 %v2243, 1.442695
        %v2245 = vpow.pop %v2244
        %v2246 = vadd.f32 %v2245, 1.0
        %v2247 = vrcp.pop %v2246
        %v2248 = vmul.f32 %v2246, %v2247
        %v2249 = vsub.f32 1.0, %v2248
        %v2250 = vmul.f32 %v2247, %v2249
        %v2251 = vadd.f32 %v2247, %v2250
        %vm2252 = vweird.f32 %v2246
        %vm2253 = vweird.f32 %v2247
        %vm2254 = vmor %vm2252, %vm2253
        %v2255 = vsel %vm2254, %v2247, %v2251
        %v2256 = vand.u32 2147483647, %v2246
        %vm2257 = vcmp.eq.f32.partialorder %v2256, 8.507059e+37
        %v2258 = vand.u32 %v2246, 2147483648
        %v2259 = vor.u32 1.1754944e-38, %v2258
        %v2260 = vsel %vm2257, %v2259, %v2255
        %v2261 = vmul.f32 1.0, %v2260
        %v2262 = vld [vmem:[%s350 + $0x8] sm:$0xff]
        %v2263 = vld [vmem:[%s350 + $0x10] sm:$0xff]
        %v2264 = vld [vmem:[%s350 + $0x18] sm:$0xff]
        %2266 = vset.pattern.permute.xlu0 0
        %2267 = vperm.xlu0 %2266, %v2261
        %v2268 = vpop.permute.xlu0 %2267
        %v2270 = vmul.f32 %v2087, %v2268
        %v2271 = vmul.f32 %v2127, %v2268
        %v2272 = vmul.f32 %v2167, %v2268
        %v2273 = vadd.f32 %v2270, %v2262
        %v2274 = vadd.f32 %v2271, %v2263
        %v2275 = vadd.f32 %v2272, %v2264
        %2276 = vst [vmem:[%s392] sm:$0xff] %v2273
        %2277 = vst [vmem:[%s392 + $0x8] sm:$0xff] %v2274
        %2278 = vst.msk [vmem:[%s392 + $0x10] sm:$0xff] %vm418, %v2275
        %2279 = vst.msk [vmem:[%s392 + $0x10] sm:$0xff] %vm1302, 0.0
        %2280 = vst [vmem:[%s392 + $0x18] sm:$0xff] 0.0
        %2281 = vst.msk [vmem:[%s392 + $0x20] sm:$0xff] %vm1160, 0.0
        %s2282 = sand.u32 %s251, 1
        %s2283 = scalar_lea.sflag [#allocation7], %s2282
        %s2284 = sand.u32 %s251, 1
        %s2285 = smul.addr %s2284, 40
        %s2286 = scalar_lea.vmem [#allocation10], %s2285
        // Predicated region
        $region69: #{tpu_custom_call.1} parent=59 // pred_check
          %p2287 = pneg %p261
        $region70: #{tpu_custom_call.1} parent=59 // pred_check_branch
          %2289 = sbr.rel (%p2287) target = $region72
        $region71: #{tpu_custom_call.1} parent=59 // pred_region
          %2291 = vsyncadd %s2283, 0
          %s2292 = smul.addr %s28, 5
          %s2293 = smul.addr %s2292, 8
          %s2294 = scalar_lea.hbm %s10, %s2293
          %s2296 = sshll.u32 %s2286, 4
          %s2297 = int_to_ptr.vmem [resolvable:$true] %s2296
          %s2298 = sshll.u32 %s2294, 4
          %s2299 = int_to_ptr.hbm [resolvable:$true] %s2298
          %2301 = dma.vmem_to_hbm [thread:$0]  %s2297, 640, %s2299, %s2283
        $region72: #{tpu_custom_call.1} parent=59 // pred_fallthru
          _
      $region60: #{tpu_custom_call.1} parent=5 // pred_fallthru
        _
      %p2302 = scmp.le.s32.totalorder 2, %s23
      // Predicated region
      $region73: #{tpu_custom_call.1} parent=5 // pred_check
        %p2303 = pneg %p2302
      $region74: #{tpu_custom_call.1} parent=5 // pred_check_branch
        %2305 = sbr.rel (%p2303) target = $region76
      $region75: #{tpu_custom_call.1} parent=5 // pred_region
        %s2306 = ssub.s32 %s23, 2
        // Predicated region
        $region77: #{tpu_custom_call.1} parent=75 // pred_check
          %p2307 = pneg %p267
        $region78: #{tpu_custom_call.1} parent=75 // pred_check_branch
          %2309 = sbr.rel (%p2307) target = $region80
        $region79: #{tpu_custom_call.1} parent=75 // pred_region
          %s2310 = sand.u32 %s252, 1
          %s2311 = scalar_lea.sflag [#allocation7], %s2310
          %s2312 = sand.u32 %s252, 1
          %s2313 = smul.addr %s2312, 40
          %s2314 = scalar_lea.vmem [#allocation10], %s2313
          %2316 = dma.done %s2311, 640
        $region80: #{tpu_custom_call.1} parent=75 // pred_fallthru
          _
      $region76: #{tpu_custom_call.1} parent=5 // pred_fallthru
        _
    $region6: #{tpu_custom_call.1} parent=1 // loop_footer
      %s27 = sadd.s32 1, %s23
    $region7: #{tpu_custom_call.1} parent=1 // loop_footer_branch
      %22 = sbr.rel target = $region3
    $region8: #{tpu_custom_call.1} parent=1 // loop_exit
      _
    %2317 = vsyncpa [#allocation6], 1
    %s2318 = scalar_lea.sflag [#allocation6], 1
    %2319 = vsyncpa %s2318, 1
    %2320 = vsyncpa [#allocation9], 1
    %2321 = vsyncpa [#allocation7], 1
    %s2322 = scalar_lea.sflag [#allocation7], 1
    %2323 = vsyncpa %s2322, 1

</llo_original>
